<compile_context>
chip_gen: v7x
topology: tpu7x:2x2x1
jax: 0.10.0
libtpu: 0.0.40
codegen_flags: <defaults>
</compile_context>

<pallas_src>
import jax
import jax.numpy as jnp
from jax.experimental import pallas as pl
from jax.experimental.pallas import tpu as pltpu

_NEG_BIG = -1e30  # exp(-1e30 - max) == 0 in f32 -> padded motif rows drop out of the LSE


def physnet_kernel(x_ref, w_ref, moffs_ref, scal_ref, out_ref):
    # x_ref:     (1, C, S*Bt)  batch tile; lanes are (position-major, batch-minor)
    # w_ref:     (K, Mp, C)    scale-folded PWM taps (compute dtype)
    # moffs_ref: (Mp, 1)       motif offsets, f32; padded rows = -1e30
    # scal_ref:  (2,)          SMEM: [softplus(scale_unc), offset]
    # out_ref:   (1, 1, Bt)    per-sequence affinity (f32), lane-dense store
    K, Mp, C = w_ref.shape
    SBt = x_ref.shape[2]
    Bt = out_ref.shape[2]
    S = SBt // Bt
    L = S - K + 1

    # Valid conv1d: K accumulated 2-D MXU matmuls on lane-tile-aligned slices.
    #   conv[m, p*Bt + b] = sum_{c,j} w[j, m, c] * x[c, (p+j)*Bt + b]
    conv = jnp.dot(w_ref[0], x_ref[0, :, 0:L * Bt],
                   preferred_element_type=jnp.float32)
    for j in range(1, K):
        conv = conv + jnp.dot(w_ref[j], x_ref[0, :, j * Bt:j * Bt + L * Bt],
                              preferred_element_type=jnp.float32)
    conv = conv + moffs_ref[...]          # (Mp, 1) broadcast over lanes, f32

    # Joint logsumexp over (motifs, positions) per batch lane.  Position slabs
    # conv[:, p*Bt:(p+1)*Bt] are 128-aligned static slices; exp is consumed
    # slab-by-slab so the exp stream is never materialized in VMEM.
    m_run = conv[:, 0:Bt]
    for p in range(1, L):
        m_run = jnp.maximum(m_run, conv[:, p * Bt:(p + 1) * Bt])
    m_b = jnp.max(m_run, axis=0, keepdims=True)            # (1, Bt) per-seq max
    s_run = jnp.exp(conv[:, 0:Bt] - m_b)
    for p in range(1, L):
        s_run = s_run + jnp.exp(conv[:, p * Bt:(p + 1) * Bt] - m_b)
    s_b = jnp.sum(s_run, axis=0, keepdims=True)             # (1, Bt)
    affin = jnp.log(s_b) + m_b                              # (1, Bt)

    out_ref[0, :, :] = (affin * scal_ref[0] + scal_ref[1]).astype(out_ref.dtype)


def _round_up(x, m):
    return ((x + m - 1) // m) * m


def _pick_tiling(B, C, S, K, Mp, itemsize):
    """Pick (batch_tile, scoped VMEM limit) from the actual TPU generation.

    limit  = min(physical_vmem / 2, 64 MiB)   -> 64 MiB on v5e/v6e, 32 MiB on v7x
    budget = 3/4 * limit                      -> ~48 MiB / ~24 MiB working set
    Working set per sequence = double-buffered x block + f32 conv value
    (with headroom for one extra live copy) + double-buffered output.
    """
    L = S - K + 1
    try:
        vmem_phys = int(pltpu.get_tpu_info().vmem_capacity_bytes)
    except Exception:  # be conservative if the query is unavailable
        vmem_phys = 64 << 20
    vmem_limit = min(vmem_phys // 2, 64 << 20)
    budget = (vmem_limit * 3) // 4
    fixed = (2 << 20) + K * Mp * C * itemsize + Mp * 4      # internal scratch + params
    per_seq = (2 * C * S * itemsize     # double-buffered input block
               + 3 * Mp * L * 4         # f32 conv value (+ live-copy headroom)
               + 2 * 4)                 # double-buffered output
    bt = max(128, ((budget - fixed) // per_seq) // 128 * 128)
    bt = min(bt, _round_up(B, 128))
    # v7x has 2 TensorCores: keep >= 2 grid steps when the batch allows it so
    # dimension_semantics=("parallel",) can actually shard the grid.
    if B >= 256 and -(-B // bt) < 2:
        bt = _round_up(-(-B // 2), 128)
    return bt, vmem_limit


def physnet_forward(x, pwm, motif_scale_unc, motif_offset, scale_unc, offset,
                    *, batch_tile=None, compute_dtype=jnp.bfloat16):
    """x: (B, 4, S); pwm: (nMotif, 4, K). Returns (B,) affinities.

    compute_dtype controls only the matmul operands (x / folded PWM); MXU
    accumulation and all post-matmul math stay f32.  Use jnp.float32 for
    bit-faithful agreement with the reference.
    """
    B, C, S = x.shape
    M, Cw, K = pwm.shape
    assert Cw == C and S >= K
    Mp = _round_up(max(M, 1), 8)                 # pad motifs to a sublane multiple
    itemsize = jnp.dtype(compute_dtype).itemsize

    if batch_tile is None:
        Bt, vmem_limit = _pick_tiling(B, C, S, K, Mp, itemsize)
    else:
        Bt = max(128, _round_up(batch_tile, 128))
        _, vmem_limit = _pick_tiling(B, C, S, K, Mp, itemsize)
    nb = -(-B // Bt)
    B_pad = nb * Bt

    # Fold softplus(motif_scale) into the PWM (diagonal weight fold) and reorder
    # taps to (K, Mp, C) so the kernel slices one (Mp, C) tap matrix per shift.
    msc = jax.nn.softplus(motif_scale_unc.astype(jnp.float32))           # (M,)
    w = pwm.astype(jnp.float32) * msc[:, None, None]                     # (M, C, K)
    w = jnp.transpose(w, (2, 0, 1))                                      # (K, M, C)
    moffs = motif_offset.astype(jnp.float32).reshape(M, 1)
    if Mp != M:
        w = jnp.concatenate([w, jnp.zeros((K, Mp - M, C), jnp.float32)], axis=1)
        moffs = jnp.concatenate(
            [moffs, jnp.full((Mp - M, 1), _NEG_BIG, jnp.float32)], axis=0)
    w = w.astype(compute_dtype)

    # Global scale/offset: two scalars in SMEM (softplus done once here).
    scal = jnp.stack([jax.nn.softplus(jnp.asarray(scale_unc, jnp.float32)),
                      jnp.asarray(offset, jnp.float32)])

    # Batch-in-lanes, pre-tiled layout: xt[i, c, s*Bt + b] = x[i*Bt + b, c, s].
    # One wrapper transpose; every per-step DMA is then a single contiguous chunk.
    xc = x.astype(compute_dtype)
    if B_pad != B:                                # padded rows are sliced away below
        xc = jnp.concatenate(
            [xc, jnp.zeros((B_pad - B, C, S), compute_dtype)], axis=0)
    xt = xc.reshape(nb, Bt, C, S).transpose(0, 2, 3, 1).reshape(nb, C, S * Bt)

    out = pl.pallas_call(
        physnet_kernel,
        out_shape=jax.ShapeDtypeStruct((nb, 1, Bt), jnp.float32),
        grid=(nb,),
        in_specs=[
            pl.BlockSpec((1, C, S * Bt), lambda i: (i, 0, 0)),
            pl.BlockSpec((K, Mp, C), lambda i: (0, 0, 0)),
            pl.BlockSpec((Mp, 1), lambda i: (0, 0)),
            pl.BlockSpec(memory_space=pltpu.MemorySpace.SMEM),
        ],
        out_specs=pl.BlockSpec((1, 1, Bt), lambda i: (i, 0, 0)),
        compiler_params=pltpu.CompilerParams(
            dimension_semantics=("parallel",),
            vmem_limit_bytes=int(vmem_limit),
        ),
    )(xt, w, moffs, scal)
    return out.reshape(B_pad)[:B]


def physnet_ref(x, pwm, motif_scale_unc, motif_offset, scale_unc, offset):
    """Pure-JAX reference matching the PyTorch forward (default PhysNet args)."""
    conv = jax.lax.conv_general_dilated(
        x, pwm, window_strides=(1,), padding="VALID",
        dimension_numbers=("NCH", "OIH", "NCH"))
    ms = jax.nn.softplus(motif_scale_unc)
    conv_lin = conv * ms[None, :, None] + motif_offset[None, :, None]
    affin = jax.scipy.special.logsumexp(
        jax.scipy.special.logsumexp(conv_lin, axis=1), axis=1)
    return affin * jax.nn.softplus(scale_unc) + offset


if __name__ == "__main__":
    key = jax.random.PRNGKey(0)
    kx, kp = jax.random.split(key)

    # Small shapes consistent with the module: B sequences, 4 channels (ACGT),
    # length S, nMotif PWMs of width K.  B=300 exercises batch padding and a
    # 2-step grid; M=6 exercises the motif padding (-1e30 offset) path.
    B, C, S = 300, 4, 16
    M, K = 6, 5

    x = jax.random.normal(kx, (B, C, S), jnp.float32)
    known_pwm = 0.5 * jax.random.normal(kp, (M, C, K), jnp.float32)

    # Parameters exactly as in PhysNet.__init__
    motif_scale_unc = jnp.ones((M,), jnp.float32)
    motif_offset = jnp.zeros((M,), jnp.float32)
    scale_unc = jnp.float32(1.0)
    offset = jnp.float32(0.0)

    ref = physnet_ref(x, known_pwm, motif_scale_unc, motif_offset,
                      scale_unc, offset)

    # f32 path: bit-level agreement with the reference.
    out_f32 = jax.block_until_ready(
        physnet_forward(x, known_pwm, motif_scale_unc, motif_offset,
                        scale_unc, offset, compute_dtype=jnp.float32))
    assert out_f32.shape == (B,)
    assert bool(jnp.allclose(out_f32, ref, atol=1e-4, rtol=1e-4)), (out_f32[:4], ref[:4])

    # Default (bf16 matmul operands) path: sanity check with relaxed tolerance
    # (expected bf16 precision loss, not a kernel bug).
    out_bf16 = jax.block_until_ready(
        physnet_forward(x, known_pwm, motif_scale_unc, motif_offset,
                        scale_unc, offset))
    assert out_bf16.shape == (B,)
    assert bool(jnp.allclose(out_bf16, ref, atol=0.5, rtol=0.1)), (out_bf16[:4], ref[:4])

    print("KERNEL_OK")
</pallas_src>

<mosaic_0001>
module attributes {stable_mosaic.version = 11 : i64} {
  func.func @physnet_kernel(%arg0: i32, %arg1: memref<1x4x4096xf32, #tpu.memory_space<vmem>>, %arg2: memref<5x8x4xf32, #tpu.memory_space<vmem>>, %arg3: memref<8x1xf32, #tpu.memory_space<vmem>>, %arg4: memref<2xf32, #tpu.memory_space<smem>>, %arg5: memref<1x1x256xf32, #tpu.memory_space<vmem>>) attributes {dimension_semantics = [#tpu.dimension_semantics<parallel>], iteration_bounds = array<i64: 2>, scalar_prefetch = 0 : i64, scratch_operands = 0 : i64, tpu.core_type = #tpu.core_type<tc>, window_params = [{transform_indices = @transform_0, window_bounds = array<i64: 1, 4, 4096>}, {pipeline_mode = #tpu.pipeline_mode<synchronous>, transform_indices = @transform_1, window_bounds = array<i64: 5, 8, 4>}, {pipeline_mode = #tpu.pipeline_mode<synchronous>, transform_indices = @transform_2, window_bounds = array<i64: 8, 1>}, {transform_indices = @transform_3, window_bounds = array<i64: 2>}, {transform_indices = @transform_4, window_bounds = array<i64: 1, 1, 256>}]} {
    %c0 = arith.constant 0 : index
    %c0_0 = arith.constant 0 : index
    %c0_1 = arith.constant 0 : index
    %0 = vector.load %arg2[%c0, %c0_0, %c0_1] : memref<5x8x4xf32, #tpu.memory_space<vmem>>, vector<1x8x4xf32>
    %1 = vector.shape_cast %0 : vector<1x8x4xf32> to vector<8x4xf32>
    %c0_2 = arith.constant 0 : index
    %c0_3 = arith.constant 0 : index
    %c0_4 = arith.constant 0 : index
    %2 = vector.load %arg1[%c0_2, %c0_3, %c0_4] : memref<1x4x4096xf32, #tpu.memory_space<vmem>>, vector<1x4x3072xf32>
    %3 = vector.shape_cast %2 : vector<1x4x3072xf32> to vector<4x3072xf32>
    %cst = arith.constant dense<0.000000e+00> : vector<8x3072xf32>
    %4 = tpu.matmul %1, %3, %cst {dimension_numbers = #tpu.dot_dimension_numbers<[1], [0], [0], [1], [0, 0, 1, 1], [], []>} : vector<8x4xf32>, vector<4x3072xf32>, vector<8x3072xf32> -> vector<8x3072xf32>
    %c1 = arith.constant 1 : index
    %c0_5 = arith.constant 0 : index
    %c0_6 = arith.constant 0 : index
    %5 = vector.load %arg2[%c1, %c0_5, %c0_6] : memref<5x8x4xf32, #tpu.memory_space<vmem>>, vector<1x8x4xf32>
    %6 = vector.shape_cast %5 : vector<1x8x4xf32> to vector<8x4xf32>
    %c0_7 = arith.constant 0 : index
    %c0_8 = arith.constant 0 : index
    %c256 = arith.constant 256 : index
    %7 = vector.load %arg1[%c0_7, %c0_8, %c256] : memref<1x4x4096xf32, #tpu.memory_space<vmem>>, vector<1x4x3072xf32>
    %8 = vector.shape_cast %7 : vector<1x4x3072xf32> to vector<4x3072xf32>
    %cst_9 = arith.constant dense<0.000000e+00> : vector<8x3072xf32>
    %9 = tpu.matmul %6, %8, %cst_9 {dimension_numbers = #tpu.dot_dimension_numbers<[1], [0], [0], [1], [0, 0, 1, 1], [], []>} : vector<8x4xf32>, vector<4x3072xf32>, vector<8x3072xf32> -> vector<8x3072xf32>
    %10 = arith.addf %4, %9 : vector<8x3072xf32>
    %c2 = arith.constant 2 : index
    %c0_10 = arith.constant 0 : index
    %c0_11 = arith.constant 0 : index
    %11 = vector.load %arg2[%c2, %c0_10, %c0_11] : memref<5x8x4xf32, #tpu.memory_space<vmem>>, vector<1x8x4xf32>
    %12 = vector.shape_cast %11 : vector<1x8x4xf32> to vector<8x4xf32>
    %c0_12 = arith.constant 0 : index
    %c0_13 = arith.constant 0 : index
    %c512 = arith.constant 512 : index
    %13 = vector.load %arg1[%c0_12, %c0_13, %c512] : memref<1x4x4096xf32, #tpu.memory_space<vmem>>, vector<1x4x3072xf32>
    %14 = vector.shape_cast %13 : vector<1x4x3072xf32> to vector<4x3072xf32>
    %cst_14 = arith.constant dense<0.000000e+00> : vector<8x3072xf32>
    %15 = tpu.matmul %12, %14, %cst_14 {dimension_numbers = #tpu.dot_dimension_numbers<[1], [0], [0], [1], [0, 0, 1, 1], [], []>} : vector<8x4xf32>, vector<4x3072xf32>, vector<8x3072xf32> -> vector<8x3072xf32>
    %16 = arith.addf %10, %15 : vector<8x3072xf32>
    %c3 = arith.constant 3 : index
    %c0_15 = arith.constant 0 : index
    %c0_16 = arith.constant 0 : index
    %17 = vector.load %arg2[%c3, %c0_15, %c0_16] : memref<5x8x4xf32, #tpu.memory_space<vmem>>, vector<1x8x4xf32>
    %18 = vector.shape_cast %17 : vector<1x8x4xf32> to vector<8x4xf32>
    %c0_17 = arith.constant 0 : index
    %c0_18 = arith.constant 0 : index
    %c768 = arith.constant 768 : index
    %19 = vector.load %arg1[%c0_17, %c0_18, %c768] : memref<1x4x4096xf32, #tpu.memory_space<vmem>>, vector<1x4x3072xf32>
    %20 = vector.shape_cast %19 : vector<1x4x3072xf32> to vector<4x3072xf32>
    %cst_19 = arith.constant dense<0.000000e+00> : vector<8x3072xf32>
    %21 = tpu.matmul %18, %20, %cst_19 {dimension_numbers = #tpu.dot_dimension_numbers<[1], [0], [0], [1], [0, 0, 1, 1], [], []>} : vector<8x4xf32>, vector<4x3072xf32>, vector<8x3072xf32> -> vector<8x3072xf32>
    %22 = arith.addf %16, %21 : vector<8x3072xf32>
    %c4 = arith.constant 4 : index
    %c0_20 = arith.constant 0 : index
    %c0_21 = arith.constant 0 : index
    %23 = vector.load %arg2[%c4, %c0_20, %c0_21] : memref<5x8x4xf32, #tpu.memory_space<vmem>>, vector<1x8x4xf32>
    %24 = vector.shape_cast %23 : vector<1x8x4xf32> to vector<8x4xf32>
    %c0_22 = arith.constant 0 : index
    %c0_23 = arith.constant 0 : index
    %c1024 = arith.constant 1024 : index
    %25 = vector.load %arg1[%c0_22, %c0_23, %c1024] : memref<1x4x4096xf32, #tpu.memory_space<vmem>>, vector<1x4x3072xf32>
    %26 = vector.shape_cast %25 : vector<1x4x3072xf32> to vector<4x3072xf32>
    %cst_24 = arith.constant dense<0.000000e+00> : vector<8x3072xf32>
    %27 = tpu.matmul %24, %26, %cst_24 {dimension_numbers = #tpu.dot_dimension_numbers<[1], [0], [0], [1], [0, 0, 1, 1], [], []>} : vector<8x4xf32>, vector<4x3072xf32>, vector<8x3072xf32> -> vector<8x3072xf32>
    %28 = arith.addf %22, %27 : vector<8x3072xf32>
    %c0_25 = arith.constant 0 : index
    %c0_26 = arith.constant 0 : index
    %29 = vector.load %arg3[%c0_25, %c0_26] : memref<8x1xf32, #tpu.memory_space<vmem>>, vector<8x1xf32>
    %30 = vector.broadcast %29 : vector<8x1xf32> to vector<8x3072xf32>
    %31 = arith.addf %28, %30 : vector<8x3072xf32>
    %32 = vector.extract_strided_slice %31 {offsets = [0, 0], sizes = [8, 256], strides = [1, 1]} : vector<8x3072xf32> to vector<8x256xf32>
    %33 = vector.extract_strided_slice %31 {offsets = [0, 256], sizes = [8, 256], strides = [1, 1]} : vector<8x3072xf32> to vector<8x256xf32>
    %34 = arith.maximumf %32, %33 : vector<8x256xf32>
    %35 = vector.extract_strided_slice %31 {offsets = [0, 512], sizes = [8, 256], strides = [1, 1]} : vector<8x3072xf32> to vector<8x256xf32>
    %36 = arith.maximumf %34, %35 : vector<8x256xf32>
    %37 = vector.extract_strided_slice %31 {offsets = [0, 768], sizes = [8, 256], strides = [1, 1]} : vector<8x3072xf32> to vector<8x256xf32>
    %38 = arith.maximumf %36, %37 : vector<8x256xf32>
    %39 = vector.extract_strided_slice %31 {offsets = [0, 1024], sizes = [8, 256], strides = [1, 1]} : vector<8x3072xf32> to vector<8x256xf32>
    %40 = arith.maximumf %38, %39 : vector<8x256xf32>
    %41 = vector.extract_strided_slice %31 {offsets = [0, 1280], sizes = [8, 256], strides = [1, 1]} : vector<8x3072xf32> to vector<8x256xf32>
    %42 = arith.maximumf %40, %41 : vector<8x256xf32>
    %43 = vector.extract_strided_slice %31 {offsets = [0, 1536], sizes = [8, 256], strides = [1, 1]} : vector<8x3072xf32> to vector<8x256xf32>
    %44 = arith.maximumf %42, %43 : vector<8x256xf32>
    %45 = vector.extract_strided_slice %31 {offsets = [0, 1792], sizes = [8, 256], strides = [1, 1]} : vector<8x3072xf32> to vector<8x256xf32>
    %46 = arith.maximumf %44, %45 : vector<8x256xf32>
    %47 = vector.extract_strided_slice %31 {offsets = [0, 2048], sizes = [8, 256], strides = [1, 1]} : vector<8x3072xf32> to vector<8x256xf32>
    %48 = arith.maximumf %46, %47 : vector<8x256xf32>
    %49 = vector.extract_strided_slice %31 {offsets = [0, 2304], sizes = [8, 256], strides = [1, 1]} : vector<8x3072xf32> to vector<8x256xf32>
    %50 = arith.maximumf %48, %49 : vector<8x256xf32>
    %51 = vector.extract_strided_slice %31 {offsets = [0, 2560], sizes = [8, 256], strides = [1, 1]} : vector<8x3072xf32> to vector<8x256xf32>
    %52 = arith.maximumf %50, %51 : vector<8x256xf32>
    %53 = vector.extract_strided_slice %31 {offsets = [0, 2816], sizes = [8, 256], strides = [1, 1]} : vector<8x3072xf32> to vector<8x256xf32>
    %54 = arith.maximumf %52, %53 : vector<8x256xf32>
    %cst_27 = arith.constant dense<0xFF800000> : vector<256xf32>
    %55 = vector.multi_reduction <maximumf>, %54, %cst_27 [0] : vector<8x256xf32> to vector<256xf32>
    %56 = vector.shape_cast %55 : vector<256xf32> to vector<1x256xf32>
    %57 = vector.extract_strided_slice %31 {offsets = [0, 0], sizes = [8, 256], strides = [1, 1]} : vector<8x3072xf32> to vector<8x256xf32>
    %58 = vector.broadcast %56 : vector<1x256xf32> to vector<8x256xf32>
    %59 = arith.subf %57, %58 : vector<8x256xf32>
    %60 = math.exp %59 : vector<8x256xf32>
    %61 = vector.extract_strided_slice %31 {offsets = [0, 256], sizes = [8, 256], strides = [1, 1]} : vector<8x3072xf32> to vector<8x256xf32>
    %62 = vector.broadcast %56 : vector<1x256xf32> to vector<8x256xf32>
    %63 = arith.subf %61, %62 : vector<8x256xf32>
    %64 = math.exp %63 : vector<8x256xf32>
    %65 = arith.addf %60, %64 : vector<8x256xf32>
    %66 = vector.extract_strided_slice %31 {offsets = [0, 512], sizes = [8, 256], strides = [1, 1]} : vector<8x3072xf32> to vector<8x256xf32>
    %67 = vector.broadcast %56 : vector<1x256xf32> to vector<8x256xf32>
    %68 = arith.subf %66, %67 : vector<8x256xf32>
    %69 = math.exp %68 : vector<8x256xf32>
    %70 = arith.addf %65, %69 : vector<8x256xf32>
    %71 = vector.extract_strided_slice %31 {offsets = [0, 768], sizes = [8, 256], strides = [1, 1]} : vector<8x3072xf32> to vector<8x256xf32>
    %72 = vector.broadcast %56 : vector<1x256xf32> to vector<8x256xf32>
    %73 = arith.subf %71, %72 : vector<8x256xf32>
    %74 = math.exp %73 : vector<8x256xf32>
    %75 = arith.addf %70, %74 : vector<8x256xf32>
    %76 = vector.extract_strided_slice %31 {offsets = [0, 1024], sizes = [8, 256], strides = [1, 1]} : vector<8x3072xf32> to vector<8x256xf32>
    %77 = vector.broadcast %56 : vector<1x256xf32> to vector<8x256xf32>
    %78 = arith.subf %76, %77 : vector<8x256xf32>
    %79 = math.exp %78 : vector<8x256xf32>
    %80 = arith.addf %75, %79 : vector<8x256xf32>
    %81 = vector.extract_strided_slice %31 {offsets = [0, 1280], sizes = [8, 256], strides = [1, 1]} : vector<8x3072xf32> to vector<8x256xf32>
    %82 = vector.broadcast %56 : vector<1x256xf32> to vector<8x256xf32>
    %83 = arith.subf %81, %82 : vector<8x256xf32>
    %84 = math.exp %83 : vector<8x256xf32>
    %85 = arith.addf %80, %84 : vector<8x256xf32>
    %86 = vector.extract_strided_slice %31 {offsets = [0, 1536], sizes = [8, 256], strides = [1, 1]} : vector<8x3072xf32> to vector<8x256xf32>
    %87 = vector.broadcast %56 : vector<1x256xf32> to vector<8x256xf32>
    %88 = arith.subf %86, %87 : vector<8x256xf32>
    %89 = math.exp %88 : vector<8x256xf32>
    %90 = arith.addf %85, %89 : vector<8x256xf32>
    %91 = vector.extract_strided_slice %31 {offsets = [0, 1792], sizes = [8, 256], strides = [1, 1]} : vector<8x3072xf32> to vector<8x256xf32>
    %92 = vector.broadcast %56 : vector<1x256xf32> to vector<8x256xf32>
    %93 = arith.subf %91, %92 : vector<8x256xf32>
    %94 = math.exp %93 : vector<8x256xf32>
    %95 = arith.addf %90, %94 : vector<8x256xf32>
    %96 = vector.extract_strided_slice %31 {offsets = [0, 2048], sizes = [8, 256], strides = [1, 1]} : vector<8x3072xf32> to vector<8x256xf32>
    %97 = vector.broadcast %56 : vector<1x256xf32> to vector<8x256xf32>
    %98 = arith.subf %96, %97 : vector<8x256xf32>
    %99 = math.exp %98 : vector<8x256xf32>
    %100 = arith.addf %95, %99 : vector<8x256xf32>
    %101 = vector.extract_strided_slice %31 {offsets = [0, 2304], sizes = [8, 256], strides = [1, 1]} : vector<8x3072xf32> to vector<8x256xf32>
    %102 = vector.broadcast %56 : vector<1x256xf32> to vector<8x256xf32>
    %103 = arith.subf %101, %102 : vector<8x256xf32>
    %104 = math.exp %103 : vector<8x256xf32>
    %105 = arith.addf %100, %104 : vector<8x256xf32>
    %106 = vector.extract_strided_slice %31 {offsets = [0, 2560], sizes = [8, 256], strides = [1, 1]} : vector<8x3072xf32> to vector<8x256xf32>
    %107 = vector.broadcast %56 : vector<1x256xf32> to vector<8x256xf32>
    %108 = arith.subf %106, %107 : vector<8x256xf32>
    %109 = math.exp %108 : vector<8x256xf32>
    %110 = arith.addf %105, %109 : vector<8x256xf32>
    %111 = vector.extract_strided_slice %31 {offsets = [0, 2816], sizes = [8, 256], strides = [1, 1]} : vector<8x3072xf32> to vector<8x256xf32>
    %112 = vector.broadcast %56 : vector<1x256xf32> to vector<8x256xf32>
    %113 = arith.subf %111, %112 : vector<8x256xf32>
    %114 = math.exp %113 : vector<8x256xf32>
    %115 = arith.addf %110, %114 : vector<8x256xf32>
    %cst_28 = arith.constant dense<0.000000e+00> : vector<256xf32>
    %116 = vector.multi_reduction <add>, %115, %cst_28 [0] : vector<8x256xf32> to vector<256xf32>
    %117 = vector.shape_cast %116 : vector<256xf32> to vector<1x256xf32>
    %118 = math.log %117 : vector<1x256xf32>
    %119 = arith.addf %118, %56 : vector<1x256xf32>
    %c0_29 = arith.constant 0 : index
    %120 = memref.load %arg4[%c0_29] : memref<2xf32, #tpu.memory_space<smem>>
    %121 = vector.broadcast %120 : f32 to vector<1x256xf32>
    %122 = arith.mulf %119, %121 : vector<1x256xf32>
    %c1_30 = arith.constant 1 : index
    %123 = memref.load %arg4[%c1_30] : memref<2xf32, #tpu.memory_space<smem>>
    %124 = vector.broadcast %123 : f32 to vector<1x256xf32>
    %125 = arith.addf %122, %124 : vector<1x256xf32>
    %c0_31 = arith.constant 0 : index
    %c0_32 = arith.constant 0 : index
    %c0_33 = arith.constant 0 : index
    %126 = vector.load %arg5[%c0_31, %c0_32, %c0_33] : memref<1x1x256xf32, #tpu.memory_space<vmem>>, vector<1x1x256xf32>
    %127 = vector.shape_cast %126 : vector<1x1x256xf32> to vector<1x256xf32>
    %128 = vector.shape_cast %125 : vector<1x256xf32> to vector<1x1x256xf32>
    tpu.vector_store %arg5[%c0_31, %c0_32, %c0_33], %128 {strides = array<i32>} : memref<1x1x256xf32, #tpu.memory_space<vmem>>, vector<1x1x256xf32>,
    return
  }
  func.func @transform_0(%arg0: i32) -> (i32, i32, i32) {
    %c0_i32 = arith.constant 0 : i32
    %c0_i32_0 = arith.constant 0 : i32
    %c0_i32_1 = arith.constant 0 : i32
    return %arg0, %c0_i32, %c0_i32_0 : i32, i32, i32
  }
  func.func @transform_1(%arg0: i32) -> (i32, i32, i32) {
    %c0_i32 = arith.constant 0 : i32
    %c0_i32_0 = arith.constant 0 : i32
    %c0_i32_1 = arith.constant 0 : i32
    %c0_i32_2 = arith.constant 0 : i32
    return %c0_i32, %c0_i32_0, %c0_i32_1 : i32, i32, i32
  }
  func.func @transform_2(%arg0: i32) -> (i32, i32) {
    %c0_i32 = arith.constant 0 : i32
    %c0_i32_0 = arith.constant 0 : i32
    %c0_i32_1 = arith.constant 0 : i32
    return %c0_i32, %c0_i32_0 : i32, i32
  }
  func.func @transform_3(%arg0: i32) -> i32 {
    %c0_i32 = arith.constant 0 : i32
    %c0_i32_0 = arith.constant 0 : i32
    return %c0_i32 : i32
  }
  func.func @transform_4(%arg0: i32) -> (i32, i32, i32) {
    %c0_i32 = arith.constant 0 : i32
    %c0_i32_0 = arith.constant 0 : i32
    %c0_i32_1 = arith.constant 0 : i32
    return %arg0, %c0_i32, %c0_i32_0 : i32, i32, i32
  }
}

</mosaic_0001>

<llo_original>
// kernel: tpu_custom_call.1
$region0: #{tpu_custom_call.1}
  #allocation0 [shape = 'u32[]', space=smem, size = 0x4, offset = 0x4, fixed_abs, tag = 'smem constant byte address 0x4 - core index']
  #allocation1 [shape = 'u32[144,128]{1,0:T(1,128)}', space=vmem, size = 0x12000, scoped, tag = 'internal scratch']
  %s0 = inlined_call_operand.hbm [shape: f32[2,4,4096], index: 0, kind: input, shape index: {}]
  %s1 = inlined_call_operand.vmem [shape: f32[5,8,4], index: 1, kind: input, shape index: {}]
  %s2 = inlined_call_operand.vmem [shape: f32[8,1], index: 2, kind: input, shape index: {}]
  %s3 = inlined_call_operand.vmem [shape: f32[2], index: 3, kind: input, shape index: {}]
  %s4 = inlined_call_operand.hbm [shape: f32[2,1,256], index: 4, kind: output, shape index: {}]
  %s5 = sld [smem:[#allocation0]]
  $region57: #{tpu_custom_call.1} parent=0
    _
  %s7 = ssub.s32 1, %s5
  %s8 = scalar_select 0, %s7, %s5
  $region1: #{tpu_custom_call.1} parent=0
    #allocation2 [shape = 'u8[131072]{0}', space=vmem, size = 0x20000, scoped, tag = 'input window, operand 0']
    #allocation3 [shape = 's32[2]{0}', space=sflag, size = 0x8, scoped, tag = 'scoped memory for tpu_custom_call.1']
    #allocation4 [shape = 's32[2]{0}', space=sflag, size = 0x8, scoped, tag = 'scoped memory for tpu_custom_call.1']
    #allocation5 [shape = 's32[2]{0}', space=sflag, size = 0x8, scoped, tag = 'scoped memory for tpu_custom_call.1']
    #allocation6 [shape = 'u8[512]{0}', space=smem, size = 0x200, scoped, tag = 'input window, operand 3, single buffered']
    #allocation7 [shape = 'u8[2048]{0}', space=vmem, size = 0x800, scoped, tag = 'output window, operand 0']
    %9 = vsyncpa [#allocation3], 0
    %s10 = scalar_lea.sflag [#allocation3], 1
    %11 = vsyncpa %s10, 0
    %12 = vsyncpa [#allocation5], 0
    %13 = vsyncpa [#allocation4], 0
    %s14 = scalar_lea.sflag [#allocation4], 1
    %15 = vsyncpa %s14, 0
    loop: start=0, step=1, limit=4
    $region2: #{tpu_custom_call.1} parent=1 // loop_pre_header
      _
    $region3: #{tpu_custom_call.1} parent=1 // loop_header
      %s17 = sphi 0, %s21
      %p18 = scmp.ge.s32.totalorder %s17, 4
      %s27 = sphi 0, %s29
      %s30 = sphi 0, %s27
      %s31 = sphi 0, %s30
      %s47 = sphi 0, %s31
      %s51 = sphi 0, %s51
      %s53 = sphi 0, %s51
      %s54 = sphi 0, %s53
      %s68 = sphi 0, %s54
      %s72 = sphi 0, %s72
      %s74 = sphi 0, %s72
      %s75 = sphi 0, %s74
      %s89 = sphi 0, %s75
      %s93 = sphi 0, %s93
      %s95 = sphi 0, %s93
      %s96 = sphi 0, %s95
      %s110 = sphi 0, %s96
      %s116 = sphi 0, %s118
      %s119 = sphi 0, %s116
      %s120 = sphi 0, %s119
      %s136 = sphi 0, %s120
    $region4: #{tpu_custom_call.1} parent=1 // loop_header_branch
      %20 = sbr.rel (%p18) target = $region8
    $region5: #{tpu_custom_call.1} parent=1 // loop_body
      %s22 = ssub.s32 %s17, 1
      %s23 = ssub.s32 %s17, 2
      %s24 = sadd.s32 %s17, 1
      %s25 = ssub.s32 %s17, %s24
      %p26 = scmp.eq.s32.totalorder %s25, 0
      %s28 = sadd.s32 %s27, 1
      %s29 = scalar_select %p26, %s27, %s28
      %p32 = pneg %p26
      %p33 = scmp.eq.s32.totalorder %s17, 1
      %p34 = por %p32, %p33
      %p35 = scmp.ne.s32.totalorder %s27, %s30
      %p36 = scmp.eq.s32.totalorder %s17, 0
      %p37 = por %p35, %p36
      %p38 = scmp.ne.s32.totalorder %s27, %s30
      %p39 = scmp.eq.s32.totalorder %s22, 1
      %p40 = por %p38, %p39
      %p41 = scmp.ne.s32.totalorder %s30, %s31
      %p42 = scmp.eq.s32.totalorder %s22, 0
      %p43 = por %p41, %p42
      %p44 = scmp.ne.s32.totalorder %s30, %s31
      %p45 = scmp.eq.s32.totalorder %s23, 1
      %p46 = por %p44, %p45
      %p48 = scmp.ne.s32.totalorder %s31, %s47
      %p49 = scmp.eq.s32.totalorder %s23, 0
      %p50 = por %p48, %p49
      %s52 = sadd.s32 %s51, 1
      %p55 = scmp.eq.s32.totalorder %s17, 1
      %p56 = scmp.ne.s32.totalorder %s51, %s53
      %p57 = scmp.eq.s32.totalorder %s17, 0
      %p58 = por %p56, %p57
      %p59 = scmp.ne.s32.totalorder %s51, %s53
      %p60 = scmp.eq.s32.totalorder %s22, 1
      %p61 = por %p59, %p60
      %p62 = scmp.ne.s32.totalorder %s53, %s54
      %p63 = scmp.eq.s32.totalorder %s22, 0
      %p64 = por %p62, %p63
      %p65 = scmp.ne.s32.totalorder %s53, %s54
      %p66 = scmp.eq.s32.totalorder %s23, 1
      %p67 = por %p65, %p66
      %p69 = scmp.ne.s32.totalorder %s54, %s68
      %p70 = scmp.eq.s32.totalorder %s23, 0
      %p71 = por %p69, %p70
      %s73 = sadd.s32 %s72, 1
      %p76 = scmp.eq.s32.totalorder %s17, 1
      %p77 = scmp.ne.s32.totalorder %s72, %s74
      %p78 = scmp.eq.s32.totalorder %s17, 0
      %p79 = por %p77, %p78
      %p80 = scmp.ne.s32.totalorder %s72, %s74
      %p81 = scmp.eq.s32.totalorder %s22, 1
      %p82 = por %p80, %p81
      %p83 = scmp.ne.s32.totalorder %s74, %s75
      %p84 = scmp.eq.s32.totalorder %s22, 0
      %p85 = por %p83, %p84
      %p86 = scmp.ne.s32.totalorder %s74, %s75
      %p87 = scmp.eq.s32.totalorder %s23, 1
      %p88 = por %p86, %p87
      %p90 = scmp.ne.s32.totalorder %s75, %s89
      %p91 = scmp.eq.s32.totalorder %s23, 0
      %p92 = por %p90, %p91
      %s94 = sadd.s32 %s93, 1
      %p97 = scmp.eq.s32.totalorder %s17, 1
      %p98 = scmp.ne.s32.totalorder %s93, %s95
      %p99 = scmp.eq.s32.totalorder %s17, 0
      %p100 = por %p98, %p99
      %p101 = scmp.ne.s32.totalorder %s93, %s95
      %p102 = scmp.eq.s32.totalorder %s22, 1
      %p103 = por %p101, %p102
      %p104 = scmp.ne.s32.totalorder %s95, %s96
      %p105 = scmp.eq.s32.totalorder %s22, 0
      %p106 = por %p104, %p105
      %p107 = scmp.ne.s32.totalorder %s95, %s96
      %p108 = scmp.eq.s32.totalorder %s23, 1
      %p109 = por %p107, %p108
      %p111 = scmp.ne.s32.totalorder %s96, %s110
      %p112 = scmp.eq.s32.totalorder %s23, 0
      %p113 = por %p111, %p112
      %s114 = ssub.s32 %s17, %s24
      %p115 = scmp.eq.s32.totalorder %s114, 0
      %s117 = sadd.s32 %s116, 1
      %s118 = scalar_select %p115, %s116, %s117
      %p121 = pneg %p115
      %p122 = scmp.eq.s32.totalorder %s17, 1
      %p123 = por %p121, %p122
      %p124 = scmp.ne.s32.totalorder %s116, %s119
      %p125 = scmp.eq.s32.totalorder %s17, 0
      %p126 = por %p124, %p125
      %p127 = scmp.ne.s32.totalorder %s116, %s119
      %p128 = scmp.eq.s32.totalorder %s22, 1
      %p129 = por %p127, %p128
      %p130 = scmp.ne.s32.totalorder %s119, %s120
      %p131 = scmp.eq.s32.totalorder %s22, 0
      %p132 = por %p130, %p131
      %p133 = scmp.ne.s32.totalorder %s119, %s120
      %p134 = scmp.eq.s32.totalorder %s23, 1
      %p135 = por %p133, %p134
      %p137 = scmp.ne.s32.totalorder %s120, %s136
      %p138 = scmp.eq.s32.totalorder %s23, 0
      %p139 = por %p137, %p138
      %p140 = scmp.le.s32.totalorder 1, %s17
      %p141 = scmp.lt.s32.totalorder %s17, 3
      %p142 = pnand %p140, %p141
      %p143 = pneg %p142
      // Predicated region
      $region9: #{tpu_custom_call.1} parent=5 // pred_check
        _
      $region10: #{tpu_custom_call.1} parent=5 // pred_check_branch
        %145 = sbr.rel (%p142) target = $region12
      $region11: #{tpu_custom_call.1} parent=5 // pred_region
        %s146 = ssub.s32 %s17, 1
        // Predicated region
        $region13: #{tpu_custom_call.1} parent=11 // pred_check
          %p147 = pneg %p64
        $region14: #{tpu_custom_call.1} parent=11 // pred_check_branch
          %149 = sbr.rel (%p147) target = $region16
        $region15: #{tpu_custom_call.1} parent=11 // pred_region
          _
        $region16: #{tpu_custom_call.1} parent=11 // pred_fallthru
          _
        // Predicated region
        $region17: #{tpu_custom_call.1} parent=11 // pred_check
          %p150 = pneg %p85
        $region18: #{tpu_custom_call.1} parent=11 // pred_check_branch
          %152 = sbr.rel (%p150) target = $region20
        $region19: #{tpu_custom_call.1} parent=11 // pred_region
          _
        $region20: #{tpu_custom_call.1} parent=11 // pred_fallthru
          _
        // Predicated region
        $region21: #{tpu_custom_call.1} parent=11 // pred_check
          %p153 = pneg %p106
        $region22: #{tpu_custom_call.1} parent=11 // pred_check_branch
          %155 = sbr.rel (%p153) target = $region24
        $region23: #{tpu_custom_call.1} parent=11 // pred_region
          %s157 = ssub.s32 16, 16
          %158 = vsyncadd [#allocation5], %s157
          %s160 = sshll.u32 %s3, 4
          %s161 = int_to_ptr.vmem [resolvable:$true] %s160
          %163 = dma.vmem_to_smem %s161, 16, [#allocation6], [#allocation5]
        $region24: #{tpu_custom_call.1} parent=11 // pred_fallthru
          _
      $region12: #{tpu_custom_call.1} parent=5 // pred_fallthru
        _
      %p164 = scmp.lt.s32.totalorder %s17, 2
      // Predicated region
      $region25: #{tpu_custom_call.1} parent=5 // pred_check
        %p165 = pneg %p164
      $region26: #{tpu_custom_call.1} parent=5 // pred_check_branch
        %167 = sbr.rel (%p165) target = $region28
      $region27: #{tpu_custom_call.1} parent=5 // pred_region
        // Predicated region
        $region29: #{tpu_custom_call.1} parent=27 // pred_check
          %p168 = pneg %p37
        $region30: #{tpu_custom_call.1} parent=27 // pred_check_branch
          %170 = sbr.rel (%p168) target = $region32
        $region31: #{tpu_custom_call.1} parent=27 // pred_region
          %s171 = sand.u32 %s27, 1
          %s172 = scalar_lea.sflag [#allocation3], %s171
          %s173 = sand.u32 %s27, 1
          %s174 = smul.addr %s173, 128
          %s175 = scalar_lea.vmem [#allocation2], %s174
          %s177 = ssub.s32 2048, 2048
          %178 = vsyncadd %s172, %s177
          %s179 = smul.addr %s17, 32
          %s180 = smul.addr %s179, 64
          %s181 = scalar_lea.hbm %s0, %s180
          %s183 = sshll.u32 %s175, 4
          %s184 = int_to_ptr.vmem [resolvable:$true] %s183
          %186 = dma.hbm_to_vmem [thread:$0]  %s181, 2048, %s184, %s172
        $region32: #{tpu_custom_call.1} parent=27 // pred_fallthru
          _
      $region28: #{tpu_custom_call.1} parent=5 // pred_fallthru
        _
      %p187 = scmp.le.s32.totalorder 1, %s17
      %p188 = scmp.lt.s32.totalorder %s17, 3
      %p189 = pnand %p187, %p188
      %p190 = pneg %p189
      // Predicated region
      $region33: #{tpu_custom_call.1} parent=5 // pred_check
        _
      $region34: #{tpu_custom_call.1} parent=5 // pred_check_branch
        %192 = sbr.rel (%p189) target = $region36
      $region35: #{tpu_custom_call.1} parent=5 // pred_region
        %s193 = ssub.s32 %s17, 1
        %s194 = sand.u32 %s30, 1
        %s195 = scalar_lea.sflag [#allocation3], %s194
        %s196 = sand.u32 %s30, 1
        %s197 = smul.addr %s196, 128
        %s198 = scalar_lea.vmem [#allocation2], %s197
        // Predicated region
        $region37: #{tpu_custom_call.1} parent=35 // pred_check
          %p199 = pneg %p43
        $region38: #{tpu_custom_call.1} parent=35 // pred_check_branch
          %201 = sbr.rel (%p199) target = $region40
        $region39: #{tpu_custom_call.1} parent=35 // pred_region
          %202 = dma.done %s195, 2048
        $region40: #{tpu_custom_call.1} parent=35 // pred_fallthru
          _
        // Predicated region
        $region41: #{tpu_custom_call.1} parent=35 // pred_check
          %p203 = pneg %p106
        $region42: #{tpu_custom_call.1} parent=35 // pred_check_branch
          %205 = sbr.rel (%p203) target = $region44
        $region43: #{tpu_custom_call.1} parent=35 // pred_region
          %206 = dma.done [#allocation5], 16
        $region44: #{tpu_custom_call.1} parent=35 // pred_fallthru
          _
        %207 = sfence
        %s208 = sand.u32 %s30, 1
        %s209 = scalar_lea.sflag [#allocation3], %s208
        %s210 = sand.u32 %s30, 1
        %s211 = smul.addr %s210, 128
        %s212 = scalar_lea.vmem [#allocation2], %s211
        %p213 = pneg %p43
        %p214 = pneg %p40
        %p215 = pneg %p64
        %p216 = pneg %p61
        %p217 = pneg %p85
        %p218 = pneg %p82
        %p219 = pneg %p106
        %p220 = pneg %p103
        %p221 = pneg %p132
        %p222 = pneg %p129
        %s223 = sand.u32 %s119, 1
        %s224 = scalar_lea.sflag [#allocation4], %s223
        %s225 = sand.u32 %s119, 1
        %s226 = smul.addr %s225, 2
        %s227 = scalar_lea.vmem [#allocation7], %s226
        %v228 = vld [vmem:[%s1] sm:$0xff]
        %v229 = vld [vmem:[%s198] sm:$0xff]
        %v230 = vld [vmem:[%s198 + $0x8] sm:$0xff]
        %v231 = vld [vmem:[%s198 + $0x10] sm:$0xff]
        %v232 = vld [vmem:[%s198 + $0x18] sm:$0xff]
        %v233 = vld [vmem:[%s198 + $0x20] sm:$0xff]
        %v234 = vld [vmem:[%s198 + $0x28] sm:$0xff]
        %v235 = vld [vmem:[%s198 + $0x30] sm:$0xff]
        %v236 = vld [vmem:[%s198 + $0x38] sm:$0xff]
        %v237 = vld [vmem:[%s198 + $0x40] sm:$0xff]
        %v238 = vld [vmem:[%s198 + $0x48] sm:$0xff]
        %v239 = vld [vmem:[%s198 + $0x50] sm:$0xff]
        %v240 = vld [vmem:[%s198 + $0x58] sm:$0xff]
        %s241 = scalar_lea.vmem %s1, 8
        %v242 = vld [vmem:[%s241] sm:$0xff]
        %v243 = vld [vmem:[%s198 + $0x60] sm:$0xff]
        %v256 = vcombine.high %v230, %v230
        %v257 = vcombine.high %v231, %v231
        %v258 = vcombine.high %v232, %v232
        %v259 = vcombine.high %v233, %v233
        %v260 = vcombine.high %v234, %v234
        %v261 = vcombine.high %v235, %v235
        %v262 = vcombine.high %v236, %v236
        %v263 = vcombine.high %v237, %v237
        %v264 = vcombine.high %v238, %v238
        %v265 = vcombine.high %v239, %v239
        %v266 = vcombine.high %v240, %v240
        %v267 = vcombine.high %v243, %v243
        %vm268 = vcmask 31744
        %v270 = vsel %vm268, %v242, 0
        %vm272 = vcmask 1043456
        %v273 = vsel %vm272, %v230, 0
        %v275 = vsel %vm272, %v256, 0
        %v277 = vsel %vm272, %v231, 0
        %v279 = vsel %vm272, %v257, 0
        %v281 = vsel %vm272, %v232, 0
        %v283 = vsel %vm272, %v258, 0
        %v285 = vsel %vm272, %v233, 0
        %v287 = vsel %vm272, %v259, 0
        %v289 = vsel %vm272, %v234, 0
        %v291 = vsel %vm272, %v260, 0
        %v293 = vsel %vm272, %v235, 0
        %v295 = vsel %vm272, %v261, 0
        %v297 = vsel %vm272, %v236, 0
        %v299 = vsel %vm272, %v262, 0
        %v301 = vsel %vm272, %v237, 0
        %v303 = vsel %vm272, %v263, 0
        %v305 = vsel %vm272, %v238, 0
        %v307 = vsel %vm272, %v264, 0
        %v309 = vsel %vm272, %v239, 0
        %v311 = vsel %vm272, %v265, 0
        %v313 = vsel %vm272, %v240, 0
        %v315 = vsel %vm272, %v266, 0
        %v317 = vsel %vm272, %v243, 0
        %v319 = vsel %vm272, %v267, 0
        %321 = vmatprep.subr.mxu0 %v275
        %322 = vmatpush1.msra.mxu0 %v273
        %323 = vmatprep.subr.mxu0 0.0
        %324 = vmatpush1.msra.mxu0 0.0
        %325 = vmatprep.subr.mxu0 0.0
        %326 = vmatpush1.msra.mxu0 0.0
        %327 = vmatprep.subr.mxu0 0.0
        %328 = vmatpush1.msra.mxu0 0.0
        %329 = vmatprep.subr.mxu0 0.0
        %330 = vmatpush1.msra.mxu0 0.0
        %331 = vmatprep.subr.mxu0 0.0
        %332 = vmatpush1.msra.mxu0 0.0
        %333 = vmatprep.subr.mxu0 0.0
        %334 = vmatpush1.msra.mxu0 0.0
        %335 = vmatprep.subr.mxu0 0.0
        %336 = vmatpush1.msra.mxu0 0.0
        %337 = vmatprep.subr.mxu0 0.0
        %338 = vmatpush1.msra.mxu0 0.0
        %339 = vmatprep.subr.mxu0 0.0
        %340 = vmatpush1.msra.mxu0 0.0
        %341 = vmatprep.subr.mxu0 0.0
        %342 = vmatpush1.msra.mxu0 0.0
        %343 = vmatprep.subr.mxu0 0.0
        %344 = vmatpush1.msra.mxu0 0.0
        %345 = vmatprep.subr.mxu0 0.0
        %346 = vmatpush1.msra.mxu0 0.0
        %347 = vmatprep.subr.mxu0 0.0
        %348 = vmatpush1.msra.mxu0 0.0
        %349 = vmatprep.subr.mxu0 0.0
        %350 = vmatpush1.msra.mxu0 0.0
        %351 = vmatprep.subr.mxu0 0.0
        %352 = vmatpush1.msra.mxu0 0.0
        %353 = vmatprep.subr.mxu0 0.0
        %354 = vmatpush1.msra.mxu0 0.0
        %355 = vmatprep.subr.mxu0 0.0
        %356 = vmatpush1.msra.mxu0 0.0
        %357 = vmatprep.subr.mxu0 0.0
        %358 = vmatpush1.msra.mxu0 0.0
        %359 = vmatprep.subr.mxu0 0.0
        %360 = vmatpush1.msra.mxu0 0.0
        %361 = vmatprep.subr.mxu0 0.0
        %362 = vmatpush1.msra.mxu0 0.0
        %363 = vmatprep.subr.mxu0 0.0
        %364 = vmatpush1.msra.mxu0 0.0
        %365 = vmatprep.subr.mxu0 0.0
        %366 = vmatpush1.msra.mxu0 0.0
        %367 = vmatprep.subr.mxu0 0.0
        %368 = vmatpush1.msra.mxu0 0.0
        %369 = vmatprep.subr.mxu0 0.0
        %370 = vmatpush1.msra.mxu0 0.0
        %371 = vmatprep.subr.mxu0 0.0
        %372 = vmatpush1.msra.mxu0 0.0
        %373 = vmatprep.subr.mxu0 0.0
        %374 = vmatpush1.msra.mxu0 0.0
        %375 = vmatprep.subr.mxu0 0.0
        %376 = vmatpush1.msra.mxu0 0.0
        %377 = vmatprep.subr.mxu0 0.0
        %378 = vmatpush1.msra.mxu0 0.0
        %379 = vmatprep.subr.mxu0 0.0
        %380 = vmatpush1.msra.mxu0 0.0
        %381 = vmatprep.subr.mxu0 0.0
        %382 = vmatpush1.msra.mxu0 0.0
        %383 = vmatprep.subr.mxu0 0.0
        %384 = vmatpush1.msra.mxu0 0.0
        %385 = vmatprep.mubr.f32.mxu0 0.0
        %386 = vmatmul.mubr.f32.gmra.mrb[0].mxu0 %v270
        %v387 = vpop.f32.mrb[0].mxu0
        %v388 = vadd.f32 0.0, %v387
        %v389 = vpop.f32.mrb[0].mxu0
        %v390 = vadd.f32 0.0, %v389
        %391 = vdwg.mxu0
        %392 = vmatprep.subr.mxu0 %v279
        %393 = vmatpush1.msra.mxu0 %v277
        %394 = vmatprep.subr.mxu0 0.0
        %395 = vmatpush1.msra.mxu0 0.0
        %396 = vmatprep.subr.mxu0 0.0
        %397 = vmatpush1.msra.mxu0 0.0
        %398 = vmatprep.subr.mxu0 0.0
        %399 = vmatpush1.msra.mxu0 0.0
        %400 = vmatprep.subr.mxu0 0.0
        %401 = vmatpush1.msra.mxu0 0.0
        %402 = vmatprep.subr.mxu0 0.0
        %403 = vmatpush1.msra.mxu0 0.0
        %404 = vmatprep.subr.mxu0 0.0
        %405 = vmatpush1.msra.mxu0 0.0
        %406 = vmatprep.subr.mxu0 0.0
        %407 = vmatpush1.msra.mxu0 0.0
        %408 = vmatprep.subr.mxu0 0.0
        %409 = vmatpush1.msra.mxu0 0.0
        %410 = vmatprep.subr.mxu0 0.0
        %411 = vmatpush1.msra.mxu0 0.0
        %412 = vmatprep.subr.mxu0 0.0
        %413 = vmatpush1.msra.mxu0 0.0
        %414 = vmatprep.subr.mxu0 0.0
        %415 = vmatpush1.msra.mxu0 0.0
        %416 = vmatprep.subr.mxu0 0.0
        %417 = vmatpush1.msra.mxu0 0.0
        %418 = vmatprep.subr.mxu0 0.0
        %419 = vmatpush1.msra.mxu0 0.0
        %420 = vmatprep.subr.mxu0 0.0
        %421 = vmatpush1.msra.mxu0 0.0
        %422 = vmatprep.subr.mxu0 0.0
        %423 = vmatpush1.msra.mxu0 0.0
        %424 = vmatprep.subr.mxu0 0.0
        %425 = vmatpush1.msra.mxu0 0.0
        %426 = vmatprep.subr.mxu0 0.0
        %427 = vmatpush1.msra.mxu0 0.0
        %428 = vmatprep.subr.mxu0 0.0
        %429 = vmatpush1.msra.mxu0 0.0
        %430 = vmatprep.subr.mxu0 0.0
        %431 = vmatpush1.msra.mxu0 0.0
        %432 = vmatprep.subr.mxu0 0.0
        %433 = vmatpush1.msra.mxu0 0.0
        %434 = vmatprep.subr.mxu0 0.0
        %435 = vmatpush1.msra.mxu0 0.0
        %436 = vmatprep.subr.mxu0 0.0
        %437 = vmatpush1.msra.mxu0 0.0
        %438 = vmatprep.subr.mxu0 0.0
        %439 = vmatpush1.msra.mxu0 0.0
        %440 = vmatprep.subr.mxu0 0.0
        %441 = vmatpush1.msra.mxu0 0.0
        %442 = vmatprep.subr.mxu0 0.0
        %443 = vmatpush1.msra.mxu0 0.0
        %444 = vmatprep.subr.mxu0 0.0
        %445 = vmatpush1.msra.mxu0 0.0
        %446 = vmatprep.subr.mxu0 0.0
        %447 = vmatpush1.msra.mxu0 0.0
        %448 = vmatprep.subr.mxu0 0.0
        %449 = vmatpush1.msra.mxu0 0.0
        %450 = vmatprep.subr.mxu0 0.0
        %451 = vmatpush1.msra.mxu0 0.0
        %452 = vmatprep.subr.mxu0 0.0
        %453 = vmatpush1.msra.mxu0 0.0
        %454 = vmatprep.subr.mxu0 0.0
        %455 = vmatpush1.msra.mxu0 0.0
        %456 = vmatprep.mubr.f32.mxu0 0.0
        %457 = vmatmul.mubr.f32.gmra.mrb[0].mxu0 %v270
        %v458 = vpop.f32.mrb[0].mxu0
        %v459 = vadd.f32 0.0, %v458
        %v460 = vpop.f32.mrb[0].mxu0
        %v461 = vadd.f32 0.0, %v460
        %462 = vdwg.mxu0
        %463 = vmatprep.subr.mxu0 %v283
        %464 = vmatpush1.msra.mxu0 %v281
        %465 = vmatprep.subr.mxu0 0.0
        %466 = vmatpush1.msra.mxu0 0.0
        %467 = vmatprep.subr.mxu0 0.0
        %468 = vmatpush1.msra.mxu0 0.0
        %469 = vmatprep.subr.mxu0 0.0
        %470 = vmatpush1.msra.mxu0 0.0
        %471 = vmatprep.subr.mxu0 0.0
        %472 = vmatpush1.msra.mxu0 0.0
        %473 = vmatprep.subr.mxu0 0.0
        %474 = vmatpush1.msra.mxu0 0.0
        %475 = vmatprep.subr.mxu0 0.0
        %476 = vmatpush1.msra.mxu0 0.0
        %477 = vmatprep.subr.mxu0 0.0
        %478 = vmatpush1.msra.mxu0 0.0
        %479 = vmatprep.subr.mxu0 0.0
        %480 = vmatpush1.msra.mxu0 0.0
        %481 = vmatprep.subr.mxu0 0.0
        %482 = vmatpush1.msra.mxu0 0.0
        %483 = vmatprep.subr.mxu0 0.0
        %484 = vmatpush1.msra.mxu0 0.0
        %485 = vmatprep.subr.mxu0 0.0
        %486 = vmatpush1.msra.mxu0 0.0
        %487 = vmatprep.subr.mxu0 0.0
        %488 = vmatpush1.msra.mxu0 0.0
        %489 = vmatprep.subr.mxu0 0.0
        %490 = vmatpush1.msra.mxu0 0.0
        %491 = vmatprep.subr.mxu0 0.0
        %492 = vmatpush1.msra.mxu0 0.0
        %493 = vmatprep.subr.mxu0 0.0
        %494 = vmatpush1.msra.mxu0 0.0
        %495 = vmatprep.subr.mxu0 0.0
        %496 = vmatpush1.msra.mxu0 0.0
        %497 = vmatprep.subr.mxu0 0.0
        %498 = vmatpush1.msra.mxu0 0.0
        %499 = vmatprep.subr.mxu0 0.0
        %500 = vmatpush1.msra.mxu0 0.0
        %501 = vmatprep.subr.mxu0 0.0
        %502 = vmatpush1.msra.mxu0 0.0
        %503 = vmatprep.subr.mxu0 0.0
        %504 = vmatpush1.msra.mxu0 0.0
        %505 = vmatprep.subr.mxu0 0.0
        %506 = vmatpush1.msra.mxu0 0.0
        %507 = vmatprep.subr.mxu0 0.0
        %508 = vmatpush1.msra.mxu0 0.0
        %509 = vmatprep.subr.mxu0 0.0
        %510 = vmatpush1.msra.mxu0 0.0
        %511 = vmatprep.subr.mxu0 0.0
        %512 = vmatpush1.msra.mxu0 0.0
        %513 = vmatprep.subr.mxu0 0.0
        %514 = vmatpush1.msra.mxu0 0.0
        %515 = vmatprep.subr.mxu0 0.0
        %516 = vmatpush1.msra.mxu0 0.0
        %517 = vmatprep.subr.mxu0 0.0
        %518 = vmatpush1.msra.mxu0 0.0
        %519 = vmatprep.subr.mxu0 0.0
        %520 = vmatpush1.msra.mxu0 0.0
        %521 = vmatprep.subr.mxu0 0.0
        %522 = vmatpush1.msra.mxu0 0.0
        %523 = vmatprep.subr.mxu0 0.0
        %524 = vmatpush1.msra.mxu0 0.0
        %525 = vmatprep.subr.mxu0 0.0
        %526 = vmatpush1.msra.mxu0 0.0
        %527 = vmatprep.mubr.f32.mxu0 0.0
        %528 = vmatmul.mubr.f32.gmra.mrb[0].mxu0 %v270
        %v529 = vpop.f32.mrb[0].mxu0
        %v530 = vadd.f32 0.0, %v529
        %v531 = vpop.f32.mrb[0].mxu0
        %v532 = vadd.f32 0.0, %v531
        %533 = vdwg.mxu0
        %534 = vmatprep.subr.mxu0 %v287
        %535 = vmatpush1.msra.mxu0 %v285
        %536 = vmatprep.subr.mxu0 0.0
        %537 = vmatpush1.msra.mxu0 0.0
        %538 = vmatprep.subr.mxu0 0.0
        %539 = vmatpush1.msra.mxu0 0.0
        %540 = vmatprep.subr.mxu0 0.0
        %541 = vmatpush1.msra.mxu0 0.0
        %542 = vmatprep.subr.mxu0 0.0
        %543 = vmatpush1.msra.mxu0 0.0
        %544 = vmatprep.subr.mxu0 0.0
        %545 = vmatpush1.msra.mxu0 0.0
        %546 = vmatprep.subr.mxu0 0.0
        %547 = vmatpush1.msra.mxu0 0.0
        %548 = vmatprep.subr.mxu0 0.0
        %549 = vmatpush1.msra.mxu0 0.0
        %550 = vmatprep.subr.mxu0 0.0
        %551 = vmatpush1.msra.mxu0 0.0
        %552 = vmatprep.subr.mxu0 0.0
        %553 = vmatpush1.msra.mxu0 0.0
        %554 = vmatprep.subr.mxu0 0.0
        %555 = vmatpush1.msra.mxu0 0.0
        %556 = vmatprep.subr.mxu0 0.0
        %557 = vmatpush1.msra.mxu0 0.0
        %558 = vmatprep.subr.mxu0 0.0
        %559 = vmatpush1.msra.mxu0 0.0
        %560 = vmatprep.subr.mxu0 0.0
        %561 = vmatpush1.msra.mxu0 0.0
        %562 = vmatprep.subr.mxu0 0.0
        %563 = vmatpush1.msra.mxu0 0.0
        %564 = vmatprep.subr.mxu0 0.0
        %565 = vmatpush1.msra.mxu0 0.0
        %566 = vmatprep.subr.mxu0 0.0
        %567 = vmatpush1.msra.mxu0 0.0
        %568 = vmatprep.subr.mxu0 0.0
        %569 = vmatpush1.msra.mxu0 0.0
        %570 = vmatprep.subr.mxu0 0.0
        %571 = vmatpush1.msra.mxu0 0.0
        %572 = vmatprep.subr.mxu0 0.0
        %573 = vmatpush1.msra.mxu0 0.0
        %574 = vmatprep.subr.mxu0 0.0
        %575 = vmatpush1.msra.mxu0 0.0
        %576 = vmatprep.subr.mxu0 0.0
        %577 = vmatpush1.msra.mxu0 0.0
        %578 = vmatprep.subr.mxu0 0.0
        %579 = vmatpush1.msra.mxu0 0.0
        %580 = vmatprep.subr.mxu0 0.0
        %581 = vmatpush1.msra.mxu0 0.0
        %582 = vmatprep.subr.mxu0 0.0
        %583 = vmatpush1.msra.mxu0 0.0
        %584 = vmatprep.subr.mxu0 0.0
        %585 = vmatpush1.msra.mxu0 0.0
        %586 = vmatprep.subr.mxu0 0.0
        %587 = vmatpush1.msra.mxu0 0.0
        %588 = vmatprep.subr.mxu0 0.0
        %589 = vmatpush1.msra.mxu0 0.0
        %590 = vmatprep.subr.mxu0 0.0
        %591 = vmatpush1.msra.mxu0 0.0
        %592 = vmatprep.subr.mxu0 0.0
        %593 = vmatpush1.msra.mxu0 0.0
        %594 = vmatprep.subr.mxu0 0.0
        %595 = vmatpush1.msra.mxu0 0.0
        %596 = vmatprep.subr.mxu0 0.0
        %597 = vmatpush1.msra.mxu0 0.0
        %598 = vmatprep.mubr.f32.mxu0 0.0
        %599 = vmatmul.mubr.f32.gmra.mrb[0].mxu0 %v270
        %v600 = vpop.f32.mrb[0].mxu0
        %v601 = vadd.f32 0.0, %v600
        %v602 = vpop.f32.mrb[0].mxu0
        %v603 = vadd.f32 0.0, %v602
        %604 = vdwg.mxu0
        %605 = vmatprep.subr.mxu0 %v291
        %606 = vmatpush1.msra.mxu0 %v289
        %607 = vmatprep.subr.mxu0 0.0
        %608 = vmatpush1.msra.mxu0 0.0
        %609 = vmatprep.subr.mxu0 0.0
        %610 = vmatpush1.msra.mxu0 0.0
        %611 = vmatprep.subr.mxu0 0.0
        %612 = vmatpush1.msra.mxu0 0.0
        %613 = vmatprep.subr.mxu0 0.0
        %614 = vmatpush1.msra.mxu0 0.0
        %615 = vmatprep.subr.mxu0 0.0
        %616 = vmatpush1.msra.mxu0 0.0
        %617 = vmatprep.subr.mxu0 0.0
        %618 = vmatpush1.msra.mxu0 0.0
        %619 = vmatprep.subr.mxu0 0.0
        %620 = vmatpush1.msra.mxu0 0.0
        %621 = vmatprep.subr.mxu0 0.0
        %622 = vmatpush1.msra.mxu0 0.0
        %623 = vmatprep.subr.mxu0 0.0
        %624 = vmatpush1.msra.mxu0 0.0
        %625 = vmatprep.subr.mxu0 0.0
        %626 = vmatpush1.msra.mxu0 0.0
        %627 = vmatprep.subr.mxu0 0.0
        %628 = vmatpush1.msra.mxu0 0.0
        %629 = vmatprep.subr.mxu0 0.0
        %630 = vmatpush1.msra.mxu0 0.0
        %631 = vmatprep.subr.mxu0 0.0
        %632 = vmatpush1.msra.mxu0 0.0
        %633 = vmatprep.subr.mxu0 0.0
        %634 = vmatpush1.msra.mxu0 0.0
        %635 = vmatprep.subr.mxu0 0.0
        %636 = vmatpush1.msra.mxu0 0.0
        %637 = vmatprep.subr.mxu0 0.0
        %638 = vmatpush1.msra.mxu0 0.0
        %639 = vmatprep.subr.mxu0 0.0
        %640 = vmatpush1.msra.mxu0 0.0
        %641 = vmatprep.subr.mxu0 0.0
        %642 = vmatpush1.msra.mxu0 0.0
        %643 = vmatprep.subr.mxu0 0.0
        %644 = vmatpush1.msra.mxu0 0.0
        %645 = vmatprep.subr.mxu0 0.0
        %646 = vmatpush1.msra.mxu0 0.0
        %647 = vmatprep.subr.mxu0 0.0
        %648 = vmatpush1.msra.mxu0 0.0
        %649 = vmatprep.subr.mxu0 0.0
        %650 = vmatpush1.msra.mxu0 0.0
        %651 = vmatprep.subr.mxu0 0.0
        %652 = vmatpush1.msra.mxu0 0.0
        %653 = vmatprep.subr.mxu0 0.0
        %654 = vmatpush1.msra.mxu0 0.0
        %655 = vmatprep.subr.mxu0 0.0
        %656 = vmatpush1.msra.mxu0 0.0
        %657 = vmatprep.subr.mxu0 0.0
        %658 = vmatpush1.msra.mxu0 0.0
        %659 = vmatprep.subr.mxu0 0.0
        %660 = vmatpush1.msra.mxu0 0.0
        %661 = vmatprep.subr.mxu0 0.0
        %662 = vmatpush1.msra.mxu0 0.0
        %663 = vmatprep.subr.mxu0 0.0
        %664 = vmatpush1.msra.mxu0 0.0
        %665 = vmatprep.subr.mxu0 0.0
        %666 = vmatpush1.msra.mxu0 0.0
        %667 = vmatprep.subr.mxu0 0.0
        %668 = vmatpush1.msra.mxu0 0.0
        %669 = vmatprep.mubr.f32.mxu0 0.0
        %670 = vmatmul.mubr.f32.gmra.mrb[0].mxu0 %v270
        %v671 = vpop.f32.mrb[0].mxu0
        %v672 = vadd.f32 0.0, %v671
        %v673 = vpop.f32.mrb[0].mxu0
        %v674 = vadd.f32 0.0, %v673
        %675 = vdwg.mxu0
        %676 = vmatprep.subr.mxu0 %v295
        %677 = vmatpush1.msra.mxu0 %v293
        %678 = vmatprep.subr.mxu0 0.0
        %679 = vmatpush1.msra.mxu0 0.0
        %680 = vmatprep.subr.mxu0 0.0
        %681 = vmatpush1.msra.mxu0 0.0
        %682 = vmatprep.subr.mxu0 0.0
        %683 = vmatpush1.msra.mxu0 0.0
        %684 = vmatprep.subr.mxu0 0.0
        %685 = vmatpush1.msra.mxu0 0.0
        %686 = vmatprep.subr.mxu0 0.0
        %687 = vmatpush1.msra.mxu0 0.0
        %688 = vmatprep.subr.mxu0 0.0
        %689 = vmatpush1.msra.mxu0 0.0
        %690 = vmatprep.subr.mxu0 0.0
        %691 = vmatpush1.msra.mxu0 0.0
        %692 = vmatprep.subr.mxu0 0.0
        %693 = vmatpush1.msra.mxu0 0.0
        %694 = vmatprep.subr.mxu0 0.0
        %695 = vmatpush1.msra.mxu0 0.0
        %696 = vmatprep.subr.mxu0 0.0
        %697 = vmatpush1.msra.mxu0 0.0
        %698 = vmatprep.subr.mxu0 0.0
        %699 = vmatpush1.msra.mxu0 0.0
        %700 = vmatprep.subr.mxu0 0.0
        %701 = vmatpush1.msra.mxu0 0.0
        %702 = vmatprep.subr.mxu0 0.0
        %703 = vmatpush1.msra.mxu0 0.0
        %704 = vmatprep.subr.mxu0 0.0
        %705 = vmatpush1.msra.mxu0 0.0
        %706 = vmatprep.subr.mxu0 0.0
        %707 = vmatpush1.msra.mxu0 0.0
        %708 = vmatprep.subr.mxu0 0.0
        %709 = vmatpush1.msra.mxu0 0.0
        %710 = vmatprep.subr.mxu0 0.0
        %711 = vmatpush1.msra.mxu0 0.0
        %712 = vmatprep.subr.mxu0 0.0
        %713 = vmatpush1.msra.mxu0 0.0
        %714 = vmatprep.subr.mxu0 0.0
        %715 = vmatpush1.msra.mxu0 0.0
        %716 = vmatprep.subr.mxu0 0.0
        %717 = vmatpush1.msra.mxu0 0.0
        %718 = vmatprep.subr.mxu0 0.0
        %719 = vmatpush1.msra.mxu0 0.0
        %720 = vmatprep.subr.mxu0 0.0
        %721 = vmatpush1.msra.mxu0 0.0
        %722 = vmatprep.subr.mxu0 0.0
        %723 = vmatpush1.msra.mxu0 0.0
        %724 = vmatprep.subr.mxu0 0.0
        %725 = vmatpush1.msra.mxu0 0.0
        %726 = vmatprep.subr.mxu0 0.0
        %727 = vmatpush1.msra.mxu0 0.0
        %728 = vmatprep.subr.mxu0 0.0
        %729 = vmatpush1.msra.mxu0 0.0
        %730 = vmatprep.subr.mxu0 0.0
        %731 = vmatpush1.msra.mxu0 0.0
        %732 = vmatprep.subr.mxu0 0.0
        %733 = vmatpush1.msra.mxu0 0.0
        %734 = vmatprep.subr.mxu0 0.0
        %735 = vmatpush1.msra.mxu0 0.0
        %736 = vmatprep.subr.mxu0 0.0
        %737 = vmatpush1.msra.mxu0 0.0
        %738 = vmatprep.subr.mxu0 0.0
        %739 = vmatpush1.msra.mxu0 0.0
        %740 = vmatprep.mubr.f32.mxu0 0.0
        %741 = vmatmul.mubr.f32.gmra.mrb[0].mxu0 %v270
        %v742 = vpop.f32.mrb[0].mxu0
        %v743 = vadd.f32 0.0, %v742
        %v744 = vpop.f32.mrb[0].mxu0
        %v745 = vadd.f32 0.0, %v744
        %746 = vdwg.mxu0
        %747 = vmatprep.subr.mxu0 %v299
        %748 = vmatpush1.msra.mxu0 %v297
        %749 = vmatprep.subr.mxu0 0.0
        %750 = vmatpush1.msra.mxu0 0.0
        %751 = vmatprep.subr.mxu0 0.0
        %752 = vmatpush1.msra.mxu0 0.0
        %753 = vmatprep.subr.mxu0 0.0
        %754 = vmatpush1.msra.mxu0 0.0
        %755 = vmatprep.subr.mxu0 0.0
        %756 = vmatpush1.msra.mxu0 0.0
        %757 = vmatprep.subr.mxu0 0.0
        %758 = vmatpush1.msra.mxu0 0.0
        %759 = vmatprep.subr.mxu0 0.0
        %760 = vmatpush1.msra.mxu0 0.0
        %761 = vmatprep.subr.mxu0 0.0
        %762 = vmatpush1.msra.mxu0 0.0
        %763 = vmatprep.subr.mxu0 0.0
        %764 = vmatpush1.msra.mxu0 0.0
        %765 = vmatprep.subr.mxu0 0.0
        %766 = vmatpush1.msra.mxu0 0.0
        %767 = vmatprep.subr.mxu0 0.0
        %768 = vmatpush1.msra.mxu0 0.0
        %769 = vmatprep.subr.mxu0 0.0
        %770 = vmatpush1.msra.mxu0 0.0
        %771 = vmatprep.subr.mxu0 0.0
        %772 = vmatpush1.msra.mxu0 0.0
        %773 = vmatprep.subr.mxu0 0.0
        %774 = vmatpush1.msra.mxu0 0.0
        %775 = vmatprep.subr.mxu0 0.0
        %776 = vmatpush1.msra.mxu0 0.0
        %777 = vmatprep.subr.mxu0 0.0
        %778 = vmatpush1.msra.mxu0 0.0
        %779 = vmatprep.subr.mxu0 0.0
        %780 = vmatpush1.msra.mxu0 0.0
        %781 = vmatprep.subr.mxu0 0.0
        %782 = vmatpush1.msra.mxu0 0.0
        %783 = vmatprep.subr.mxu0 0.0
        %784 = vmatpush1.msra.mxu0 0.0
        %785 = vmatprep.subr.mxu0 0.0
        %786 = vmatpush1.msra.mxu0 0.0
        %787 = vmatprep.subr.mxu0 0.0
        %788 = vmatpush1.msra.mxu0 0.0
        %789 = vmatprep.subr.mxu0 0.0
        %790 = vmatpush1.msra.mxu0 0.0
        %791 = vmatprep.subr.mxu0 0.0
        %792 = vmatpush1.msra.mxu0 0.0
        %793 = vmatprep.subr.mxu0 0.0
        %794 = vmatpush1.msra.mxu0 0.0
        %795 = vmatprep.subr.mxu0 0.0
        %796 = vmatpush1.msra.mxu0 0.0
        %797 = vmatprep.subr.mxu0 0.0
        %798 = vmatpush1.msra.mxu0 0.0
        %799 = vmatprep.subr.mxu0 0.0
        %800 = vmatpush1.msra.mxu0 0.0
        %801 = vmatprep.subr.mxu0 0.0
        %802 = vmatpush1.msra.mxu0 0.0
        %803 = vmatprep.subr.mxu0 0.0
        %804 = vmatpush1.msra.mxu0 0.0
        %805 = vmatprep.subr.mxu0 0.0
        %806 = vmatpush1.msra.mxu0 0.0
        %807 = vmatprep.subr.mxu0 0.0
        %808 = vmatpush1.msra.mxu0 0.0
        %809 = vmatprep.subr.mxu0 0.0
        %810 = vmatpush1.msra.mxu0 0.0
        %811 = vmatprep.mubr.f32.mxu0 0.0
        %812 = vmatmul.mubr.f32.gmra.mrb[0].mxu0 %v270
        %v813 = vpop.f32.mrb[0].mxu0
        %v814 = vadd.f32 0.0, %v813
        %v815 = vpop.f32.mrb[0].mxu0
        %v816 = vadd.f32 0.0, %v815
        %817 = vdwg.mxu0
        %818 = vmatprep.subr.mxu0 %v303
        %819 = vmatpush1.msra.mxu0 %v301
        %820 = vmatprep.subr.mxu0 0.0
        %821 = vmatpush1.msra.mxu0 0.0
        %822 = vmatprep.subr.mxu0 0.0
        %823 = vmatpush1.msra.mxu0 0.0
        %824 = vmatprep.subr.mxu0 0.0
        %825 = vmatpush1.msra.mxu0 0.0
        %826 = vmatprep.subr.mxu0 0.0
        %827 = vmatpush1.msra.mxu0 0.0
        %828 = vmatprep.subr.mxu0 0.0
        %829 = vmatpush1.msra.mxu0 0.0
        %830 = vmatprep.subr.mxu0 0.0
        %831 = vmatpush1.msra.mxu0 0.0
        %832 = vmatprep.subr.mxu0 0.0
        %833 = vmatpush1.msra.mxu0 0.0
        %834 = vmatprep.subr.mxu0 0.0
        %835 = vmatpush1.msra.mxu0 0.0
        %836 = vmatprep.subr.mxu0 0.0
        %837 = vmatpush1.msra.mxu0 0.0
        %838 = vmatprep.subr.mxu0 0.0
        %839 = vmatpush1.msra.mxu0 0.0
        %840 = vmatprep.subr.mxu0 0.0
        %841 = vmatpush1.msra.mxu0 0.0
        %842 = vmatprep.subr.mxu0 0.0
        %843 = vmatpush1.msra.mxu0 0.0
        %844 = vmatprep.subr.mxu0 0.0
        %845 = vmatpush1.msra.mxu0 0.0
        %846 = vmatprep.subr.mxu0 0.0
        %847 = vmatpush1.msra.mxu0 0.0
        %848 = vmatprep.subr.mxu0 0.0
        %849 = vmatpush1.msra.mxu0 0.0
        %850 = vmatprep.subr.mxu0 0.0
        %851 = vmatpush1.msra.mxu0 0.0
        %852 = vmatprep.subr.mxu0 0.0
        %853 = vmatpush1.msra.mxu0 0.0
        %854 = vmatprep.subr.mxu0 0.0
        %855 = vmatpush1.msra.mxu0 0.0
        %856 = vmatprep.subr.mxu0 0.0
        %857 = vmatpush1.msra.mxu0 0.0
        %858 = vmatprep.subr.mxu0 0.0
        %859 = vmatpush1.msra.mxu0 0.0
        %860 = vmatprep.subr.mxu0 0.0
        %861 = vmatpush1.msra.mxu0 0.0
        %862 = vmatprep.subr.mxu0 0.0
        %863 = vmatpush1.msra.mxu0 0.0
        %864 = vmatprep.subr.mxu0 0.0
        %865 = vmatpush1.msra.mxu0 0.0
        %866 = vmatprep.subr.mxu0 0.0
        %867 = vmatpush1.msra.mxu0 0.0
        %868 = vmatprep.subr.mxu0 0.0
        %869 = vmatpush1.msra.mxu0 0.0
        %870 = vmatprep.subr.mxu0 0.0
        %871 = vmatpush1.msra.mxu0 0.0
        %872 = vmatprep.subr.mxu0 0.0
        %873 = vmatpush1.msra.mxu0 0.0
        %874 = vmatprep.subr.mxu0 0.0
        %875 = vmatpush1.msra.mxu0 0.0
        %876 = vmatprep.subr.mxu0 0.0
        %877 = vmatpush1.msra.mxu0 0.0
        %878 = vmatprep.subr.mxu0 0.0
        %879 = vmatpush1.msra.mxu0 0.0
        %880 = vmatprep.subr.mxu0 0.0
        %881 = vmatpush1.msra.mxu0 0.0
        %882 = vmatprep.mubr.f32.mxu0 0.0
        %883 = vmatmul.mubr.f32.gmra.mrb[0].mxu0 %v270
        %v884 = vpop.f32.mrb[0].mxu0
        %v885 = vadd.f32 0.0, %v884
        %v886 = vpop.f32.mrb[0].mxu0
        %v887 = vadd.f32 0.0, %v886
        %888 = vdwg.mxu0
        %889 = vmatprep.subr.mxu0 %v307
        %890 = vmatpush1.msra.mxu0 %v305
        %891 = vmatprep.subr.mxu0 0.0
        %892 = vmatpush1.msra.mxu0 0.0
        %893 = vmatprep.subr.mxu0 0.0
        %894 = vmatpush1.msra.mxu0 0.0
        %895 = vmatprep.subr.mxu0 0.0
        %896 = vmatpush1.msra.mxu0 0.0
        %897 = vmatprep.subr.mxu0 0.0
        %898 = vmatpush1.msra.mxu0 0.0
        %899 = vmatprep.subr.mxu0 0.0
        %900 = vmatpush1.msra.mxu0 0.0
        %901 = vmatprep.subr.mxu0 0.0
        %902 = vmatpush1.msra.mxu0 0.0
        %903 = vmatprep.subr.mxu0 0.0
        %904 = vmatpush1.msra.mxu0 0.0
        %905 = vmatprep.subr.mxu0 0.0
        %906 = vmatpush1.msra.mxu0 0.0
        %907 = vmatprep.subr.mxu0 0.0
        %908 = vmatpush1.msra.mxu0 0.0
        %909 = vmatprep.subr.mxu0 0.0
        %910 = vmatpush1.msra.mxu0 0.0
        %911 = vmatprep.subr.mxu0 0.0
        %912 = vmatpush1.msra.mxu0 0.0
        %913 = vmatprep.subr.mxu0 0.0
        %914 = vmatpush1.msra.mxu0 0.0
        %915 = vmatprep.subr.mxu0 0.0
        %916 = vmatpush1.msra.mxu0 0.0
        %917 = vmatprep.subr.mxu0 0.0
        %918 = vmatpush1.msra.mxu0 0.0
        %919 = vmatprep.subr.mxu0 0.0
        %920 = vmatpush1.msra.mxu0 0.0
        %921 = vmatprep.subr.mxu0 0.0
        %922 = vmatpush1.msra.mxu0 0.0
        %923 = vmatprep.subr.mxu0 0.0
        %924 = vmatpush1.msra.mxu0 0.0
        %925 = vmatprep.subr.mxu0 0.0
        %926 = vmatpush1.msra.mxu0 0.0
        %927 = vmatprep.subr.mxu0 0.0
        %928 = vmatpush1.msra.mxu0 0.0
        %929 = vmatprep.subr.mxu0 0.0
        %930 = vmatpush1.msra.mxu0 0.0
        %931 = vmatprep.subr.mxu0 0.0
        %932 = vmatpush1.msra.mxu0 0.0
        %933 = vmatprep.subr.mxu0 0.0
        %934 = vmatpush1.msra.mxu0 0.0
        %935 = vmatprep.subr.mxu0 0.0
        %936 = vmatpush1.msra.mxu0 0.0
        %937 = vmatprep.subr.mxu0 0.0
        %938 = vmatpush1.msra.mxu0 0.0
        %939 = vmatprep.subr.mxu0 0.0
        %940 = vmatpush1.msra.mxu0 0.0
        %941 = vmatprep.subr.mxu0 0.0
        %942 = vmatpush1.msra.mxu0 0.0
        %943 = vmatprep.subr.mxu0 0.0
        %944 = vmatpush1.msra.mxu0 0.0
        %945 = vmatprep.subr.mxu0 0.0
        %946 = vmatpush1.msra.mxu0 0.0
        %947 = vmatprep.subr.mxu0 0.0
        %948 = vmatpush1.msra.mxu0 0.0
        %949 = vmatprep.subr.mxu0 0.0
        %950 = vmatpush1.msra.mxu0 0.0
        %951 = vmatprep.subr.mxu0 0.0
        %952 = vmatpush1.msra.mxu0 0.0
        %953 = vmatprep.mubr.f32.mxu0 0.0
        %954 = vmatmul.mubr.f32.gmra.mrb[0].mxu0 %v270
        %v955 = vpop.f32.mrb[0].mxu0
        %v956 = vadd.f32 0.0, %v955
        %v957 = vpop.f32.mrb[0].mxu0
        %v958 = vadd.f32 0.0, %v957
        %959 = vdwg.mxu0
        %960 = vmatprep.subr.mxu0 %v311
        %961 = vmatpush1.msra.mxu0 %v309
        %962 = vmatprep.subr.mxu0 0.0
        %963 = vmatpush1.msra.mxu0 0.0
        %964 = vmatprep.subr.mxu0 0.0
        %965 = vmatpush1.msra.mxu0 0.0
        %966 = vmatprep.subr.mxu0 0.0
        %967 = vmatpush1.msra.mxu0 0.0
        %968 = vmatprep.subr.mxu0 0.0
        %969 = vmatpush1.msra.mxu0 0.0
        %970 = vmatprep.subr.mxu0 0.0
        %971 = vmatpush1.msra.mxu0 0.0
        %972 = vmatprep.subr.mxu0 0.0
        %973 = vmatpush1.msra.mxu0 0.0
        %974 = vmatprep.subr.mxu0 0.0
        %975 = vmatpush1.msra.mxu0 0.0
        %976 = vmatprep.subr.mxu0 0.0
        %977 = vmatpush1.msra.mxu0 0.0
        %978 = vmatprep.subr.mxu0 0.0
        %979 = vmatpush1.msra.mxu0 0.0
        %980 = vmatprep.subr.mxu0 0.0
        %981 = vmatpush1.msra.mxu0 0.0
        %982 = vmatprep.subr.mxu0 0.0
        %983 = vmatpush1.msra.mxu0 0.0
        %984 = vmatprep.subr.mxu0 0.0
        %985 = vmatpush1.msra.mxu0 0.0
        %986 = vmatprep.subr.mxu0 0.0
        %987 = vmatpush1.msra.mxu0 0.0
        %988 = vmatprep.subr.mxu0 0.0
        %989 = vmatpush1.msra.mxu0 0.0
        %990 = vmatprep.subr.mxu0 0.0
        %991 = vmatpush1.msra.mxu0 0.0
        %992 = vmatprep.subr.mxu0 0.0
        %993 = vmatpush1.msra.mxu0 0.0
        %994 = vmatprep.subr.mxu0 0.0
        %995 = vmatpush1.msra.mxu0 0.0
        %996 = vmatprep.subr.mxu0 0.0
        %997 = vmatpush1.msra.mxu0 0.0
        %998 = vmatprep.subr.mxu0 0.0
        %999 = vmatpush1.msra.mxu0 0.0
        %1000 = vmatprep.subr.mxu0 0.0
        %1001 = vmatpush1.msra.mxu0 0.0
        %1002 = vmatprep.subr.mxu0 0.0
        %1003 = vmatpush1.msra.mxu0 0.0
        %1004 = vmatprep.subr.mxu0 0.0
        %1005 = vmatpush1.msra.mxu0 0.0
        %1006 = vmatprep.subr.mxu0 0.0
        %1007 = vmatpush1.msra.mxu0 0.0
        %1008 = vmatprep.subr.mxu0 0.0
        %1009 = vmatpush1.msra.mxu0 0.0
        %1010 = vmatprep.subr.mxu0 0.0
        %1011 = vmatpush1.msra.mxu0 0.0
        %1012 = vmatprep.subr.mxu0 0.0
        %1013 = vmatpush1.msra.mxu0 0.0
        %1014 = vmatprep.subr.mxu0 0.0
        %1015 = vmatpush1.msra.mxu0 0.0
        %1016 = vmatprep.subr.mxu0 0.0
        %1017 = vmatpush1.msra.mxu0 0.0
        %1018 = vmatprep.subr.mxu0 0.0
        %1019 = vmatpush1.msra.mxu0 0.0
        %1020 = vmatprep.subr.mxu0 0.0
        %1021 = vmatpush1.msra.mxu0 0.0
        %1022 = vmatprep.subr.mxu0 0.0
        %1023 = vmatpush1.msra.mxu0 0.0
        %1024 = vmatprep.mubr.f32.mxu0 0.0
        %1025 = vmatmul.mubr.f32.gmra.mrb[0].mxu0 %v270
        %v1026 = vpop.f32.mrb[0].mxu0
        %v1027 = vadd.f32 0.0, %v1026
        %v1028 = vpop.f32.mrb[0].mxu0
        %v1029 = vadd.f32 0.0, %v1028
        %1030 = vdwg.mxu0
        %1031 = vmatprep.subr.mxu0 %v315
        %1032 = vmatpush1.msra.mxu0 %v313
        %1033 = vmatprep.subr.mxu0 0.0
        %1034 = vmatpush1.msra.mxu0 0.0
        %1035 = vmatprep.subr.mxu0 0.0
        %1036 = vmatpush1.msra.mxu0 0.0
        %1037 = vmatprep.subr.mxu0 0.0
        %1038 = vmatpush1.msra.mxu0 0.0
        %1039 = vmatprep.subr.mxu0 0.0
        %1040 = vmatpush1.msra.mxu0 0.0
        %1041 = vmatprep.subr.mxu0 0.0
        %1042 = vmatpush1.msra.mxu0 0.0
        %1043 = vmatprep.subr.mxu0 0.0
        %1044 = vmatpush1.msra.mxu0 0.0
        %1045 = vmatprep.subr.mxu0 0.0
        %1046 = vmatpush1.msra.mxu0 0.0
        %1047 = vmatprep.subr.mxu0 0.0
        %1048 = vmatpush1.msra.mxu0 0.0
        %1049 = vmatprep.subr.mxu0 0.0
        %1050 = vmatpush1.msra.mxu0 0.0
        %1051 = vmatprep.subr.mxu0 0.0
        %1052 = vmatpush1.msra.mxu0 0.0
        %1053 = vmatprep.subr.mxu0 0.0
        %1054 = vmatpush1.msra.mxu0 0.0
        %1055 = vmatprep.subr.mxu0 0.0
        %1056 = vmatpush1.msra.mxu0 0.0
        %1057 = vmatprep.subr.mxu0 0.0
        %1058 = vmatpush1.msra.mxu0 0.0
        %1059 = vmatprep.subr.mxu0 0.0
        %1060 = vmatpush1.msra.mxu0 0.0
        %1061 = vmatprep.subr.mxu0 0.0
        %1062 = vmatpush1.msra.mxu0 0.0
        %1063 = vmatprep.subr.mxu0 0.0
        %1064 = vmatpush1.msra.mxu0 0.0
        %1065 = vmatprep.subr.mxu0 0.0
        %1066 = vmatpush1.msra.mxu0 0.0
        %1067 = vmatprep.subr.mxu0 0.0
        %1068 = vmatpush1.msra.mxu0 0.0
        %1069 = vmatprep.subr.mxu0 0.0
        %1070 = vmatpush1.msra.mxu0 0.0
        %1071 = vmatprep.subr.mxu0 0.0
        %1072 = vmatpush1.msra.mxu0 0.0
        %1073 = vmatprep.subr.mxu0 0.0
        %1074 = vmatpush1.msra.mxu0 0.0
        %1075 = vmatprep.subr.mxu0 0.0
        %1076 = vmatpush1.msra.mxu0 0.0
        %1077 = vmatprep.subr.mxu0 0.0
        %1078 = vmatpush1.msra.mxu0 0.0
        %1079 = vmatprep.subr.mxu0 0.0
        %1080 = vmatpush1.msra.mxu0 0.0
        %1081 = vmatprep.subr.mxu0 0.0
        %1082 = vmatpush1.msra.mxu0 0.0
        %1083 = vmatprep.subr.mxu0 0.0
        %1084 = vmatpush1.msra.mxu0 0.0
        %1085 = vmatprep.subr.mxu0 0.0
        %1086 = vmatpush1.msra.mxu0 0.0
        %1087 = vmatprep.subr.mxu0 0.0
        %1088 = vmatpush1.msra.mxu0 0.0
        %1089 = vmatprep.subr.mxu0 0.0
        %1090 = vmatpush1.msra.mxu0 0.0
        %1091 = vmatprep.subr.mxu0 0.0
        %1092 = vmatpush1.msra.mxu0 0.0
        %1093 = vmatprep.subr.mxu0 0.0
        %1094 = vmatpush1.msra.mxu0 0.0
        %1095 = vmatprep.mubr.f32.mxu0 0.0
        %1096 = vmatmul.mubr.f32.gmra.mrb[0].mxu0 %v270
        %v1097 = vpop.f32.mrb[0].mxu0
        %v1098 = vadd.f32 0.0, %v1097
        %v1099 = vpop.f32.mrb[0].mxu0
        %v1100 = vadd.f32 0.0, %v1099
        %1101 = vdwg.mxu0
        %1102 = vmatprep.subr.mxu0 %v319
        %1103 = vmatpush1.msra.mxu0 %v317
        %1104 = vmatprep.subr.mxu0 0.0
        %1105 = vmatpush1.msra.mxu0 0.0
        %1106 = vmatprep.subr.mxu0 0.0
        %1107 = vmatpush1.msra.mxu0 0.0
        %1108 = vmatprep.subr.mxu0 0.0
        %1109 = vmatpush1.msra.mxu0 0.0
        %1110 = vmatprep.subr.mxu0 0.0
        %1111 = vmatpush1.msra.mxu0 0.0
        %1112 = vmatprep.subr.mxu0 0.0
        %1113 = vmatpush1.msra.mxu0 0.0
        %1114 = vmatprep.subr.mxu0 0.0
        %1115 = vmatpush1.msra.mxu0 0.0
        %1116 = vmatprep.subr.mxu0 0.0
        %1117 = vmatpush1.msra.mxu0 0.0
        %1118 = vmatprep.subr.mxu0 0.0
        %1119 = vmatpush1.msra.mxu0 0.0
        %1120 = vmatprep.subr.mxu0 0.0
        %1121 = vmatpush1.msra.mxu0 0.0
        %1122 = vmatprep.subr.mxu0 0.0
        %1123 = vmatpush1.msra.mxu0 0.0
        %1124 = vmatprep.subr.mxu0 0.0
        %1125 = vmatpush1.msra.mxu0 0.0
        %1126 = vmatprep.subr.mxu0 0.0
        %1127 = vmatpush1.msra.mxu0 0.0
        %1128 = vmatprep.subr.mxu0 0.0
        %1129 = vmatpush1.msra.mxu0 0.0
        %1130 = vmatprep.subr.mxu0 0.0
        %1131 = vmatpush1.msra.mxu0 0.0
        %1132 = vmatprep.subr.mxu0 0.0
        %1133 = vmatpush1.msra.mxu0 0.0
        %1134 = vmatprep.subr.mxu0 0.0
        %1135 = vmatpush1.msra.mxu0 0.0
        %1136 = vmatprep.subr.mxu0 0.0
        %1137 = vmatpush1.msra.mxu0 0.0
        %1138 = vmatprep.subr.mxu0 0.0
        %1139 = vmatpush1.msra.mxu0 0.0
        %1140 = vmatprep.subr.mxu0 0.0
        %1141 = vmatpush1.msra.mxu0 0.0
        %1142 = vmatprep.subr.mxu0 0.0
        %1143 = vmatpush1.msra.mxu0 0.0
        %1144 = vmatprep.subr.mxu0 0.0
        %1145 = vmatpush1.msra.mxu0 0.0
        %1146 = vmatprep.subr.mxu0 0.0
        %1147 = vmatpush1.msra.mxu0 0.0
        %1148 = vmatprep.subr.mxu0 0.0
        %1149 = vmatpush1.msra.mxu0 0.0
        %1150 = vmatprep.subr.mxu0 0.0
        %1151 = vmatpush1.msra.mxu0 0.0
        %1152 = vmatprep.subr.mxu0 0.0
        %1153 = vmatpush1.msra.mxu0 0.0
        %1154 = vmatprep.subr.mxu0 0.0
        %1155 = vmatpush1.msra.mxu0 0.0
        %1156 = vmatprep.subr.mxu0 0.0
        %1157 = vmatpush1.msra.mxu0 0.0
        %1158 = vmatprep.subr.mxu0 0.0
        %1159 = vmatpush1.msra.mxu0 0.0
        %1160 = vmatprep.subr.mxu0 0.0
        %1161 = vmatpush1.msra.mxu0 0.0
        %1162 = vmatprep.subr.mxu0 0.0
        %1163 = vmatpush1.msra.mxu0 0.0
        %1164 = vmatprep.subr.mxu0 0.0
        %1165 = vmatpush1.msra.mxu0 0.0
        %1166 = vmatprep.mubr.f32.mxu0 0.0
        %1167 = vmatmul.mubr.f32.gmra.mrb[0].mxu0 %v270
        %v1168 = vpop.f32.mrb[0].mxu0
        %v1169 = vadd.f32 0.0, %v1168
        %v1170 = vpop.f32.mrb[0].mxu0
        %v1171 = vadd.f32 0.0, %v1170
        %1172 = vdwg.mxu0
        %v1174 = vcombine.high %v229, %v229
        %v1176 = vsel %vm268, %v228, 0
        %v1178 = vsel %vm272, %v229, 0
        %v1180 = vsel %vm272, %v1174, 0
        %1182 = vmatprep.subr.mxu0 %v1180
        %1183 = vmatpush1.msra.mxu0 %v1178
        %1184 = vmatprep.subr.mxu0 0.0
        %1185 = vmatpush1.msra.mxu0 0.0
        %1186 = vmatprep.subr.mxu0 0.0
        %1187 = vmatpush1.msra.mxu0 0.0
        %1188 = vmatprep.subr.mxu0 0.0
        %1189 = vmatpush1.msra.mxu0 0.0
        %1190 = vmatprep.subr.mxu0 0.0
        %1191 = vmatpush1.msra.mxu0 0.0
        %1192 = vmatprep.subr.mxu0 0.0
        %1193 = vmatpush1.msra.mxu0 0.0
        %1194 = vmatprep.subr.mxu0 0.0
        %1195 = vmatpush1.msra.mxu0 0.0
        %1196 = vmatprep.subr.mxu0 0.0
        %1197 = vmatpush1.msra.mxu0 0.0
        %1198 = vmatprep.subr.mxu0 0.0
        %1199 = vmatpush1.msra.mxu0 0.0
        %1200 = vmatprep.subr.mxu0 0.0
        %1201 = vmatpush1.msra.mxu0 0.0
        %1202 = vmatprep.subr.mxu0 0.0
        %1203 = vmatpush1.msra.mxu0 0.0
        %1204 = vmatprep.subr.mxu0 0.0
        %1205 = vmatpush1.msra.mxu0 0.0
        %1206 = vmatprep.subr.mxu0 0.0
        %1207 = vmatpush1.msra.mxu0 0.0
        %1208 = vmatprep.subr.mxu0 0.0
        %1209 = vmatpush1.msra.mxu0 0.0
        %1210 = vmatprep.subr.mxu0 0.0
        %1211 = vmatpush1.msra.mxu0 0.0
        %1212 = vmatprep.subr.mxu0 0.0
        %1213 = vmatpush1.msra.mxu0 0.0
        %1214 = vmatprep.subr.mxu0 0.0
        %1215 = vmatpush1.msra.mxu0 0.0
        %1216 = vmatprep.subr.mxu0 0.0
        %1217 = vmatpush1.msra.mxu0 0.0
        %1218 = vmatprep.subr.mxu0 0.0
        %1219 = vmatpush1.msra.mxu0 0.0
        %1220 = vmatprep.subr.mxu0 0.0
        %1221 = vmatpush1.msra.mxu0 0.0
        %1222 = vmatprep.subr.mxu0 0.0
        %1223 = vmatpush1.msra.mxu0 0.0
        %1224 = vmatprep.subr.mxu0 0.0
        %1225 = vmatpush1.msra.mxu0 0.0
        %1226 = vmatprep.subr.mxu0 0.0
        %1227 = vmatpush1.msra.mxu0 0.0
        %1228 = vmatprep.subr.mxu0 0.0
        %1229 = vmatpush1.msra.mxu0 0.0
        %1230 = vmatprep.subr.mxu0 0.0
        %1231 = vmatpush1.msra.mxu0 0.0
        %1232 = vmatprep.subr.mxu0 0.0
        %1233 = vmatpush1.msra.mxu0 0.0
        %1234 = vmatprep.subr.mxu0 0.0
        %1235 = vmatpush1.msra.mxu0 0.0
        %1236 = vmatprep.subr.mxu0 0.0
        %1237 = vmatpush1.msra.mxu0 0.0
        %1238 = vmatprep.subr.mxu0 0.0
        %1239 = vmatpush1.msra.mxu0 0.0
        %1240 = vmatprep.subr.mxu0 0.0
        %1241 = vmatpush1.msra.mxu0 0.0
        %1242 = vmatprep.subr.mxu0 0.0
        %1243 = vmatpush1.msra.mxu0 0.0
        %1244 = vmatprep.subr.mxu0 0.0
        %1245 = vmatpush1.msra.mxu0 0.0
        %1246 = vmatprep.mubr.f32.mxu0 0.0
        %1247 = vmatmul.mubr.f32.gmra.mrb[0].mxu0 %v1176
        %v1248 = vpop.f32.mrb[0].mxu0
        %v1249 = vadd.f32 %v388, %v1248
        %v1250 = vpop.f32.mrb[0].mxu0
        %v1251 = vadd.f32 %v390, %v1250
        %1252 = vdwg.mxu0
        %1253 = vmatprep.subr.mxu0 %v275
        %1254 = vmatpush1.msra.mxu0 %v273
        %1255 = vmatprep.subr.mxu0 0.0
        %1256 = vmatpush1.msra.mxu0 0.0
        %1257 = vmatprep.subr.mxu0 0.0
        %1258 = vmatpush1.msra.mxu0 0.0
        %1259 = vmatprep.subr.mxu0 0.0
        %1260 = vmatpush1.msra.mxu0 0.0
        %1261 = vmatprep.subr.mxu0 0.0
        %1262 = vmatpush1.msra.mxu0 0.0
        %1263 = vmatprep.subr.mxu0 0.0
        %1264 = vmatpush1.msra.mxu0 0.0
        %1265 = vmatprep.subr.mxu0 0.0
        %1266 = vmatpush1.msra.mxu0 0.0
        %1267 = vmatprep.subr.mxu0 0.0
        %1268 = vmatpush1.msra.mxu0 0.0
        %1269 = vmatprep.subr.mxu0 0.0
        %1270 = vmatpush1.msra.mxu0 0.0
        %1271 = vmatprep.subr.mxu0 0.0
        %1272 = vmatpush1.msra.mxu0 0.0
        %1273 = vmatprep.subr.mxu0 0.0
        %1274 = vmatpush1.msra.mxu0 0.0
        %1275 = vmatprep.subr.mxu0 0.0
        %1276 = vmatpush1.msra.mxu0 0.0
        %1277 = vmatprep.subr.mxu0 0.0
        %1278 = vmatpush1.msra.mxu0 0.0
        %1279 = vmatprep.subr.mxu0 0.0
        %1280 = vmatpush1.msra.mxu0 0.0
        %1281 = vmatprep.subr.mxu0 0.0
        %1282 = vmatpush1.msra.mxu0 0.0
        %1283 = vmatprep.subr.mxu0 0.0
        %1284 = vmatpush1.msra.mxu0 0.0
        %1285 = vmatprep.subr.mxu0 0.0
        %1286 = vmatpush1.msra.mxu0 0.0
        %1287 = vmatprep.subr.mxu0 0.0
        %1288 = vmatpush1.msra.mxu0 0.0
        %1289 = vmatprep.subr.mxu0 0.0
        %1290 = vmatpush1.msra.mxu0 0.0
        %1291 = vmatprep.subr.mxu0 0.0
        %1292 = vmatpush1.msra.mxu0 0.0
        %1293 = vmatprep.subr.mxu0 0.0
        %1294 = vmatpush1.msra.mxu0 0.0
        %1295 = vmatprep.subr.mxu0 0.0
        %1296 = vmatpush1.msra.mxu0 0.0
        %1297 = vmatprep.subr.mxu0 0.0
        %1298 = vmatpush1.msra.mxu0 0.0
        %1299 = vmatprep.subr.mxu0 0.0
        %1300 = vmatpush1.msra.mxu0 0.0
        %1301 = vmatprep.subr.mxu0 0.0
        %1302 = vmatpush1.msra.mxu0 0.0
        %1303 = vmatprep.subr.mxu0 0.0
        %1304 = vmatpush1.msra.mxu0 0.0
        %1305 = vmatprep.subr.mxu0 0.0
        %1306 = vmatpush1.msra.mxu0 0.0
        %1307 = vmatprep.subr.mxu0 0.0
        %1308 = vmatpush1.msra.mxu0 0.0
        %1309 = vmatprep.subr.mxu0 0.0
        %1310 = vmatpush1.msra.mxu0 0.0
        %1311 = vmatprep.subr.mxu0 0.0
        %1312 = vmatpush1.msra.mxu0 0.0
        %1313 = vmatprep.subr.mxu0 0.0
        %1314 = vmatpush1.msra.mxu0 0.0
        %1315 = vmatprep.subr.mxu0 0.0
        %1316 = vmatpush1.msra.mxu0 0.0
        %1317 = vmatprep.mubr.f32.mxu0 0.0
        %1318 = vmatmul.mubr.f32.gmra.mrb[0].mxu0 %v1176
        %v1319 = vpop.f32.mrb[0].mxu0
        %v1320 = vadd.f32 %v459, %v1319
        %v1321 = vpop.f32.mrb[0].mxu0
        %v1322 = vadd.f32 %v461, %v1321
        %1323 = vdwg.mxu0
        %1324 = vmatprep.subr.mxu0 %v279
        %1325 = vmatpush1.msra.mxu0 %v277
        %1326 = vmatprep.subr.mxu0 0.0
        %1327 = vmatpush1.msra.mxu0 0.0
        %1328 = vmatprep.subr.mxu0 0.0
        %1329 = vmatpush1.msra.mxu0 0.0
        %1330 = vmatprep.subr.mxu0 0.0
        %1331 = vmatpush1.msra.mxu0 0.0
        %1332 = vmatprep.subr.mxu0 0.0
        %1333 = vmatpush1.msra.mxu0 0.0
        %1334 = vmatprep.subr.mxu0 0.0
        %1335 = vmatpush1.msra.mxu0 0.0
        %1336 = vmatprep.subr.mxu0 0.0
        %1337 = vmatpush1.msra.mxu0 0.0
        %1338 = vmatprep.subr.mxu0 0.0
        %1339 = vmatpush1.msra.mxu0 0.0
        %1340 = vmatprep.subr.mxu0 0.0
        %1341 = vmatpush1.msra.mxu0 0.0
        %1342 = vmatprep.subr.mxu0 0.0
        %1343 = vmatpush1.msra.mxu0 0.0
        %1344 = vmatprep.subr.mxu0 0.0
        %1345 = vmatpush1.msra.mxu0 0.0
        %1346 = vmatprep.subr.mxu0 0.0
        %1347 = vmatpush1.msra.mxu0 0.0
        %1348 = vmatprep.subr.mxu0 0.0
        %1349 = vmatpush1.msra.mxu0 0.0
        %1350 = vmatprep.subr.mxu0 0.0
        %1351 = vmatpush1.msra.mxu0 0.0
        %1352 = vmatprep.subr.mxu0 0.0
        %1353 = vmatpush1.msra.mxu0 0.0
        %1354 = vmatprep.subr.mxu0 0.0
        %1355 = vmatpush1.msra.mxu0 0.0
        %1356 = vmatprep.subr.mxu0 0.0
        %1357 = vmatpush1.msra.mxu0 0.0
        %1358 = vmatprep.subr.mxu0 0.0
        %1359 = vmatpush1.msra.mxu0 0.0
        %1360 = vmatprep.subr.mxu0 0.0
        %1361 = vmatpush1.msra.mxu0 0.0
        %1362 = vmatprep.subr.mxu0 0.0
        %1363 = vmatpush1.msra.mxu0 0.0
        %1364 = vmatprep.subr.mxu0 0.0
        %1365 = vmatpush1.msra.mxu0 0.0
        %1366 = vmatprep.subr.mxu0 0.0
        %1367 = vmatpush1.msra.mxu0 0.0
        %1368 = vmatprep.subr.mxu0 0.0
        %1369 = vmatpush1.msra.mxu0 0.0
        %1370 = vmatprep.subr.mxu0 0.0
        %1371 = vmatpush1.msra.mxu0 0.0
        %1372 = vmatprep.subr.mxu0 0.0
        %1373 = vmatpush1.msra.mxu0 0.0
        %1374 = vmatprep.subr.mxu0 0.0
        %1375 = vmatpush1.msra.mxu0 0.0
        %1376 = vmatprep.subr.mxu0 0.0
        %1377 = vmatpush1.msra.mxu0 0.0
        %1378 = vmatprep.subr.mxu0 0.0
        %1379 = vmatpush1.msra.mxu0 0.0
        %1380 = vmatprep.subr.mxu0 0.0
        %1381 = vmatpush1.msra.mxu0 0.0
        %1382 = vmatprep.subr.mxu0 0.0
        %1383 = vmatpush1.msra.mxu0 0.0
        %1384 = vmatprep.subr.mxu0 0.0
        %1385 = vmatpush1.msra.mxu0 0.0
        %1386 = vmatprep.subr.mxu0 0.0
        %1387 = vmatpush1.msra.mxu0 0.0
        %1388 = vmatprep.mubr.f32.mxu0 0.0
        %1389 = vmatmul.mubr.f32.gmra.mrb[0].mxu0 %v1176
        %v1390 = vpop.f32.mrb[0].mxu0
        %v1391 = vadd.f32 %v530, %v1390
        %v1392 = vpop.f32.mrb[0].mxu0
        %v1393 = vadd.f32 %v532, %v1392
        %1394 = vdwg.mxu0
        %1395 = vmatprep.subr.mxu0 %v283
        %1396 = vmatpush1.msra.mxu0 %v281
        %1397 = vmatprep.subr.mxu0 0.0
        %1398 = vmatpush1.msra.mxu0 0.0
        %1399 = vmatprep.subr.mxu0 0.0
        %1400 = vmatpush1.msra.mxu0 0.0
        %1401 = vmatprep.subr.mxu0 0.0
        %1402 = vmatpush1.msra.mxu0 0.0
        %1403 = vmatprep.subr.mxu0 0.0
        %1404 = vmatpush1.msra.mxu0 0.0
        %1405 = vmatprep.subr.mxu0 0.0
        %1406 = vmatpush1.msra.mxu0 0.0
        %1407 = vmatprep.subr.mxu0 0.0
        %1408 = vmatpush1.msra.mxu0 0.0
        %1409 = vmatprep.subr.mxu0 0.0
        %1410 = vmatpush1.msra.mxu0 0.0
        %1411 = vmatprep.subr.mxu0 0.0
        %1412 = vmatpush1.msra.mxu0 0.0
        %1413 = vmatprep.subr.mxu0 0.0
        %1414 = vmatpush1.msra.mxu0 0.0
        %1415 = vmatprep.subr.mxu0 0.0
        %1416 = vmatpush1.msra.mxu0 0.0
        %1417 = vmatprep.subr.mxu0 0.0
        %1418 = vmatpush1.msra.mxu0 0.0
        %1419 = vmatprep.subr.mxu0 0.0
        %1420 = vmatpush1.msra.mxu0 0.0
        %1421 = vmatprep.subr.mxu0 0.0
        %1422 = vmatpush1.msra.mxu0 0.0
        %1423 = vmatprep.subr.mxu0 0.0
        %1424 = vmatpush1.msra.mxu0 0.0
        %1425 = vmatprep.subr.mxu0 0.0
        %1426 = vmatpush1.msra.mxu0 0.0
        %1427 = vmatprep.subr.mxu0 0.0
        %1428 = vmatpush1.msra.mxu0 0.0
        %1429 = vmatprep.subr.mxu0 0.0
        %1430 = vmatpush1.msra.mxu0 0.0
        %1431 = vmatprep.subr.mxu0 0.0
        %1432 = vmatpush1.msra.mxu0 0.0
        %1433 = vmatprep.subr.mxu0 0.0
        %1434 = vmatpush1.msra.mxu0 0.0
        %1435 = vmatprep.subr.mxu0 0.0
        %1436 = vmatpush1.msra.mxu0 0.0
        %1437 = vmatprep.subr.mxu0 0.0
        %1438 = vmatpush1.msra.mxu0 0.0
        %1439 = vmatprep.subr.mxu0 0.0
        %1440 = vmatpush1.msra.mxu0 0.0
        %1441 = vmatprep.subr.mxu0 0.0
        %1442 = vmatpush1.msra.mxu0 0.0
        %1443 = vmatprep.subr.mxu0 0.0
        %1444 = vmatpush1.msra.mxu0 0.0
        %1445 = vmatprep.subr.mxu0 0.0
        %1446 = vmatpush1.msra.mxu0 0.0
        %1447 = vmatprep.subr.mxu0 0.0
        %1448 = vmatpush1.msra.mxu0 0.0
        %1449 = vmatprep.subr.mxu0 0.0
        %1450 = vmatpush1.msra.mxu0 0.0
        %1451 = vmatprep.subr.mxu0 0.0
        %1452 = vmatpush1.msra.mxu0 0.0
        %1453 = vmatprep.subr.mxu0 0.0
        %1454 = vmatpush1.msra.mxu0 0.0
        %1455 = vmatprep.subr.mxu0 0.0
        %1456 = vmatpush1.msra.mxu0 0.0
        %1457 = vmatprep.subr.mxu0 0.0
        %1458 = vmatpush1.msra.mxu0 0.0
        %1459 = vmatprep.mubr.f32.mxu0 0.0
        %1460 = vmatmul.mubr.f32.gmra.mrb[0].mxu0 %v1176
        %v1461 = vpop.f32.mrb[0].mxu0
        %v1462 = vadd.f32 %v601, %v1461
        %v1463 = vpop.f32.mrb[0].mxu0
        %v1464 = vadd.f32 %v603, %v1463
        %1465 = vdwg.mxu0
        %1466 = vmatprep.subr.mxu0 %v287
        %1467 = vmatpush1.msra.mxu0 %v285
        %1468 = vmatprep.subr.mxu0 0.0
        %1469 = vmatpush1.msra.mxu0 0.0
        %1470 = vmatprep.subr.mxu0 0.0
        %1471 = vmatpush1.msra.mxu0 0.0
        %1472 = vmatprep.subr.mxu0 0.0
        %1473 = vmatpush1.msra.mxu0 0.0
        %1474 = vmatprep.subr.mxu0 0.0
        %1475 = vmatpush1.msra.mxu0 0.0
        %1476 = vmatprep.subr.mxu0 0.0
        %1477 = vmatpush1.msra.mxu0 0.0
        %1478 = vmatprep.subr.mxu0 0.0
        %1479 = vmatpush1.msra.mxu0 0.0
        %1480 = vmatprep.subr.mxu0 0.0
        %1481 = vmatpush1.msra.mxu0 0.0
        %1482 = vmatprep.subr.mxu0 0.0
        %1483 = vmatpush1.msra.mxu0 0.0
        %1484 = vmatprep.subr.mxu0 0.0
        %1485 = vmatpush1.msra.mxu0 0.0
        %1486 = vmatprep.subr.mxu0 0.0
        %1487 = vmatpush1.msra.mxu0 0.0
        %1488 = vmatprep.subr.mxu0 0.0
        %1489 = vmatpush1.msra.mxu0 0.0
        %1490 = vmatprep.subr.mxu0 0.0
        %1491 = vmatpush1.msra.mxu0 0.0
        %1492 = vmatprep.subr.mxu0 0.0
        %1493 = vmatpush1.msra.mxu0 0.0
        %1494 = vmatprep.subr.mxu0 0.0
        %1495 = vmatpush1.msra.mxu0 0.0
        %1496 = vmatprep.subr.mxu0 0.0
        %1497 = vmatpush1.msra.mxu0 0.0
        %1498 = vmatprep.subr.mxu0 0.0
        %1499 = vmatpush1.msra.mxu0 0.0
        %1500 = vmatprep.subr.mxu0 0.0
        %1501 = vmatpush1.msra.mxu0 0.0
        %1502 = vmatprep.subr.mxu0 0.0
        %1503 = vmatpush1.msra.mxu0 0.0
        %1504 = vmatprep.subr.mxu0 0.0
        %1505 = vmatpush1.msra.mxu0 0.0
        %1506 = vmatprep.subr.mxu0 0.0
        %1507 = vmatpush1.msra.mxu0 0.0
        %1508 = vmatprep.subr.mxu0 0.0
        %1509 = vmatpush1.msra.mxu0 0.0
        %1510 = vmatprep.subr.mxu0 0.0
        %1511 = vmatpush1.msra.mxu0 0.0
        %1512 = vmatprep.subr.mxu0 0.0
        %1513 = vmatpush1.msra.mxu0 0.0
        %1514 = vmatprep.subr.mxu0 0.0
        %1515 = vmatpush1.msra.mxu0 0.0
        %1516 = vmatprep.subr.mxu0 0.0
        %1517 = vmatpush1.msra.mxu0 0.0
        %1518 = vmatprep.subr.mxu0 0.0
        %1519 = vmatpush1.msra.mxu0 0.0
        %1520 = vmatprep.subr.mxu0 0.0
        %1521 = vmatpush1.msra.mxu0 0.0
        %1522 = vmatprep.subr.mxu0 0.0
        %1523 = vmatpush1.msra.mxu0 0.0
        %1524 = vmatprep.subr.mxu0 0.0
        %1525 = vmatpush1.msra.mxu0 0.0
        %1526 = vmatprep.subr.mxu0 0.0
        %1527 = vmatpush1.msra.mxu0 0.0
        %1528 = vmatprep.subr.mxu0 0.0
        %1529 = vmatpush1.msra.mxu0 0.0
        %1530 = vmatprep.mubr.f32.mxu0 0.0
        %1531 = vmatmul.mubr.f32.gmra.mrb[0].mxu0 %v1176
        %v1532 = vpop.f32.mrb[0].mxu0
        %v1533 = vadd.f32 %v672, %v1532
        %v1534 = vpop.f32.mrb[0].mxu0
        %v1535 = vadd.f32 %v674, %v1534
        %1536 = vdwg.mxu0
        %1537 = vmatprep.subr.mxu0 %v291
        %1538 = vmatpush1.msra.mxu0 %v289
        %1539 = vmatprep.subr.mxu0 0.0
        %1540 = vmatpush1.msra.mxu0 0.0
        %1541 = vmatprep.subr.mxu0 0.0
        %1542 = vmatpush1.msra.mxu0 0.0
        %1543 = vmatprep.subr.mxu0 0.0
        %1544 = vmatpush1.msra.mxu0 0.0
        %1545 = vmatprep.subr.mxu0 0.0
        %1546 = vmatpush1.msra.mxu0 0.0
        %1547 = vmatprep.subr.mxu0 0.0
        %1548 = vmatpush1.msra.mxu0 0.0
        %1549 = vmatprep.subr.mxu0 0.0
        %1550 = vmatpush1.msra.mxu0 0.0
        %1551 = vmatprep.subr.mxu0 0.0
        %1552 = vmatpush1.msra.mxu0 0.0
        %1553 = vmatprep.subr.mxu0 0.0
        %1554 = vmatpush1.msra.mxu0 0.0
        %1555 = vmatprep.subr.mxu0 0.0
        %1556 = vmatpush1.msra.mxu0 0.0
        %1557 = vmatprep.subr.mxu0 0.0
        %1558 = vmatpush1.msra.mxu0 0.0
        %1559 = vmatprep.subr.mxu0 0.0
        %1560 = vmatpush1.msra.mxu0 0.0
        %1561 = vmatprep.subr.mxu0 0.0
        %1562 = vmatpush1.msra.mxu0 0.0
        %1563 = vmatprep.subr.mxu0 0.0
        %1564 = vmatpush1.msra.mxu0 0.0
        %1565 = vmatprep.subr.mxu0 0.0
        %1566 = vmatpush1.msra.mxu0 0.0
        %1567 = vmatprep.subr.mxu0 0.0
        %1568 = vmatpush1.msra.mxu0 0.0
        %1569 = vmatprep.subr.mxu0 0.0
        %1570 = vmatpush1.msra.mxu0 0.0
        %1571 = vmatprep.subr.mxu0 0.0
        %1572 = vmatpush1.msra.mxu0 0.0
        %1573 = vmatprep.subr.mxu0 0.0
        %1574 = vmatpush1.msra.mxu0 0.0
        %1575 = vmatprep.subr.mxu0 0.0
        %1576 = vmatpush1.msra.mxu0 0.0
        %1577 = vmatprep.subr.mxu0 0.0
        %1578 = vmatpush1.msra.mxu0 0.0
        %1579 = vmatprep.subr.mxu0 0.0
        %1580 = vmatpush1.msra.mxu0 0.0
        %1581 = vmatprep.subr.mxu0 0.0
        %1582 = vmatpush1.msra.mxu0 0.0
        %1583 = vmatprep.subr.mxu0 0.0
        %1584 = vmatpush1.msra.mxu0 0.0
        %1585 = vmatprep.subr.mxu0 0.0
        %1586 = vmatpush1.msra.mxu0 0.0
        %1587 = vmatprep.subr.mxu0 0.0
        %1588 = vmatpush1.msra.mxu0 0.0
        %1589 = vmatprep.subr.mxu0 0.0
        %1590 = vmatpush1.msra.mxu0 0.0
        %1591 = vmatprep.subr.mxu0 0.0
        %1592 = vmatpush1.msra.mxu0 0.0
        %1593 = vmatprep.subr.mxu0 0.0
        %1594 = vmatpush1.msra.mxu0 0.0
        %1595 = vmatprep.subr.mxu0 0.0
        %1596 = vmatpush1.msra.mxu0 0.0
        %1597 = vmatprep.subr.mxu0 0.0
        %1598 = vmatpush1.msra.mxu0 0.0
        %1599 = vmatprep.subr.mxu0 0.0
        %1600 = vmatpush1.msra.mxu0 0.0
        %1601 = vmatprep.mubr.f32.mxu0 0.0
        %1602 = vmatmul.mubr.f32.gmra.mrb[0].mxu0 %v1176
        %v1603 = vpop.f32.mrb[0].mxu0
        %v1604 = vadd.f32 %v743, %v1603
        %v1605 = vpop.f32.mrb[0].mxu0
        %v1606 = vadd.f32 %v745, %v1605
        %1607 = vdwg.mxu0
        %1608 = vmatprep.subr.mxu0 %v295
        %1609 = vmatpush1.msra.mxu0 %v293
        %1610 = vmatprep.subr.mxu0 0.0
        %1611 = vmatpush1.msra.mxu0 0.0
        %1612 = vmatprep.subr.mxu0 0.0
        %1613 = vmatpush1.msra.mxu0 0.0
        %1614 = vmatprep.subr.mxu0 0.0
        %1615 = vmatpush1.msra.mxu0 0.0
        %1616 = vmatprep.subr.mxu0 0.0
        %1617 = vmatpush1.msra.mxu0 0.0
        %1618 = vmatprep.subr.mxu0 0.0
        %1619 = vmatpush1.msra.mxu0 0.0
        %1620 = vmatprep.subr.mxu0 0.0
        %1621 = vmatpush1.msra.mxu0 0.0
        %1622 = vmatprep.subr.mxu0 0.0
        %1623 = vmatpush1.msra.mxu0 0.0
        %1624 = vmatprep.subr.mxu0 0.0
        %1625 = vmatpush1.msra.mxu0 0.0
        %1626 = vmatprep.subr.mxu0 0.0
        %1627 = vmatpush1.msra.mxu0 0.0
        %1628 = vmatprep.subr.mxu0 0.0
        %1629 = vmatpush1.msra.mxu0 0.0
        %1630 = vmatprep.subr.mxu0 0.0
        %1631 = vmatpush1.msra.mxu0 0.0
        %1632 = vmatprep.subr.mxu0 0.0
        %1633 = vmatpush1.msra.mxu0 0.0
        %1634 = vmatprep.subr.mxu0 0.0
        %1635 = vmatpush1.msra.mxu0 0.0
        %1636 = vmatprep.subr.mxu0 0.0
        %1637 = vmatpush1.msra.mxu0 0.0
        %1638 = vmatprep.subr.mxu0 0.0
        %1639 = vmatpush1.msra.mxu0 0.0
        %1640 = vmatprep.subr.mxu0 0.0
        %1641 = vmatpush1.msra.mxu0 0.0
        %1642 = vmatprep.subr.mxu0 0.0
        %1643 = vmatpush1.msra.mxu0 0.0
        %1644 = vmatprep.subr.mxu0 0.0
        %1645 = vmatpush1.msra.mxu0 0.0
        %1646 = vmatprep.subr.mxu0 0.0
        %1647 = vmatpush1.msra.mxu0 0.0
        %1648 = vmatprep.subr.mxu0 0.0
        %1649 = vmatpush1.msra.mxu0 0.0
        %1650 = vmatprep.subr.mxu0 0.0
        %1651 = vmatpush1.msra.mxu0 0.0
        %1652 = vmatprep.subr.mxu0 0.0
        %1653 = vmatpush1.msra.mxu0 0.0
        %1654 = vmatprep.subr.mxu0 0.0
        %1655 = vmatpush1.msra.mxu0 0.0
        %1656 = vmatprep.subr.mxu0 0.0
        %1657 = vmatpush1.msra.mxu0 0.0
        %1658 = vmatprep.subr.mxu0 0.0
        %1659 = vmatpush1.msra.mxu0 0.0
        %1660 = vmatprep.subr.mxu0 0.0
        %1661 = vmatpush1.msra.mxu0 0.0
        %1662 = vmatprep.subr.mxu0 0.0
        %1663 = vmatpush1.msra.mxu0 0.0
        %1664 = vmatprep.subr.mxu0 0.0
        %1665 = vmatpush1.msra.mxu0 0.0
        %1666 = vmatprep.subr.mxu0 0.0
        %1667 = vmatpush1.msra.mxu0 0.0
        %1668 = vmatprep.subr.mxu0 0.0
        %1669 = vmatpush1.msra.mxu0 0.0
        %1670 = vmatprep.subr.mxu0 0.0
        %1671 = vmatpush1.msra.mxu0 0.0
        %1672 = vmatprep.mubr.f32.mxu0 0.0
        %1673 = vmatmul.mubr.f32.gmra.mrb[0].mxu0 %v1176
        %v1674 = vpop.f32.mrb[0].mxu0
        %v1675 = vadd.f32 %v814, %v1674
        %v1676 = vpop.f32.mrb[0].mxu0
        %v1677 = vadd.f32 %v816, %v1676
        %1678 = vdwg.mxu0
        %1679 = vmatprep.subr.mxu0 %v299
        %1680 = vmatpush1.msra.mxu0 %v297
        %1681 = vmatprep.subr.mxu0 0.0
        %1682 = vmatpush1.msra.mxu0 0.0
        %1683 = vmatprep.subr.mxu0 0.0
        %1684 = vmatpush1.msra.mxu0 0.0
        %1685 = vmatprep.subr.mxu0 0.0
        %1686 = vmatpush1.msra.mxu0 0.0
        %1687 = vmatprep.subr.mxu0 0.0
        %1688 = vmatpush1.msra.mxu0 0.0
        %1689 = vmatprep.subr.mxu0 0.0
        %1690 = vmatpush1.msra.mxu0 0.0
        %1691 = vmatprep.subr.mxu0 0.0
        %1692 = vmatpush1.msra.mxu0 0.0
        %1693 = vmatprep.subr.mxu0 0.0
        %1694 = vmatpush1.msra.mxu0 0.0
        %1695 = vmatprep.subr.mxu0 0.0
        %1696 = vmatpush1.msra.mxu0 0.0
        %1697 = vmatprep.subr.mxu0 0.0
        %1698 = vmatpush1.msra.mxu0 0.0
        %1699 = vmatprep.subr.mxu0 0.0
        %1700 = vmatpush1.msra.mxu0 0.0
        %1701 = vmatprep.subr.mxu0 0.0
        %1702 = vmatpush1.msra.mxu0 0.0
        %1703 = vmatprep.subr.mxu0 0.0
        %1704 = vmatpush1.msra.mxu0 0.0
        %1705 = vmatprep.subr.mxu0 0.0
        %1706 = vmatpush1.msra.mxu0 0.0
        %1707 = vmatprep.subr.mxu0 0.0
        %1708 = vmatpush1.msra.mxu0 0.0
        %1709 = vmatprep.subr.mxu0 0.0
        %1710 = vmatpush1.msra.mxu0 0.0
        %1711 = vmatprep.subr.mxu0 0.0
        %1712 = vmatpush1.msra.mxu0 0.0
        %1713 = vmatprep.subr.mxu0 0.0
        %1714 = vmatpush1.msra.mxu0 0.0
        %1715 = vmatprep.subr.mxu0 0.0
        %1716 = vmatpush1.msra.mxu0 0.0
        %1717 = vmatprep.subr.mxu0 0.0
        %1718 = vmatpush1.msra.mxu0 0.0
        %1719 = vmatprep.subr.mxu0 0.0
        %1720 = vmatpush1.msra.mxu0 0.0
        %1721 = vmatprep.subr.mxu0 0.0
        %1722 = vmatpush1.msra.mxu0 0.0
        %1723 = vmatprep.subr.mxu0 0.0
        %1724 = vmatpush1.msra.mxu0 0.0
        %1725 = vmatprep.subr.mxu0 0.0
        %1726 = vmatpush1.msra.mxu0 0.0
        %1727 = vmatprep.subr.mxu0 0.0
        %1728 = vmatpush1.msra.mxu0 0.0
        %1729 = vmatprep.subr.mxu0 0.0
        %1730 = vmatpush1.msra.mxu0 0.0
        %1731 = vmatprep.subr.mxu0 0.0
        %1732 = vmatpush1.msra.mxu0 0.0
        %1733 = vmatprep.subr.mxu0 0.0
        %1734 = vmatpush1.msra.mxu0 0.0
        %1735 = vmatprep.subr.mxu0 0.0
        %1736 = vmatpush1.msra.mxu0 0.0
        %1737 = vmatprep.subr.mxu0 0.0
        %1738 = vmatpush1.msra.mxu0 0.0
        %1739 = vmatprep.subr.mxu0 0.0
        %1740 = vmatpush1.msra.mxu0 0.0
        %1741 = vmatprep.subr.mxu0 0.0
        %1742 = vmatpush1.msra.mxu0 0.0
        %1743 = vmatprep.mubr.f32.mxu0 0.0
        %1744 = vmatmul.mubr.f32.gmra.mrb[0].mxu0 %v1176
        %v1745 = vpop.f32.mrb[0].mxu0
        %v1746 = vadd.f32 %v885, %v1745
        %v1747 = vpop.f32.mrb[0].mxu0
        %v1748 = vadd.f32 %v887, %v1747
        %1749 = vdwg.mxu0
        %1750 = vmatprep.subr.mxu0 %v303
        %1751 = vmatpush1.msra.mxu0 %v301
        %1752 = vmatprep.subr.mxu0 0.0
        %1753 = vmatpush1.msra.mxu0 0.0
        %1754 = vmatprep.subr.mxu0 0.0
        %1755 = vmatpush1.msra.mxu0 0.0
        %1756 = vmatprep.subr.mxu0 0.0
        %1757 = vmatpush1.msra.mxu0 0.0
        %1758 = vmatprep.subr.mxu0 0.0
        %1759 = vmatpush1.msra.mxu0 0.0
        %1760 = vmatprep.subr.mxu0 0.0
        %1761 = vmatpush1.msra.mxu0 0.0
        %1762 = vmatprep.subr.mxu0 0.0
        %1763 = vmatpush1.msra.mxu0 0.0
        %1764 = vmatprep.subr.mxu0 0.0
        %1765 = vmatpush1.msra.mxu0 0.0
        %1766 = vmatprep.subr.mxu0 0.0
        %1767 = vmatpush1.msra.mxu0 0.0
        %1768 = vmatprep.subr.mxu0 0.0
        %1769 = vmatpush1.msra.mxu0 0.0
        %1770 = vmatprep.subr.mxu0 0.0
        %1771 = vmatpush1.msra.mxu0 0.0
        %1772 = vmatprep.subr.mxu0 0.0
        %1773 = vmatpush1.msra.mxu0 0.0
        %1774 = vmatprep.subr.mxu0 0.0
        %1775 = vmatpush1.msra.mxu0 0.0
        %1776 = vmatprep.subr.mxu0 0.0
        %1777 = vmatpush1.msra.mxu0 0.0
        %1778 = vmatprep.subr.mxu0 0.0
        %1779 = vmatpush1.msra.mxu0 0.0
        %1780 = vmatprep.subr.mxu0 0.0
        %1781 = vmatpush1.msra.mxu0 0.0
        %1782 = vmatprep.subr.mxu0 0.0
        %1783 = vmatpush1.msra.mxu0 0.0
        %1784 = vmatprep.subr.mxu0 0.0
        %1785 = vmatpush1.msra.mxu0 0.0
        %1786 = vmatprep.subr.mxu0 0.0
        %1787 = vmatpush1.msra.mxu0 0.0
        %1788 = vmatprep.subr.mxu0 0.0
        %1789 = vmatpush1.msra.mxu0 0.0
        %1790 = vmatprep.subr.mxu0 0.0
        %1791 = vmatpush1.msra.mxu0 0.0
        %1792 = vmatprep.subr.mxu0 0.0
        %1793 = vmatpush1.msra.mxu0 0.0
        %1794 = vmatprep.subr.mxu0 0.0
        %1795 = vmatpush1.msra.mxu0 0.0
        %1796 = vmatprep.subr.mxu0 0.0
        %1797 = vmatpush1.msra.mxu0 0.0
        %1798 = vmatprep.subr.mxu0 0.0
        %1799 = vmatpush1.msra.mxu0 0.0
        %1800 = vmatprep.subr.mxu0 0.0
        %1801 = vmatpush1.msra.mxu0 0.0
        %1802 = vmatprep.subr.mxu0 0.0
        %1803 = vmatpush1.msra.mxu0 0.0
        %1804 = vmatprep.subr.mxu0 0.0
        %1805 = vmatpush1.msra.mxu0 0.0
        %1806 = vmatprep.subr.mxu0 0.0
        %1807 = vmatpush1.msra.mxu0 0.0
        %1808 = vmatprep.subr.mxu0 0.0
        %1809 = vmatpush1.msra.mxu0 0.0
        %1810 = vmatprep.subr.mxu0 0.0
        %1811 = vmatpush1.msra.mxu0 0.0
        %1812 = vmatprep.subr.mxu0 0.0
        %1813 = vmatpush1.msra.mxu0 0.0
        %1814 = vmatprep.mubr.f32.mxu0 0.0
        %1815 = vmatmul.mubr.f32.gmra.mrb[0].mxu0 %v1176
        %v1816 = vpop.f32.mrb[0].mxu0
        %v1817 = vadd.f32 %v956, %v1816
        %v1818 = vpop.f32.mrb[0].mxu0
        %v1819 = vadd.f32 %v958, %v1818
        %1820 = vdwg.mxu0
        %1821 = vmatprep.subr.mxu0 %v307
        %1822 = vmatpush1.msra.mxu0 %v305
        %1823 = vmatprep.subr.mxu0 0.0
        %1824 = vmatpush1.msra.mxu0 0.0
        %1825 = vmatprep.subr.mxu0 0.0
        %1826 = vmatpush1.msra.mxu0 0.0
        %1827 = vmatprep.subr.mxu0 0.0
        %1828 = vmatpush1.msra.mxu0 0.0
        %1829 = vmatprep.subr.mxu0 0.0
        %1830 = vmatpush1.msra.mxu0 0.0
        %1831 = vmatprep.subr.mxu0 0.0
        %1832 = vmatpush1.msra.mxu0 0.0
        %1833 = vmatprep.subr.mxu0 0.0
        %1834 = vmatpush1.msra.mxu0 0.0
        %1835 = vmatprep.subr.mxu0 0.0
        %1836 = vmatpush1.msra.mxu0 0.0
        %1837 = vmatprep.subr.mxu0 0.0
        %1838 = vmatpush1.msra.mxu0 0.0
        %1839 = vmatprep.subr.mxu0 0.0
        %1840 = vmatpush1.msra.mxu0 0.0
        %1841 = vmatprep.subr.mxu0 0.0
        %1842 = vmatpush1.msra.mxu0 0.0
        %1843 = vmatprep.subr.mxu0 0.0
        %1844 = vmatpush1.msra.mxu0 0.0
        %1845 = vmatprep.subr.mxu0 0.0
        %1846 = vmatpush1.msra.mxu0 0.0
        %1847 = vmatprep.subr.mxu0 0.0
        %1848 = vmatpush1.msra.mxu0 0.0
        %1849 = vmatprep.subr.mxu0 0.0
        %1850 = vmatpush1.msra.mxu0 0.0
        %1851 = vmatprep.subr.mxu0 0.0
        %1852 = vmatpush1.msra.mxu0 0.0
        %1853 = vmatprep.subr.mxu0 0.0
        %1854 = vmatpush1.msra.mxu0 0.0
        %1855 = vmatprep.subr.mxu0 0.0
        %1856 = vmatpush1.msra.mxu0 0.0
        %1857 = vmatprep.subr.mxu0 0.0
        %1858 = vmatpush1.msra.mxu0 0.0
        %1859 = vmatprep.subr.mxu0 0.0
        %1860 = vmatpush1.msra.mxu0 0.0
        %1861 = vmatprep.subr.mxu0 0.0
        %1862 = vmatpush1.msra.mxu0 0.0
        %1863 = vmatprep.subr.mxu0 0.0
        %1864 = vmatpush1.msra.mxu0 0.0
        %1865 = vmatprep.subr.mxu0 0.0
        %1866 = vmatpush1.msra.mxu0 0.0
        %1867 = vmatprep.subr.mxu0 0.0
        %1868 = vmatpush1.msra.mxu0 0.0
        %1869 = vmatprep.subr.mxu0 0.0
        %1870 = vmatpush1.msra.mxu0 0.0
        %1871 = vmatprep.subr.mxu0 0.0
        %1872 = vmatpush1.msra.mxu0 0.0
        %1873 = vmatprep.subr.mxu0 0.0
        %1874 = vmatpush1.msra.mxu0 0.0
        %1875 = vmatprep.subr.mxu0 0.0
        %1876 = vmatpush1.msra.mxu0 0.0
        %1877 = vmatprep.subr.mxu0 0.0
        %1878 = vmatpush1.msra.mxu0 0.0
        %1879 = vmatprep.subr.mxu0 0.0
        %1880 = vmatpush1.msra.mxu0 0.0
        %1881 = vmatprep.subr.mxu0 0.0
        %1882 = vmatpush1.msra.mxu0 0.0
        %1883 = vmatprep.subr.mxu0 0.0
        %1884 = vmatpush1.msra.mxu0 0.0
        %1885 = vmatprep.mubr.f32.mxu0 0.0
        %1886 = vmatmul.mubr.f32.gmra.mrb[0].mxu0 %v1176
        %v1887 = vpop.f32.mrb[0].mxu0
        %v1888 = vadd.f32 %v1027, %v1887
        %v1889 = vpop.f32.mrb[0].mxu0
        %v1890 = vadd.f32 %v1029, %v1889
        %1891 = vdwg.mxu0
        %1892 = vmatprep.subr.mxu0 %v311
        %1893 = vmatpush1.msra.mxu0 %v309
        %1894 = vmatprep.subr.mxu0 0.0
        %1895 = vmatpush1.msra.mxu0 0.0
        %1896 = vmatprep.subr.mxu0 0.0
        %1897 = vmatpush1.msra.mxu0 0.0
        %1898 = vmatprep.subr.mxu0 0.0
        %1899 = vmatpush1.msra.mxu0 0.0
        %1900 = vmatprep.subr.mxu0 0.0
        %1901 = vmatpush1.msra.mxu0 0.0
        %1902 = vmatprep.subr.mxu0 0.0
        %1903 = vmatpush1.msra.mxu0 0.0
        %1904 = vmatprep.subr.mxu0 0.0
        %1905 = vmatpush1.msra.mxu0 0.0
        %1906 = vmatprep.subr.mxu0 0.0
        %1907 = vmatpush1.msra.mxu0 0.0
        %1908 = vmatprep.subr.mxu0 0.0
        %1909 = vmatpush1.msra.mxu0 0.0
        %1910 = vmatprep.subr.mxu0 0.0
        %1911 = vmatpush1.msra.mxu0 0.0
        %1912 = vmatprep.subr.mxu0 0.0
        %1913 = vmatpush1.msra.mxu0 0.0
        %1914 = vmatprep.subr.mxu0 0.0
        %1915 = vmatpush1.msra.mxu0 0.0
        %1916 = vmatprep.subr.mxu0 0.0
        %1917 = vmatpush1.msra.mxu0 0.0
        %1918 = vmatprep.subr.mxu0 0.0
        %1919 = vmatpush1.msra.mxu0 0.0
        %1920 = vmatprep.subr.mxu0 0.0
        %1921 = vmatpush1.msra.mxu0 0.0
        %1922 = vmatprep.subr.mxu0 0.0
        %1923 = vmatpush1.msra.mxu0 0.0
        %1924 = vmatprep.subr.mxu0 0.0
        %1925 = vmatpush1.msra.mxu0 0.0
        %1926 = vmatprep.subr.mxu0 0.0
        %1927 = vmatpush1.msra.mxu0 0.0
        %1928 = vmatprep.subr.mxu0 0.0
        %1929 = vmatpush1.msra.mxu0 0.0
        %1930 = vmatprep.subr.mxu0 0.0
        %1931 = vmatpush1.msra.mxu0 0.0
        %1932 = vmatprep.subr.mxu0 0.0
        %1933 = vmatpush1.msra.mxu0 0.0
        %1934 = vmatprep.subr.mxu0 0.0
        %1935 = vmatpush1.msra.mxu0 0.0
        %1936 = vmatprep.subr.mxu0 0.0
        %1937 = vmatpush1.msra.mxu0 0.0
        %1938 = vmatprep.subr.mxu0 0.0
        %1939 = vmatpush1.msra.mxu0 0.0
        %1940 = vmatprep.subr.mxu0 0.0
        %1941 = vmatpush1.msra.mxu0 0.0
        %1942 = vmatprep.subr.mxu0 0.0
        %1943 = vmatpush1.msra.mxu0 0.0
        %1944 = vmatprep.subr.mxu0 0.0
        %1945 = vmatpush1.msra.mxu0 0.0
        %1946 = vmatprep.subr.mxu0 0.0
        %1947 = vmatpush1.msra.mxu0 0.0
        %1948 = vmatprep.subr.mxu0 0.0
        %1949 = vmatpush1.msra.mxu0 0.0
        %1950 = vmatprep.subr.mxu0 0.0
        %1951 = vmatpush1.msra.mxu0 0.0
        %1952 = vmatprep.subr.mxu0 0.0
        %1953 = vmatpush1.msra.mxu0 0.0
        %1954 = vmatprep.subr.mxu0 0.0
        %1955 = vmatpush1.msra.mxu0 0.0
        %1956 = vmatprep.mubr.f32.mxu0 0.0
        %1957 = vmatmul.mubr.f32.gmra.mrb[0].mxu0 %v1176
        %v1958 = vpop.f32.mrb[0].mxu0
        %v1959 = vadd.f32 %v1098, %v1958
        %v1960 = vpop.f32.mrb[0].mxu0
        %v1961 = vadd.f32 %v1100, %v1960
        %1962 = vdwg.mxu0
        %1963 = vmatprep.subr.mxu0 %v315
        %1964 = vmatpush1.msra.mxu0 %v313
        %1965 = vmatprep.subr.mxu0 0.0
        %1966 = vmatpush1.msra.mxu0 0.0
        %1967 = vmatprep.subr.mxu0 0.0
        %1968 = vmatpush1.msra.mxu0 0.0
        %1969 = vmatprep.subr.mxu0 0.0
        %1970 = vmatpush1.msra.mxu0 0.0
        %1971 = vmatprep.subr.mxu0 0.0
        %1972 = vmatpush1.msra.mxu0 0.0
        %1973 = vmatprep.subr.mxu0 0.0
        %1974 = vmatpush1.msra.mxu0 0.0
        %1975 = vmatprep.subr.mxu0 0.0
        %1976 = vmatpush1.msra.mxu0 0.0
        %1977 = vmatprep.subr.mxu0 0.0
        %1978 = vmatpush1.msra.mxu0 0.0
        %1979 = vmatprep.subr.mxu0 0.0
        %1980 = vmatpush1.msra.mxu0 0.0
        %1981 = vmatprep.subr.mxu0 0.0
        %1982 = vmatpush1.msra.mxu0 0.0
        %1983 = vmatprep.subr.mxu0 0.0
        %1984 = vmatpush1.msra.mxu0 0.0
        %1985 = vmatprep.subr.mxu0 0.0
        %1986 = vmatpush1.msra.mxu0 0.0
        %1987 = vmatprep.subr.mxu0 0.0
        %1988 = vmatpush1.msra.mxu0 0.0
        %1989 = vmatprep.subr.mxu0 0.0
        %1990 = vmatpush1.msra.mxu0 0.0
        %1991 = vmatprep.subr.mxu0 0.0
        %1992 = vmatpush1.msra.mxu0 0.0
        %1993 = vmatprep.subr.mxu0 0.0
        %1994 = vmatpush1.msra.mxu0 0.0
        %1995 = vmatprep.subr.mxu0 0.0
        %1996 = vmatpush1.msra.mxu0 0.0
        %1997 = vmatprep.subr.mxu0 0.0
        %1998 = vmatpush1.msra.mxu0 0.0
        %1999 = vmatprep.subr.mxu0 0.0
        %2000 = vmatpush1.msra.mxu0 0.0
        %2001 = vmatprep.subr.mxu0 0.0
        %2002 = vmatpush1.msra.mxu0 0.0
        %2003 = vmatprep.subr.mxu0 0.0
        %2004 = vmatpush1.msra.mxu0 0.0
        %2005 = vmatprep.subr.mxu0 0.0
        %2006 = vmatpush1.msra.mxu0 0.0
        %2007 = vmatprep.subr.mxu0 0.0
        %2008 = vmatpush1.msra.mxu0 0.0
        %2009 = vmatprep.subr.mxu0 0.0
        %2010 = vmatpush1.msra.mxu0 0.0
        %2011 = vmatprep.subr.mxu0 0.0
        %2012 = vmatpush1.msra.mxu0 0.0
        %2013 = vmatprep.subr.mxu0 0.0
        %2014 = vmatpush1.msra.mxu0 0.0
        %2015 = vmatprep.subr.mxu0 0.0
        %2016 = vmatpush1.msra.mxu0 0.0
        %2017 = vmatprep.subr.mxu0 0.0
        %2018 = vmatpush1.msra.mxu0 0.0
        %2019 = vmatprep.subr.mxu0 0.0
        %2020 = vmatpush1.msra.mxu0 0.0
        %2021 = vmatprep.subr.mxu0 0.0
        %2022 = vmatpush1.msra.mxu0 0.0
        %2023 = vmatprep.subr.mxu0 0.0
        %2024 = vmatpush1.msra.mxu0 0.0
        %2025 = vmatprep.subr.mxu0 0.0
        %2026 = vmatpush1.msra.mxu0 0.0
        %2027 = vmatprep.mubr.f32.mxu0 0.0
        %2028 = vmatmul.mubr.f32.gmra.mrb[0].mxu0 %v1176
        %v2029 = vpop.f32.mrb[0].mxu0
        %v2030 = vadd.f32 %v1169, %v2029
        %v2031 = vpop.f32.mrb[0].mxu0
        %v2032 = vadd.f32 %v1171, %v2031
        %2033 = vdwg.mxu0
        %s2034 = scalar_lea.vmem %s1, 16
        %v2035 = vld [vmem:[%s2034] sm:$0xff]
        %v2036 = vld [vmem:[%s198 + $0x10] sm:$0xff]
        %v2037 = vld [vmem:[%s198 + $0x18] sm:$0xff]
        %v2038 = vld [vmem:[%s198 + $0x20] sm:$0xff]
        %v2039 = vld [vmem:[%s198 + $0x28] sm:$0xff]
        %v2040 = vld [vmem:[%s198 + $0x30] sm:$0xff]
        %v2041 = vld [vmem:[%s198 + $0x38] sm:$0xff]
        %v2042 = vld [vmem:[%s198 + $0x40] sm:$0xff]
        %v2043 = vld [vmem:[%s198 + $0x48] sm:$0xff]
        %v2044 = vld [vmem:[%s198 + $0x50] sm:$0xff]
        %v2045 = vld [vmem:[%s198 + $0x58] sm:$0xff]
        %v2046 = vld [vmem:[%s198 + $0x60] sm:$0xff]
        %v2047 = vld [vmem:[%s198 + $0x68] sm:$0xff]
        %v2060 = vcombine.high %v2036, %v2036
        %v2061 = vcombine.high %v2037, %v2037
        %v2062 = vcombine.high %v2038, %v2038
        %v2063 = vcombine.high %v2039, %v2039
        %v2064 = vcombine.high %v2040, %v2040
        %v2065 = vcombine.high %v2041, %v2041
        %v2066 = vcombine.high %v2042, %v2042
        %v2067 = vcombine.high %v2043, %v2043
        %v2068 = vcombine.high %v2044, %v2044
        %v2069 = vcombine.high %v2045, %v2045
        %v2070 = vcombine.high %v2046, %v2046
        %v2071 = vcombine.high %v2047, %v2047
        %v2073 = vsel %vm268, %v2035, 0
        %v2075 = vsel %vm272, %v2036, 0
        %v2077 = vsel %vm272, %v2060, 0
        %v2079 = vsel %vm272, %v2037, 0
        %v2081 = vsel %vm272, %v2061, 0
        %v2083 = vsel %vm272, %v2038, 0
        %v2085 = vsel %vm272, %v2062, 0
        %v2087 = vsel %vm272, %v2039, 0
        %v2089 = vsel %vm272, %v2063, 0
        %v2091 = vsel %vm272, %v2040, 0
        %v2093 = vsel %vm272, %v2064, 0
        %v2095 = vsel %vm272, %v2041, 0
        %v2097 = vsel %vm272, %v2065, 0
        %v2099 = vsel %vm272, %v2042, 0
        %v2101 = vsel %vm272, %v2066, 0
        %v2103 = vsel %vm272, %v2043, 0
        %v2105 = vsel %vm272, %v2067, 0
        %v2107 = vsel %vm272, %v2044, 0
        %v2109 = vsel %vm272, %v2068, 0
        %v2111 = vsel %vm272, %v2045, 0
        %v2113 = vsel %vm272, %v2069, 0
        %v2115 = vsel %vm272, %v2046, 0
        %v2117 = vsel %vm272, %v2070, 0
        %v2119 = vsel %vm272, %v2047, 0
        %v2121 = vsel %vm272, %v2071, 0
        %2123 = vmatprep.subr.mxu0 %v2077
        %2124 = vmatpush1.msra.mxu0 %v2075
        %2125 = vmatprep.subr.mxu0 0.0
        %2126 = vmatpush1.msra.mxu0 0.0
        %2127 = vmatprep.subr.mxu0 0.0
        %2128 = vmatpush1.msra.mxu0 0.0
        %2129 = vmatprep.subr.mxu0 0.0
        %2130 = vmatpush1.msra.mxu0 0.0
        %2131 = vmatprep.subr.mxu0 0.0
        %2132 = vmatpush1.msra.mxu0 0.0
        %2133 = vmatprep.subr.mxu0 0.0
        %2134 = vmatpush1.msra.mxu0 0.0
        %2135 = vmatprep.subr.mxu0 0.0
        %2136 = vmatpush1.msra.mxu0 0.0
        %2137 = vmatprep.subr.mxu0 0.0
        %2138 = vmatpush1.msra.mxu0 0.0
        %2139 = vmatprep.subr.mxu0 0.0
        %2140 = vmatpush1.msra.mxu0 0.0
        %2141 = vmatprep.subr.mxu0 0.0
        %2142 = vmatpush1.msra.mxu0 0.0
        %2143 = vmatprep.subr.mxu0 0.0
        %2144 = vmatpush1.msra.mxu0 0.0
        %2145 = vmatprep.subr.mxu0 0.0
        %2146 = vmatpush1.msra.mxu0 0.0
        %2147 = vmatprep.subr.mxu0 0.0
        %2148 = vmatpush1.msra.mxu0 0.0
        %2149 = vmatprep.subr.mxu0 0.0
        %2150 = vmatpush1.msra.mxu0 0.0
        %2151 = vmatprep.subr.mxu0 0.0
        %2152 = vmatpush1.msra.mxu0 0.0
        %2153 = vmatprep.subr.mxu0 0.0
        %2154 = vmatpush1.msra.mxu0 0.0
        %2155 = vmatprep.subr.mxu0 0.0
        %2156 = vmatpush1.msra.mxu0 0.0
        %2157 = vmatprep.subr.mxu0 0.0
        %2158 = vmatpush1.msra.mxu0 0.0
        %2159 = vmatprep.subr.mxu0 0.0
        %2160 = vmatpush1.msra.mxu0 0.0
        %2161 = vmatprep.subr.mxu0 0.0
        %2162 = vmatpush1.msra.mxu0 0.0
        %2163 = vmatprep.subr.mxu0 0.0
        %2164 = vmatpush1.msra.mxu0 0.0
        %2165 = vmatprep.subr.mxu0 0.0
        %2166 = vmatpush1.msra.mxu0 0.0
        %2167 = vmatprep.subr.mxu0 0.0
        %2168 = vmatpush1.msra.mxu0 0.0
        %2169 = vmatprep.subr.mxu0 0.0
        %2170 = vmatpush1.msra.mxu0 0.0
        %2171 = vmatprep.subr.mxu0 0.0
        %2172 = vmatpush1.msra.mxu0 0.0
        %2173 = vmatprep.subr.mxu0 0.0
        %2174 = vmatpush1.msra.mxu0 0.0
        %2175 = vmatprep.subr.mxu0 0.0
        %2176 = vmatpush1.msra.mxu0 0.0
        %2177 = vmatprep.subr.mxu0 0.0
        %2178 = vmatpush1.msra.mxu0 0.0
        %2179 = vmatprep.subr.mxu0 0.0
        %2180 = vmatpush1.msra.mxu0 0.0
        %2181 = vmatprep.subr.mxu0 0.0
        %2182 = vmatpush1.msra.mxu0 0.0
        %2183 = vmatprep.subr.mxu0 0.0
        %2184 = vmatpush1.msra.mxu0 0.0
        %2185 = vmatprep.subr.mxu0 0.0
        %2186 = vmatpush1.msra.mxu0 0.0
        %2187 = vmatprep.mubr.f32.mxu0 0.0
        %2188 = vmatmul.mubr.f32.gmra.mrb[0].mxu0 %v2073
        %v2189 = vpop.f32.mrb[0].mxu0
        %v2190 = vadd.f32 0.0, %v2189
        %v2191 = vpop.f32.mrb[0].mxu0
        %v2192 = vadd.f32 0.0, %v2191
        %2193 = vdwg.mxu0
        %2194 = vmatprep.subr.mxu0 %v2081
        %2195 = vmatpush1.msra.mxu0 %v2079
        %2196 = vmatprep.subr.mxu0 0.0
        %2197 = vmatpush1.msra.mxu0 0.0
        %2198 = vmatprep.subr.mxu0 0.0
        %2199 = vmatpush1.msra.mxu0 0.0
        %2200 = vmatprep.subr.mxu0 0.0
        %2201 = vmatpush1.msra.mxu0 0.0
        %2202 = vmatprep.subr.mxu0 0.0
        %2203 = vmatpush1.msra.mxu0 0.0
        %2204 = vmatprep.subr.mxu0 0.0
        %2205 = vmatpush1.msra.mxu0 0.0
        %2206 = vmatprep.subr.mxu0 0.0
        %2207 = vmatpush1.msra.mxu0 0.0
        %2208 = vmatprep.subr.mxu0 0.0
        %2209 = vmatpush1.msra.mxu0 0.0
        %2210 = vmatprep.subr.mxu0 0.0
        %2211 = vmatpush1.msra.mxu0 0.0
        %2212 = vmatprep.subr.mxu0 0.0
        %2213 = vmatpush1.msra.mxu0 0.0
        %2214 = vmatprep.subr.mxu0 0.0
        %2215 = vmatpush1.msra.mxu0 0.0
        %2216 = vmatprep.subr.mxu0 0.0
        %2217 = vmatpush1.msra.mxu0 0.0
        %2218 = vmatprep.subr.mxu0 0.0
        %2219 = vmatpush1.msra.mxu0 0.0
        %2220 = vmatprep.subr.mxu0 0.0
        %2221 = vmatpush1.msra.mxu0 0.0
        %2222 = vmatprep.subr.mxu0 0.0
        %2223 = vmatpush1.msra.mxu0 0.0
        %2224 = vmatprep.subr.mxu0 0.0
        %2225 = vmatpush1.msra.mxu0 0.0
        %2226 = vmatprep.subr.mxu0 0.0
        %2227 = vmatpush1.msra.mxu0 0.0
        %2228 = vmatprep.subr.mxu0 0.0
        %2229 = vmatpush1.msra.mxu0 0.0
        %2230 = vmatprep.subr.mxu0 0.0
        %2231 = vmatpush1.msra.mxu0 0.0
        %2232 = vmatprep.subr.mxu0 0.0
        %2233 = vmatpush1.msra.mxu0 0.0
        %2234 = vmatprep.subr.mxu0 0.0
        %2235 = vmatpush1.msra.mxu0 0.0
        %2236 = vmatprep.subr.mxu0 0.0
        %2237 = vmatpush1.msra.mxu0 0.0
        %2238 = vmatprep.subr.mxu0 0.0
        %2239 = vmatpush1.msra.mxu0 0.0
        %2240 = vmatprep.subr.mxu0 0.0
        %2241 = vmatpush1.msra.mxu0 0.0
        %2242 = vmatprep.subr.mxu0 0.0
        %2243 = vmatpush1.msra.mxu0 0.0
        %2244 = vmatprep.subr.mxu0 0.0
        %2245 = vmatpush1.msra.mxu0 0.0
        %2246 = vmatprep.subr.mxu0 0.0
        %2247 = vmatpush1.msra.mxu0 0.0
        %2248 = vmatprep.subr.mxu0 0.0
        %2249 = vmatpush1.msra.mxu0 0.0
        %2250 = vmatprep.subr.mxu0 0.0
        %2251 = vmatpush1.msra.mxu0 0.0
        %2252 = vmatprep.subr.mxu0 0.0
        %2253 = vmatpush1.msra.mxu0 0.0
        %2254 = vmatprep.subr.mxu0 0.0
        %2255 = vmatpush1.msra.mxu0 0.0
        %2256 = vmatprep.subr.mxu0 0.0
        %2257 = vmatpush1.msra.mxu0 0.0
        %2258 = vmatprep.mubr.f32.mxu0 0.0
        %2259 = vmatmul.mubr.f32.gmra.mrb[0].mxu0 %v2073
        %v2260 = vpop.f32.mrb[0].mxu0
        %v2261 = vadd.f32 0.0, %v2260
        %v2262 = vpop.f32.mrb[0].mxu0
        %v2263 = vadd.f32 0.0, %v2262
        %2264 = vdwg.mxu0
        %2265 = vmatprep.subr.mxu0 %v2085
        %2266 = vmatpush1.msra.mxu0 %v2083
        %2267 = vmatprep.subr.mxu0 0.0
        %2268 = vmatpush1.msra.mxu0 0.0
        %2269 = vmatprep.subr.mxu0 0.0
        %2270 = vmatpush1.msra.mxu0 0.0
        %2271 = vmatprep.subr.mxu0 0.0
        %2272 = vmatpush1.msra.mxu0 0.0
        %2273 = vmatprep.subr.mxu0 0.0
        %2274 = vmatpush1.msra.mxu0 0.0
        %2275 = vmatprep.subr.mxu0 0.0
        %2276 = vmatpush1.msra.mxu0 0.0
        %2277 = vmatprep.subr.mxu0 0.0
        %2278 = vmatpush1.msra.mxu0 0.0
        %2279 = vmatprep.subr.mxu0 0.0
        %2280 = vmatpush1.msra.mxu0 0.0
        %2281 = vmatprep.subr.mxu0 0.0
        %2282 = vmatpush1.msra.mxu0 0.0
        %2283 = vmatprep.subr.mxu0 0.0
        %2284 = vmatpush1.msra.mxu0 0.0
        %2285 = vmatprep.subr.mxu0 0.0
        %2286 = vmatpush1.msra.mxu0 0.0
        %2287 = vmatprep.subr.mxu0 0.0
        %2288 = vmatpush1.msra.mxu0 0.0
        %2289 = vmatprep.subr.mxu0 0.0
        %2290 = vmatpush1.msra.mxu0 0.0
        %2291 = vmatprep.subr.mxu0 0.0
        %2292 = vmatpush1.msra.mxu0 0.0
        %2293 = vmatprep.subr.mxu0 0.0
        %2294 = vmatpush1.msra.mxu0 0.0
        %2295 = vmatprep.subr.mxu0 0.0
        %2296 = vmatpush1.msra.mxu0 0.0
        %2297 = vmatprep.subr.mxu0 0.0
        %2298 = vmatpush1.msra.mxu0 0.0
        %2299 = vmatprep.subr.mxu0 0.0
        %2300 = vmatpush1.msra.mxu0 0.0
        %2301 = vmatprep.subr.mxu0 0.0
        %2302 = vmatpush1.msra.mxu0 0.0
        %2303 = vmatprep.subr.mxu0 0.0
        %2304 = vmatpush1.msra.mxu0 0.0
        %2305 = vmatprep.subr.mxu0 0.0
        %2306 = vmatpush1.msra.mxu0 0.0
        %2307 = vmatprep.subr.mxu0 0.0
        %2308 = vmatpush1.msra.mxu0 0.0
        %2309 = vmatprep.subr.mxu0 0.0
        %2310 = vmatpush1.msra.mxu0 0.0
        %2311 = vmatprep.subr.mxu0 0.0
        %2312 = vmatpush1.msra.mxu0 0.0
        %2313 = vmatprep.subr.mxu0 0.0
        %2314 = vmatpush1.msra.mxu0 0.0
        %2315 = vmatprep.subr.mxu0 0.0
        %2316 = vmatpush1.msra.mxu0 0.0
        %2317 = vmatprep.subr.mxu0 0.0
        %2318 = vmatpush1.msra.mxu0 0.0
        %2319 = vmatprep.subr.mxu0 0.0
        %2320 = vmatpush1.msra.mxu0 0.0
        %2321 = vmatprep.subr.mxu0 0.0
        %2322 = vmatpush1.msra.mxu0 0.0
        %2323 = vmatprep.subr.mxu0 0.0
        %2324 = vmatpush1.msra.mxu0 0.0
        %2325 = vmatprep.subr.mxu0 0.0
        %2326 = vmatpush1.msra.mxu0 0.0
        %2327 = vmatprep.subr.mxu0 0.0
        %2328 = vmatpush1.msra.mxu0 0.0
        %2329 = vmatprep.mubr.f32.mxu0 0.0
        %2330 = vmatmul.mubr.f32.gmra.mrb[0].mxu0 %v2073
        %v2331 = vpop.f32.mrb[0].mxu0
        %v2332 = vadd.f32 0.0, %v2331
        %v2333 = vpop.f32.mrb[0].mxu0
        %v2334 = vadd.f32 0.0, %v2333
        %2335 = vdwg.mxu0
        %2336 = vmatprep.subr.mxu0 %v2089
        %2337 = vmatpush1.msra.mxu0 %v2087
        %2338 = vmatprep.subr.mxu0 0.0
        %2339 = vmatpush1.msra.mxu0 0.0
        %2340 = vmatprep.subr.mxu0 0.0
        %2341 = vmatpush1.msra.mxu0 0.0
        %2342 = vmatprep.subr.mxu0 0.0
        %2343 = vmatpush1.msra.mxu0 0.0
        %2344 = vmatprep.subr.mxu0 0.0
        %2345 = vmatpush1.msra.mxu0 0.0
        %2346 = vmatprep.subr.mxu0 0.0
        %2347 = vmatpush1.msra.mxu0 0.0
        %2348 = vmatprep.subr.mxu0 0.0
        %2349 = vmatpush1.msra.mxu0 0.0
        %2350 = vmatprep.subr.mxu0 0.0
        %2351 = vmatpush1.msra.mxu0 0.0
        %2352 = vmatprep.subr.mxu0 0.0
        %2353 = vmatpush1.msra.mxu0 0.0
        %2354 = vmatprep.subr.mxu0 0.0
        %2355 = vmatpush1.msra.mxu0 0.0
        %2356 = vmatprep.subr.mxu0 0.0
        %2357 = vmatpush1.msra.mxu0 0.0
        %2358 = vmatprep.subr.mxu0 0.0
        %2359 = vmatpush1.msra.mxu0 0.0
        %2360 = vmatprep.subr.mxu0 0.0
        %2361 = vmatpush1.msra.mxu0 0.0
        %2362 = vmatprep.subr.mxu0 0.0
        %2363 = vmatpush1.msra.mxu0 0.0
        %2364 = vmatprep.subr.mxu0 0.0
        %2365 = vmatpush1.msra.mxu0 0.0
        %2366 = vmatprep.subr.mxu0 0.0
        %2367 = vmatpush1.msra.mxu0 0.0
        %2368 = vmatprep.subr.mxu0 0.0
        %2369 = vmatpush1.msra.mxu0 0.0
        %2370 = vmatprep.subr.mxu0 0.0
        %2371 = vmatpush1.msra.mxu0 0.0
        %2372 = vmatprep.subr.mxu0 0.0
        %2373 = vmatpush1.msra.mxu0 0.0
        %2374 = vmatprep.subr.mxu0 0.0
        %2375 = vmatpush1.msra.mxu0 0.0
        %2376 = vmatprep.subr.mxu0 0.0
        %2377 = vmatpush1.msra.mxu0 0.0
        %2378 = vmatprep.subr.mxu0 0.0
        %2379 = vmatpush1.msra.mxu0 0.0
        %2380 = vmatprep.subr.mxu0 0.0
        %2381 = vmatpush1.msra.mxu0 0.0
        %2382 = vmatprep.subr.mxu0 0.0
        %2383 = vmatpush1.msra.mxu0 0.0
        %2384 = vmatprep.subr.mxu0 0.0
        %2385 = vmatpush1.msra.mxu0 0.0
        %2386 = vmatprep.subr.mxu0 0.0
        %2387 = vmatpush1.msra.mxu0 0.0
        %2388 = vmatprep.subr.mxu0 0.0
        %2389 = vmatpush1.msra.mxu0 0.0
        %2390 = vmatprep.subr.mxu0 0.0
        %2391 = vmatpush1.msra.mxu0 0.0
        %2392 = vmatprep.subr.mxu0 0.0
        %2393 = vmatpush1.msra.mxu0 0.0
        %2394 = vmatprep.subr.mxu0 0.0
        %2395 = vmatpush1.msra.mxu0 0.0
        %2396 = vmatprep.subr.mxu0 0.0
        %2397 = vmatpush1.msra.mxu0 0.0
        %2398 = vmatprep.subr.mxu0 0.0
        %2399 = vmatpush1.msra.mxu0 0.0
        %2400 = vmatprep.mubr.f32.mxu0 0.0
        %2401 = vmatmul.mubr.f32.gmra.mrb[0].mxu0 %v2073
        %v2402 = vpop.f32.mrb[0].mxu0
        %v2403 = vadd.f32 0.0, %v2402
        %v2404 = vpop.f32.mrb[0].mxu0
        %v2405 = vadd.f32 0.0, %v2404
        %2406 = vdwg.mxu0
        %2407 = vmatprep.subr.mxu0 %v2093
        %2408 = vmatpush1.msra.mxu0 %v2091
        %2409 = vmatprep.subr.mxu0 0.0
        %2410 = vmatpush1.msra.mxu0 0.0
        %2411 = vmatprep.subr.mxu0 0.0
        %2412 = vmatpush1.msra.mxu0 0.0
        %2413 = vmatprep.subr.mxu0 0.0
        %2414 = vmatpush1.msra.mxu0 0.0
        %2415 = vmatprep.subr.mxu0 0.0
        %2416 = vmatpush1.msra.mxu0 0.0
        %2417 = vmatprep.subr.mxu0 0.0
        %2418 = vmatpush1.msra.mxu0 0.0
        %2419 = vmatprep.subr.mxu0 0.0
        %2420 = vmatpush1.msra.mxu0 0.0
        %2421 = vmatprep.subr.mxu0 0.0
        %2422 = vmatpush1.msra.mxu0 0.0
        %2423 = vmatprep.subr.mxu0 0.0
        %2424 = vmatpush1.msra.mxu0 0.0
        %2425 = vmatprep.subr.mxu0 0.0
        %2426 = vmatpush1.msra.mxu0 0.0
        %2427 = vmatprep.subr.mxu0 0.0
        %2428 = vmatpush1.msra.mxu0 0.0
        %2429 = vmatprep.subr.mxu0 0.0
        %2430 = vmatpush1.msra.mxu0 0.0
        %2431 = vmatprep.subr.mxu0 0.0
        %2432 = vmatpush1.msra.mxu0 0.0
        %2433 = vmatprep.subr.mxu0 0.0
        %2434 = vmatpush1.msra.mxu0 0.0
        %2435 = vmatprep.subr.mxu0 0.0
        %2436 = vmatpush1.msra.mxu0 0.0
        %2437 = vmatprep.subr.mxu0 0.0
        %2438 = vmatpush1.msra.mxu0 0.0
        %2439 = vmatprep.subr.mxu0 0.0
        %2440 = vmatpush1.msra.mxu0 0.0
        %2441 = vmatprep.subr.mxu0 0.0
        %2442 = vmatpush1.msra.mxu0 0.0
        %2443 = vmatprep.subr.mxu0 0.0
        %2444 = vmatpush1.msra.mxu0 0.0
        %2445 = vmatprep.subr.mxu0 0.0
        %2446 = vmatpush1.msra.mxu0 0.0
        %2447 = vmatprep.subr.mxu0 0.0
        %2448 = vmatpush1.msra.mxu0 0.0
        %2449 = vmatprep.subr.mxu0 0.0
        %2450 = vmatpush1.msra.mxu0 0.0
        %2451 = vmatprep.subr.mxu0 0.0
        %2452 = vmatpush1.msra.mxu0 0.0
        %2453 = vmatprep.subr.mxu0 0.0
        %2454 = vmatpush1.msra.mxu0 0.0
        %2455 = vmatprep.subr.mxu0 0.0
        %2456 = vmatpush1.msra.mxu0 0.0
        %2457 = vmatprep.subr.mxu0 0.0
        %2458 = vmatpush1.msra.mxu0 0.0
        %2459 = vmatprep.subr.mxu0 0.0
        %2460 = vmatpush1.msra.mxu0 0.0
        %2461 = vmatprep.subr.mxu0 0.0
        %2462 = vmatpush1.msra.mxu0 0.0
        %2463 = vmatprep.subr.mxu0 0.0
        %2464 = vmatpush1.msra.mxu0 0.0
        %2465 = vmatprep.subr.mxu0 0.0
        %2466 = vmatpush1.msra.mxu0 0.0
        %2467 = vmatprep.subr.mxu0 0.0
        %2468 = vmatpush1.msra.mxu0 0.0
        %2469 = vmatprep.subr.mxu0 0.0
        %2470 = vmatpush1.msra.mxu0 0.0
        %2471 = vmatprep.mubr.f32.mxu0 0.0
        %2472 = vmatmul.mubr.f32.gmra.mrb[0].mxu0 %v2073
        %v2473 = vpop.f32.mrb[0].mxu0
        %v2474 = vadd.f32 0.0, %v2473
        %v2475 = vpop.f32.mrb[0].mxu0
        %v2476 = vadd.f32 0.0, %v2475
        %2477 = vdwg.mxu0
        %2478 = vmatprep.subr.mxu0 %v2097
        %2479 = vmatpush1.msra.mxu0 %v2095
        %2480 = vmatprep.subr.mxu0 0.0
        %2481 = vmatpush1.msra.mxu0 0.0
        %2482 = vmatprep.subr.mxu0 0.0
        %2483 = vmatpush1.msra.mxu0 0.0
        %2484 = vmatprep.subr.mxu0 0.0
        %2485 = vmatpush1.msra.mxu0 0.0
        %2486 = vmatprep.subr.mxu0 0.0
        %2487 = vmatpush1.msra.mxu0 0.0
        %2488 = vmatprep.subr.mxu0 0.0
        %2489 = vmatpush1.msra.mxu0 0.0
        %2490 = vmatprep.subr.mxu0 0.0
        %2491 = vmatpush1.msra.mxu0 0.0
        %2492 = vmatprep.subr.mxu0 0.0
        %2493 = vmatpush1.msra.mxu0 0.0
        %2494 = vmatprep.subr.mxu0 0.0
        %2495 = vmatpush1.msra.mxu0 0.0
        %2496 = vmatprep.subr.mxu0 0.0
        %2497 = vmatpush1.msra.mxu0 0.0
        %2498 = vmatprep.subr.mxu0 0.0
        %2499 = vmatpush1.msra.mxu0 0.0
        %2500 = vmatprep.subr.mxu0 0.0
        %2501 = vmatpush1.msra.mxu0 0.0
        %2502 = vmatprep.subr.mxu0 0.0
        %2503 = vmatpush1.msra.mxu0 0.0
        %2504 = vmatprep.subr.mxu0 0.0
        %2505 = vmatpush1.msra.mxu0 0.0
        %2506 = vmatprep.subr.mxu0 0.0
        %2507 = vmatpush1.msra.mxu0 0.0
        %2508 = vmatprep.subr.mxu0 0.0
        %2509 = vmatpush1.msra.mxu0 0.0
        %2510 = vmatprep.subr.mxu0 0.0
        %2511 = vmatpush1.msra.mxu0 0.0
        %2512 = vmatprep.subr.mxu0 0.0
        %2513 = vmatpush1.msra.mxu0 0.0
        %2514 = vmatprep.subr.mxu0 0.0
        %2515 = vmatpush1.msra.mxu0 0.0
        %2516 = vmatprep.subr.mxu0 0.0
        %2517 = vmatpush1.msra.mxu0 0.0
        %2518 = vmatprep.subr.mxu0 0.0
        %2519 = vmatpush1.msra.mxu0 0.0
        %2520 = vmatprep.subr.mxu0 0.0
        %2521 = vmatpush1.msra.mxu0 0.0
        %2522 = vmatprep.subr.mxu0 0.0
        %2523 = vmatpush1.msra.mxu0 0.0
        %2524 = vmatprep.subr.mxu0 0.0
        %2525 = vmatpush1.msra.mxu0 0.0
        %2526 = vmatprep.subr.mxu0 0.0
        %2527 = vmatpush1.msra.mxu0 0.0
        %2528 = vmatprep.subr.mxu0 0.0
        %2529 = vmatpush1.msra.mxu0 0.0
        %2530 = vmatprep.subr.mxu0 0.0
        %2531 = vmatpush1.msra.mxu0 0.0
        %2532 = vmatprep.subr.mxu0 0.0
        %2533 = vmatpush1.msra.mxu0 0.0
        %2534 = vmatprep.subr.mxu0 0.0
        %2535 = vmatpush1.msra.mxu0 0.0
        %2536 = vmatprep.subr.mxu0 0.0
        %2537 = vmatpush1.msra.mxu0 0.0
        %2538 = vmatprep.subr.mxu0 0.0
        %2539 = vmatpush1.msra.mxu0 0.0
        %2540 = vmatprep.subr.mxu0 0.0
        %2541 = vmatpush1.msra.mxu0 0.0
        %2542 = vmatprep.mubr.f32.mxu0 0.0
        %2543 = vmatmul.mubr.f32.gmra.mrb[0].mxu0 %v2073
        %v2544 = vpop.f32.mrb[0].mxu0
        %v2545 = vadd.f32 0.0, %v2544
        %v2546 = vpop.f32.mrb[0].mxu0
        %v2547 = vadd.f32 0.0, %v2546
        %2548 = vdwg.mxu0
        %2549 = vmatprep.subr.mxu0 %v2101
        %2550 = vmatpush1.msra.mxu0 %v2099
        %2551 = vmatprep.subr.mxu0 0.0
        %2552 = vmatpush1.msra.mxu0 0.0
        %2553 = vmatprep.subr.mxu0 0.0
        %2554 = vmatpush1.msra.mxu0 0.0
        %2555 = vmatprep.subr.mxu0 0.0
        %2556 = vmatpush1.msra.mxu0 0.0
        %2557 = vmatprep.subr.mxu0 0.0
        %2558 = vmatpush1.msra.mxu0 0.0
        %2559 = vmatprep.subr.mxu0 0.0
        %2560 = vmatpush1.msra.mxu0 0.0
        %2561 = vmatprep.subr.mxu0 0.0
        %2562 = vmatpush1.msra.mxu0 0.0
        %2563 = vmatprep.subr.mxu0 0.0
        %2564 = vmatpush1.msra.mxu0 0.0
        %2565 = vmatprep.subr.mxu0 0.0
        %2566 = vmatpush1.msra.mxu0 0.0
        %2567 = vmatprep.subr.mxu0 0.0
        %2568 = vmatpush1.msra.mxu0 0.0
        %2569 = vmatprep.subr.mxu0 0.0
        %2570 = vmatpush1.msra.mxu0 0.0
        %2571 = vmatprep.subr.mxu0 0.0
        %2572 = vmatpush1.msra.mxu0 0.0
        %2573 = vmatprep.subr.mxu0 0.0
        %2574 = vmatpush1.msra.mxu0 0.0
        %2575 = vmatprep.subr.mxu0 0.0
        %2576 = vmatpush1.msra.mxu0 0.0
        %2577 = vmatprep.subr.mxu0 0.0
        %2578 = vmatpush1.msra.mxu0 0.0
        %2579 = vmatprep.subr.mxu0 0.0
        %2580 = vmatpush1.msra.mxu0 0.0
        %2581 = vmatprep.subr.mxu0 0.0
        %2582 = vmatpush1.msra.mxu0 0.0
        %2583 = vmatprep.subr.mxu0 0.0
        %2584 = vmatpush1.msra.mxu0 0.0
        %2585 = vmatprep.subr.mxu0 0.0
        %2586 = vmatpush1.msra.mxu0 0.0
        %2587 = vmatprep.subr.mxu0 0.0
        %2588 = vmatpush1.msra.mxu0 0.0
        %2589 = vmatprep.subr.mxu0 0.0
        %2590 = vmatpush1.msra.mxu0 0.0
        %2591 = vmatprep.subr.mxu0 0.0
        %2592 = vmatpush1.msra.mxu0 0.0
        %2593 = vmatprep.subr.mxu0 0.0
        %2594 = vmatpush1.msra.mxu0 0.0
        %2595 = vmatprep.subr.mxu0 0.0
        %2596 = vmatpush1.msra.mxu0 0.0
        %2597 = vmatprep.subr.mxu0 0.0
        %2598 = vmatpush1.msra.mxu0 0.0
        %2599 = vmatprep.subr.mxu0 0.0
        %2600 = vmatpush1.msra.mxu0 0.0
        %2601 = vmatprep.subr.mxu0 0.0
        %2602 = vmatpush1.msra.mxu0 0.0
        %2603 = vmatprep.subr.mxu0 0.0
        %2604 = vmatpush1.msra.mxu0 0.0
        %2605 = vmatprep.subr.mxu0 0.0
        %2606 = vmatpush1.msra.mxu0 0.0
        %2607 = vmatprep.subr.mxu0 0.0
        %2608 = vmatpush1.msra.mxu0 0.0
        %2609 = vmatprep.subr.mxu0 0.0
        %2610 = vmatpush1.msra.mxu0 0.0
        %2611 = vmatprep.subr.mxu0 0.0
        %2612 = vmatpush1.msra.mxu0 0.0
        %2613 = vmatprep.mubr.f32.mxu0 0.0
        %2614 = vmatmul.mubr.f32.gmra.mrb[0].mxu0 %v2073
        %v2615 = vpop.f32.mrb[0].mxu0
        %v2616 = vadd.f32 0.0, %v2615
        %v2617 = vpop.f32.mrb[0].mxu0
        %v2618 = vadd.f32 0.0, %v2617
        %2619 = vdwg.mxu0
        %2620 = vmatprep.subr.mxu0 %v2105
        %2621 = vmatpush1.msra.mxu0 %v2103
        %2622 = vmatprep.subr.mxu0 0.0
        %2623 = vmatpush1.msra.mxu0 0.0
        %2624 = vmatprep.subr.mxu0 0.0
        %2625 = vmatpush1.msra.mxu0 0.0
        %2626 = vmatprep.subr.mxu0 0.0
        %2627 = vmatpush1.msra.mxu0 0.0
        %2628 = vmatprep.subr.mxu0 0.0
        %2629 = vmatpush1.msra.mxu0 0.0
        %2630 = vmatprep.subr.mxu0 0.0
        %2631 = vmatpush1.msra.mxu0 0.0
        %2632 = vmatprep.subr.mxu0 0.0
        %2633 = vmatpush1.msra.mxu0 0.0
        %2634 = vmatprep.subr.mxu0 0.0
        %2635 = vmatpush1.msra.mxu0 0.0
        %2636 = vmatprep.subr.mxu0 0.0
        %2637 = vmatpush1.msra.mxu0 0.0
        %2638 = vmatprep.subr.mxu0 0.0
        %2639 = vmatpush1.msra.mxu0 0.0
        %2640 = vmatprep.subr.mxu0 0.0
        %2641 = vmatpush1.msra.mxu0 0.0
        %2642 = vmatprep.subr.mxu0 0.0
        %2643 = vmatpush1.msra.mxu0 0.0
        %2644 = vmatprep.subr.mxu0 0.0
        %2645 = vmatpush1.msra.mxu0 0.0
        %2646 = vmatprep.subr.mxu0 0.0
        %2647 = vmatpush1.msra.mxu0 0.0
        %2648 = vmatprep.subr.mxu0 0.0
        %2649 = vmatpush1.msra.mxu0 0.0
        %2650 = vmatprep.subr.mxu0 0.0
        %2651 = vmatpush1.msra.mxu0 0.0
        %2652 = vmatprep.subr.mxu0 0.0
        %2653 = vmatpush1.msra.mxu0 0.0
        %2654 = vmatprep.subr.mxu0 0.0
        %2655 = vmatpush1.msra.mxu0 0.0
        %2656 = vmatprep.subr.mxu0 0.0
        %2657 = vmatpush1.msra.mxu0 0.0
        %2658 = vmatprep.subr.mxu0 0.0
        %2659 = vmatpush1.msra.mxu0 0.0
        %2660 = vmatprep.subr.mxu0 0.0
        %2661 = vmatpush1.msra.mxu0 0.0
        %2662 = vmatprep.subr.mxu0 0.0
        %2663 = vmatpush1.msra.mxu0 0.0
        %2664 = vmatprep.subr.mxu0 0.0
        %2665 = vmatpush1.msra.mxu0 0.0
        %2666 = vmatprep.subr.mxu0 0.0
        %2667 = vmatpush1.msra.mxu0 0.0
        %2668 = vmatprep.subr.mxu0 0.0
        %2669 = vmatpush1.msra.mxu0 0.0
        %2670 = vmatprep.subr.mxu0 0.0
        %2671 = vmatpush1.msra.mxu0 0.0
        %2672 = vmatprep.subr.mxu0 0.0
        %2673 = vmatpush1.msra.mxu0 0.0
        %2674 = vmatprep.subr.mxu0 0.0
        %2675 = vmatpush1.msra.mxu0 0.0
        %2676 = vmatprep.subr.mxu0 0.0
        %2677 = vmatpush1.msra.mxu0 0.0
        %2678 = vmatprep.subr.mxu0 0.0
        %2679 = vmatpush1.msra.mxu0 0.0
        %2680 = vmatprep.subr.mxu0 0.0
        %2681 = vmatpush1.msra.mxu0 0.0
        %2682 = vmatprep.subr.mxu0 0.0
        %2683 = vmatpush1.msra.mxu0 0.0
        %2684 = vmatprep.mubr.f32.mxu0 0.0
        %2685 = vmatmul.mubr.f32.gmra.mrb[0].mxu0 %v2073
        %v2686 = vpop.f32.mrb[0].mxu0
        %v2687 = vadd.f32 0.0, %v2686
        %v2688 = vpop.f32.mrb[0].mxu0
        %v2689 = vadd.f32 0.0, %v2688
        %2690 = vdwg.mxu0
        %2691 = vmatprep.subr.mxu0 %v2109
        %2692 = vmatpush1.msra.mxu0 %v2107
        %2693 = vmatprep.subr.mxu0 0.0
        %2694 = vmatpush1.msra.mxu0 0.0
        %2695 = vmatprep.subr.mxu0 0.0
        %2696 = vmatpush1.msra.mxu0 0.0
        %2697 = vmatprep.subr.mxu0 0.0
        %2698 = vmatpush1.msra.mxu0 0.0
        %2699 = vmatprep.subr.mxu0 0.0
        %2700 = vmatpush1.msra.mxu0 0.0
        %2701 = vmatprep.subr.mxu0 0.0
        %2702 = vmatpush1.msra.mxu0 0.0
        %2703 = vmatprep.subr.mxu0 0.0
        %2704 = vmatpush1.msra.mxu0 0.0
        %2705 = vmatprep.subr.mxu0 0.0
        %2706 = vmatpush1.msra.mxu0 0.0
        %2707 = vmatprep.subr.mxu0 0.0
        %2708 = vmatpush1.msra.mxu0 0.0
        %2709 = vmatprep.subr.mxu0 0.0
        %2710 = vmatpush1.msra.mxu0 0.0
        %2711 = vmatprep.subr.mxu0 0.0
        %2712 = vmatpush1.msra.mxu0 0.0
        %2713 = vmatprep.subr.mxu0 0.0
        %2714 = vmatpush1.msra.mxu0 0.0
        %2715 = vmatprep.subr.mxu0 0.0
        %2716 = vmatpush1.msra.mxu0 0.0
        %2717 = vmatprep.subr.mxu0 0.0
        %2718 = vmatpush1.msra.mxu0 0.0
        %2719 = vmatprep.subr.mxu0 0.0
        %2720 = vmatpush1.msra.mxu0 0.0
        %2721 = vmatprep.subr.mxu0 0.0
        %2722 = vmatpush1.msra.mxu0 0.0
        %2723 = vmatprep.subr.mxu0 0.0
        %2724 = vmatpush1.msra.mxu0 0.0
        %2725 = vmatprep.subr.mxu0 0.0
        %2726 = vmatpush1.msra.mxu0 0.0
        %2727 = vmatprep.subr.mxu0 0.0
        %2728 = vmatpush1.msra.mxu0 0.0
        %2729 = vmatprep.subr.mxu0 0.0
        %2730 = vmatpush1.msra.mxu0 0.0
        %2731 = vmatprep.subr.mxu0 0.0
        %2732 = vmatpush1.msra.mxu0 0.0
        %2733 = vmatprep.subr.mxu0 0.0
        %2734 = vmatpush1.msra.mxu0 0.0
        %2735 = vmatprep.subr.mxu0 0.0
        %2736 = vmatpush1.msra.mxu0 0.0
        %2737 = vmatprep.subr.mxu0 0.0
        %2738 = vmatpush1.msra.mxu0 0.0
        %2739 = vmatprep.subr.mxu0 0.0
        %2740 = vmatpush1.msra.mxu0 0.0
        %2741 = vmatprep.subr.mxu0 0.0
        %2742 = vmatpush1.msra.mxu0 0.0
        %2743 = vmatprep.subr.mxu0 0.0
        %2744 = vmatpush1.msra.mxu0 0.0
        %2745 = vmatprep.subr.mxu0 0.0
        %2746 = vmatpush1.msra.mxu0 0.0
        %2747 = vmatprep.subr.mxu0 0.0
        %2748 = vmatpush1.msra.mxu0 0.0
        %2749 = vmatprep.subr.mxu0 0.0
        %2750 = vmatpush1.msra.mxu0 0.0
        %2751 = vmatprep.subr.mxu0 0.0
        %2752 = vmatpush1.msra.mxu0 0.0
        %2753 = vmatprep.subr.mxu0 0.0
        %2754 = vmatpush1.msra.mxu0 0.0
        %2755 = vmatprep.mubr.f32.mxu0 0.0
        %2756 = vmatmul.mubr.f32.gmra.mrb[0].mxu0 %v2073
        %v2757 = vpop.f32.mrb[0].mxu0
        %v2758 = vadd.f32 0.0, %v2757
        %v2759 = vpop.f32.mrb[0].mxu0
        %v2760 = vadd.f32 0.0, %v2759
        %2761 = vdwg.mxu0
        %2762 = vmatprep.subr.mxu0 %v2113
        %2763 = vmatpush1.msra.mxu0 %v2111
        %2764 = vmatprep.subr.mxu0 0.0
        %2765 = vmatpush1.msra.mxu0 0.0
        %2766 = vmatprep.subr.mxu0 0.0
        %2767 = vmatpush1.msra.mxu0 0.0
        %2768 = vmatprep.subr.mxu0 0.0
        %2769 = vmatpush1.msra.mxu0 0.0
        %2770 = vmatprep.subr.mxu0 0.0
        %2771 = vmatpush1.msra.mxu0 0.0
        %2772 = vmatprep.subr.mxu0 0.0
        %2773 = vmatpush1.msra.mxu0 0.0
        %2774 = vmatprep.subr.mxu0 0.0
        %2775 = vmatpush1.msra.mxu0 0.0
        %2776 = vmatprep.subr.mxu0 0.0
        %2777 = vmatpush1.msra.mxu0 0.0
        %2778 = vmatprep.subr.mxu0 0.0
        %2779 = vmatpush1.msra.mxu0 0.0
        %2780 = vmatprep.subr.mxu0 0.0
        %2781 = vmatpush1.msra.mxu0 0.0
        %2782 = vmatprep.subr.mxu0 0.0
        %2783 = vmatpush1.msra.mxu0 0.0
        %2784 = vmatprep.subr.mxu0 0.0
        %2785 = vmatpush1.msra.mxu0 0.0
        %2786 = vmatprep.subr.mxu0 0.0
        %2787 = vmatpush1.msra.mxu0 0.0
        %2788 = vmatprep.subr.mxu0 0.0
        %2789 = vmatpush1.msra.mxu0 0.0
        %2790 = vmatprep.subr.mxu0 0.0
        %2791 = vmatpush1.msra.mxu0 0.0
        %2792 = vmatprep.subr.mxu0 0.0
        %2793 = vmatpush1.msra.mxu0 0.0
        %2794 = vmatprep.subr.mxu0 0.0
        %2795 = vmatpush1.msra.mxu0 0.0
        %2796 = vmatprep.subr.mxu0 0.0
        %2797 = vmatpush1.msra.mxu0 0.0
        %2798 = vmatprep.subr.mxu0 0.0
        %2799 = vmatpush1.msra.mxu0 0.0
        %2800 = vmatprep.subr.mxu0 0.0
        %2801 = vmatpush1.msra.mxu0 0.0
        %2802 = vmatprep.subr.mxu0 0.0
        %2803 = vmatpush1.msra.mxu0 0.0
        %2804 = vmatprep.subr.mxu0 0.0
        %2805 = vmatpush1.msra.mxu0 0.0
        %2806 = vmatprep.subr.mxu0 0.0
        %2807 = vmatpush1.msra.mxu0 0.0
        %2808 = vmatprep.subr.mxu0 0.0
        %2809 = vmatpush1.msra.mxu0 0.0
        %2810 = vmatprep.subr.mxu0 0.0
        %2811 = vmatpush1.msra.mxu0 0.0
        %2812 = vmatprep.subr.mxu0 0.0
        %2813 = vmatpush1.msra.mxu0 0.0
        %2814 = vmatprep.subr.mxu0 0.0
        %2815 = vmatpush1.msra.mxu0 0.0
        %2816 = vmatprep.subr.mxu0 0.0
        %2817 = vmatpush1.msra.mxu0 0.0
        %2818 = vmatprep.subr.mxu0 0.0
        %2819 = vmatpush1.msra.mxu0 0.0
        %2820 = vmatprep.subr.mxu0 0.0
        %2821 = vmatpush1.msra.mxu0 0.0
        %2822 = vmatprep.subr.mxu0 0.0
        %2823 = vmatpush1.msra.mxu0 0.0
        %2824 = vmatprep.subr.mxu0 0.0
        %2825 = vmatpush1.msra.mxu0 0.0
        %2826 = vmatprep.mubr.f32.mxu0 0.0
        %2827 = vmatmul.mubr.f32.gmra.mrb[0].mxu0 %v2073
        %v2828 = vpop.f32.mrb[0].mxu0
        %v2829 = vadd.f32 0.0, %v2828
        %v2830 = vpop.f32.mrb[0].mxu0
        %v2831 = vadd.f32 0.0, %v2830
        %2832 = vdwg.mxu0
        %2833 = vmatprep.subr.mxu0 %v2117
        %2834 = vmatpush1.msra.mxu0 %v2115
        %2835 = vmatprep.subr.mxu0 0.0
        %2836 = vmatpush1.msra.mxu0 0.0
        %2837 = vmatprep.subr.mxu0 0.0
        %2838 = vmatpush1.msra.mxu0 0.0
        %2839 = vmatprep.subr.mxu0 0.0
        %2840 = vmatpush1.msra.mxu0 0.0
        %2841 = vmatprep.subr.mxu0 0.0
        %2842 = vmatpush1.msra.mxu0 0.0
        %2843 = vmatprep.subr.mxu0 0.0
        %2844 = vmatpush1.msra.mxu0 0.0
        %2845 = vmatprep.subr.mxu0 0.0
        %2846 = vmatpush1.msra.mxu0 0.0
        %2847 = vmatprep.subr.mxu0 0.0
        %2848 = vmatpush1.msra.mxu0 0.0
        %2849 = vmatprep.subr.mxu0 0.0
        %2850 = vmatpush1.msra.mxu0 0.0
        %2851 = vmatprep.subr.mxu0 0.0
        %2852 = vmatpush1.msra.mxu0 0.0
        %2853 = vmatprep.subr.mxu0 0.0
        %2854 = vmatpush1.msra.mxu0 0.0
        %2855 = vmatprep.subr.mxu0 0.0
        %2856 = vmatpush1.msra.mxu0 0.0
        %2857 = vmatprep.subr.mxu0 0.0
        %2858 = vmatpush1.msra.mxu0 0.0
        %2859 = vmatprep.subr.mxu0 0.0
        %2860 = vmatpush1.msra.mxu0 0.0
        %2861 = vmatprep.subr.mxu0 0.0
        %2862 = vmatpush1.msra.mxu0 0.0
        %2863 = vmatprep.subr.mxu0 0.0
        %2864 = vmatpush1.msra.mxu0 0.0
        %2865 = vmatprep.subr.mxu0 0.0
        %2866 = vmatpush1.msra.mxu0 0.0
        %2867 = vmatprep.subr.mxu0 0.0
        %2868 = vmatpush1.msra.mxu0 0.0
        %2869 = vmatprep.subr.mxu0 0.0
        %2870 = vmatpush1.msra.mxu0 0.0
        %2871 = vmatprep.subr.mxu0 0.0
        %2872 = vmatpush1.msra.mxu0 0.0
        %2873 = vmatprep.subr.mxu0 0.0
        %2874 = vmatpush1.msra.mxu0 0.0
        %2875 = vmatprep.subr.mxu0 0.0
        %2876 = vmatpush1.msra.mxu0 0.0
        %2877 = vmatprep.subr.mxu0 0.0
        %2878 = vmatpush1.msra.mxu0 0.0
        %2879 = vmatprep.subr.mxu0 0.0
        %2880 = vmatpush1.msra.mxu0 0.0
        %2881 = vmatprep.subr.mxu0 0.0
        %2882 = vmatpush1.msra.mxu0 0.0
        %2883 = vmatprep.subr.mxu0 0.0
        %2884 = vmatpush1.msra.mxu0 0.0
        %2885 = vmatprep.subr.mxu0 0.0
        %2886 = vmatpush1.msra.mxu0 0.0
        %2887 = vmatprep.subr.mxu0 0.0
        %2888 = vmatpush1.msra.mxu0 0.0
        %2889 = vmatprep.subr.mxu0 0.0
        %2890 = vmatpush1.msra.mxu0 0.0
        %2891 = vmatprep.subr.mxu0 0.0
        %2892 = vmatpush1.msra.mxu0 0.0
        %2893 = vmatprep.subr.mxu0 0.0
        %2894 = vmatpush1.msra.mxu0 0.0
        %2895 = vmatprep.subr.mxu0 0.0
        %2896 = vmatpush1.msra.mxu0 0.0
        %2897 = vmatprep.mubr.f32.mxu0 0.0
        %2898 = vmatmul.mubr.f32.gmra.mrb[0].mxu0 %v2073
        %v2899 = vpop.f32.mrb[0].mxu0
        %v2900 = vadd.f32 0.0, %v2899
        %v2901 = vpop.f32.mrb[0].mxu0
        %v2902 = vadd.f32 0.0, %v2901
        %2903 = vdwg.mxu0
        %2904 = vmatprep.subr.mxu0 %v2121
        %2905 = vmatpush1.msra.mxu0 %v2119
        %2906 = vmatprep.subr.mxu0 0.0
        %2907 = vmatpush1.msra.mxu0 0.0
        %2908 = vmatprep.subr.mxu0 0.0
        %2909 = vmatpush1.msra.mxu0 0.0
        %2910 = vmatprep.subr.mxu0 0.0
        %2911 = vmatpush1.msra.mxu0 0.0
        %2912 = vmatprep.subr.mxu0 0.0
        %2913 = vmatpush1.msra.mxu0 0.0
        %2914 = vmatprep.subr.mxu0 0.0
        %2915 = vmatpush1.msra.mxu0 0.0
        %2916 = vmatprep.subr.mxu0 0.0
        %2917 = vmatpush1.msra.mxu0 0.0
        %2918 = vmatprep.subr.mxu0 0.0
        %2919 = vmatpush1.msra.mxu0 0.0
        %2920 = vmatprep.subr.mxu0 0.0
        %2921 = vmatpush1.msra.mxu0 0.0
        %2922 = vmatprep.subr.mxu0 0.0
        %2923 = vmatpush1.msra.mxu0 0.0
        %2924 = vmatprep.subr.mxu0 0.0
        %2925 = vmatpush1.msra.mxu0 0.0
        %2926 = vmatprep.subr.mxu0 0.0
        %2927 = vmatpush1.msra.mxu0 0.0
        %2928 = vmatprep.subr.mxu0 0.0
        %2929 = vmatpush1.msra.mxu0 0.0
        %2930 = vmatprep.subr.mxu0 0.0
        %2931 = vmatpush1.msra.mxu0 0.0
        %2932 = vmatprep.subr.mxu0 0.0
        %2933 = vmatpush1.msra.mxu0 0.0
        %2934 = vmatprep.subr.mxu0 0.0
        %2935 = vmatpush1.msra.mxu0 0.0
        %2936 = vmatprep.subr.mxu0 0.0
        %2937 = vmatpush1.msra.mxu0 0.0
        %2938 = vmatprep.subr.mxu0 0.0
        %2939 = vmatpush1.msra.mxu0 0.0
        %2940 = vmatprep.subr.mxu0 0.0
        %2941 = vmatpush1.msra.mxu0 0.0
        %2942 = vmatprep.subr.mxu0 0.0
        %2943 = vmatpush1.msra.mxu0 0.0
        %2944 = vmatprep.subr.mxu0 0.0
        %2945 = vmatpush1.msra.mxu0 0.0
        %2946 = vmatprep.subr.mxu0 0.0
        %2947 = vmatpush1.msra.mxu0 0.0
        %2948 = vmatprep.subr.mxu0 0.0
        %2949 = vmatpush1.msra.mxu0 0.0
        %2950 = vmatprep.subr.mxu0 0.0
        %2951 = vmatpush1.msra.mxu0 0.0
        %2952 = vmatprep.subr.mxu0 0.0
        %2953 = vmatpush1.msra.mxu0 0.0
        %2954 = vmatprep.subr.mxu0 0.0
        %2955 = vmatpush1.msra.mxu0 0.0
        %2956 = vmatprep.subr.mxu0 0.0
        %2957 = vmatpush1.msra.mxu0 0.0
        %2958 = vmatprep.subr.mxu0 0.0
        %2959 = vmatpush1.msra.mxu0 0.0
        %2960 = vmatprep.subr.mxu0 0.0
        %2961 = vmatpush1.msra.mxu0 0.0
        %2962 = vmatprep.subr.mxu0 0.0
        %2963 = vmatpush1.msra.mxu0 0.0
        %2964 = vmatprep.subr.mxu0 0.0
        %2965 = vmatpush1.msra.mxu0 0.0
        %2966 = vmatprep.subr.mxu0 0.0
        %2967 = vmatpush1.msra.mxu0 0.0
        %2968 = vmatprep.mubr.f32.mxu0 0.0
        %2969 = vmatmul.mubr.f32.gmra.mrb[0].mxu0 %v2073
        %v2970 = vpop.f32.mrb[0].mxu0
        %v2971 = vadd.f32 0.0, %v2970
        %v2972 = vpop.f32.mrb[0].mxu0
        %v2973 = vadd.f32 0.0, %v2972
        %2974 = vdwg.mxu0
        %v2975 = vadd.f32 %v1249, %v2190
        %v2976 = vadd.f32 %v1251, %v2192
        %v2977 = vadd.f32 %v1320, %v2261
        %v2978 = vadd.f32 %v1322, %v2263
        %v2979 = vadd.f32 %v1391, %v2332
        %v2980 = vadd.f32 %v1393, %v2334
        %v2981 = vadd.f32 %v1462, %v2403
        %v2982 = vadd.f32 %v1464, %v2405
        %v2983 = vadd.f32 %v1533, %v2474
        %v2984 = vadd.f32 %v1535, %v2476
        %v2985 = vadd.f32 %v1604, %v2545
        %v2986 = vadd.f32 %v1606, %v2547
        %v2987 = vadd.f32 %v1675, %v2616
        %v2988 = vadd.f32 %v1677, %v2618
        %v2989 = vadd.f32 %v1746, %v2687
        %v2990 = vadd.f32 %v1748, %v2689
        %v2991 = vadd.f32 %v1817, %v2758
        %v2992 = vadd.f32 %v1819, %v2760
        %v2993 = vadd.f32 %v1888, %v2829
        %v2994 = vadd.f32 %v1890, %v2831
        %v2995 = vadd.f32 %v1959, %v2900
        %v2996 = vadd.f32 %v1961, %v2902
        %v2997 = vadd.f32 %v2030, %v2971
        %v2998 = vadd.f32 %v2032, %v2973
        %s2999 = scalar_lea.vmem %s1, 24
        %v3000 = vld [vmem:[%s2999] sm:$0xff]
        %v3001 = vld [vmem:[%s198 + $0x18] sm:$0xff]
        %v3002 = vld [vmem:[%s198 + $0x20] sm:$0xff]
        %v3003 = vld [vmem:[%s198 + $0x28] sm:$0xff]
        %v3004 = vld [vmem:[%s198 + $0x30] sm:$0xff]
        %v3005 = vld [vmem:[%s198 + $0x38] sm:$0xff]
        %v3006 = vld [vmem:[%s198 + $0x40] sm:$0xff]
        %v3007 = vld [vmem:[%s198 + $0x48] sm:$0xff]
        %v3008 = vld [vmem:[%s198 + $0x50] sm:$0xff]
        %v3009 = vld [vmem:[%s198 + $0x58] sm:$0xff]
        %v3010 = vld [vmem:[%s198 + $0x60] sm:$0xff]
        %v3011 = vld [vmem:[%s198 + $0x68] sm:$0xff]
        %v3012 = vld [vmem:[%s198 + $0x70] sm:$0xff]
        %v3025 = vcombine.high %v3001, %v3001
        %v3026 = vcombine.high %v3002, %v3002
        %v3027 = vcombine.high %v3003, %v3003
        %v3028 = vcombine.high %v3004, %v3004
        %v3029 = vcombine.high %v3005, %v3005
        %v3030 = vcombine.high %v3006, %v3006
        %v3031 = vcombine.high %v3007, %v3007
        %v3032 = vcombine.high %v3008, %v3008
        %v3033 = vcombine.high %v3009, %v3009
        %v3034 = vcombine.high %v3010, %v3010
        %v3035 = vcombine.high %v3011, %v3011
        %v3036 = vcombine.high %v3012, %v3012
        %v3038 = vsel %vm268, %v3000, 0
        %v3040 = vsel %vm272, %v3001, 0
        %v3042 = vsel %vm272, %v3025, 0
        %v3044 = vsel %vm272, %v3002, 0
        %v3046 = vsel %vm272, %v3026, 0
        %v3048 = vsel %vm272, %v3003, 0
        %v3050 = vsel %vm272, %v3027, 0
        %v3052 = vsel %vm272, %v3004, 0
        %v3054 = vsel %vm272, %v3028, 0
        %v3056 = vsel %vm272, %v3005, 0
        %v3058 = vsel %vm272, %v3029, 0
        %v3060 = vsel %vm272, %v3006, 0
        %v3062 = vsel %vm272, %v3030, 0
        %v3064 = vsel %vm272, %v3007, 0
        %v3066 = vsel %vm272, %v3031, 0
        %v3068 = vsel %vm272, %v3008, 0
        %v3070 = vsel %vm272, %v3032, 0
        %v3072 = vsel %vm272, %v3009, 0
        %v3074 = vsel %vm272, %v3033, 0
        %v3076 = vsel %vm272, %v3010, 0
        %v3078 = vsel %vm272, %v3034, 0
        %v3080 = vsel %vm272, %v3011, 0
        %v3082 = vsel %vm272, %v3035, 0
        %v3084 = vsel %vm272, %v3012, 0
        %v3086 = vsel %vm272, %v3036, 0
        %3088 = vmatprep.subr.mxu0 %v3042
        %3089 = vmatpush1.msra.mxu0 %v3040
        %3090 = vmatprep.subr.mxu0 0.0
        %3091 = vmatpush1.msra.mxu0 0.0
        %3092 = vmatprep.subr.mxu0 0.0
        %3093 = vmatpush1.msra.mxu0 0.0
        %3094 = vmatprep.subr.mxu0 0.0
        %3095 = vmatpush1.msra.mxu0 0.0
        %3096 = vmatprep.subr.mxu0 0.0
        %3097 = vmatpush1.msra.mxu0 0.0
        %3098 = vmatprep.subr.mxu0 0.0
        %3099 = vmatpush1.msra.mxu0 0.0
        %3100 = vmatprep.subr.mxu0 0.0
        %3101 = vmatpush1.msra.mxu0 0.0
        %3102 = vmatprep.subr.mxu0 0.0
        %3103 = vmatpush1.msra.mxu0 0.0
        %3104 = vmatprep.subr.mxu0 0.0
        %3105 = vmatpush1.msra.mxu0 0.0
        %3106 = vmatprep.subr.mxu0 0.0
        %3107 = vmatpush1.msra.mxu0 0.0
        %3108 = vmatprep.subr.mxu0 0.0
        %3109 = vmatpush1.msra.mxu0 0.0
        %3110 = vmatprep.subr.mxu0 0.0
        %3111 = vmatpush1.msra.mxu0 0.0
        %3112 = vmatprep.subr.mxu0 0.0
        %3113 = vmatpush1.msra.mxu0 0.0
        %3114 = vmatprep.subr.mxu0 0.0
        %3115 = vmatpush1.msra.mxu0 0.0
        %3116 = vmatprep.subr.mxu0 0.0
        %3117 = vmatpush1.msra.mxu0 0.0
        %3118 = vmatprep.subr.mxu0 0.0
        %3119 = vmatpush1.msra.mxu0 0.0
        %3120 = vmatprep.subr.mxu0 0.0
        %3121 = vmatpush1.msra.mxu0 0.0
        %3122 = vmatprep.subr.mxu0 0.0
        %3123 = vmatpush1.msra.mxu0 0.0
        %3124 = vmatprep.subr.mxu0 0.0
        %3125 = vmatpush1.msra.mxu0 0.0
        %3126 = vmatprep.subr.mxu0 0.0
        %3127 = vmatpush1.msra.mxu0 0.0
        %3128 = vmatprep.subr.mxu0 0.0
        %3129 = vmatpush1.msra.mxu0 0.0
        %3130 = vmatprep.subr.mxu0 0.0
        %3131 = vmatpush1.msra.mxu0 0.0
        %3132 = vmatprep.subr.mxu0 0.0
        %3133 = vmatpush1.msra.mxu0 0.0
        %3134 = vmatprep.subr.mxu0 0.0
        %3135 = vmatpush1.msra.mxu0 0.0
        %3136 = vmatprep.subr.mxu0 0.0
        %3137 = vmatpush1.msra.mxu0 0.0
        %3138 = vmatprep.subr.mxu0 0.0
        %3139 = vmatpush1.msra.mxu0 0.0
        %3140 = vmatprep.subr.mxu0 0.0
        %3141 = vmatpush1.msra.mxu0 0.0
        %3142 = vmatprep.subr.mxu0 0.0
        %3143 = vmatpush1.msra.mxu0 0.0
        %3144 = vmatprep.subr.mxu0 0.0
        %3145 = vmatpush1.msra.mxu0 0.0
        %3146 = vmatprep.subr.mxu0 0.0
        %3147 = vmatpush1.msra.mxu0 0.0
        %3148 = vmatprep.subr.mxu0 0.0
        %3149 = vmatpush1.msra.mxu0 0.0
        %3150 = vmatprep.subr.mxu0 0.0
        %3151 = vmatpush1.msra.mxu0 0.0
        %3152 = vmatprep.mubr.f32.mxu0 0.0
        %3153 = vmatmul.mubr.f32.gmra.mrb[0].mxu0 %v3038
        %v3154 = vpop.f32.mrb[0].mxu0
        %v3155 = vadd.f32 0.0, %v3154
        %v3156 = vpop.f32.mrb[0].mxu0
        %v3157 = vadd.f32 0.0, %v3156
        %3158 = vdwg.mxu0
        %3159 = vmatprep.subr.mxu0 %v3046
        %3160 = vmatpush1.msra.mxu0 %v3044
        %3161 = vmatprep.subr.mxu0 0.0
        %3162 = vmatpush1.msra.mxu0 0.0
        %3163 = vmatprep.subr.mxu0 0.0
        %3164 = vmatpush1.msra.mxu0 0.0
        %3165 = vmatprep.subr.mxu0 0.0
        %3166 = vmatpush1.msra.mxu0 0.0
        %3167 = vmatprep.subr.mxu0 0.0
        %3168 = vmatpush1.msra.mxu0 0.0
        %3169 = vmatprep.subr.mxu0 0.0
        %3170 = vmatpush1.msra.mxu0 0.0
        %3171 = vmatprep.subr.mxu0 0.0
        %3172 = vmatpush1.msra.mxu0 0.0
        %3173 = vmatprep.subr.mxu0 0.0
        %3174 = vmatpush1.msra.mxu0 0.0
        %3175 = vmatprep.subr.mxu0 0.0
        %3176 = vmatpush1.msra.mxu0 0.0
        %3177 = vmatprep.subr.mxu0 0.0
        %3178 = vmatpush1.msra.mxu0 0.0
        %3179 = vmatprep.subr.mxu0 0.0
        %3180 = vmatpush1.msra.mxu0 0.0
        %3181 = vmatprep.subr.mxu0 0.0
        %3182 = vmatpush1.msra.mxu0 0.0
        %3183 = vmatprep.subr.mxu0 0.0
        %3184 = vmatpush1.msra.mxu0 0.0
        %3185 = vmatprep.subr.mxu0 0.0
        %3186 = vmatpush1.msra.mxu0 0.0
        %3187 = vmatprep.subr.mxu0 0.0
        %3188 = vmatpush1.msra.mxu0 0.0
        %3189 = vmatprep.subr.mxu0 0.0
        %3190 = vmatpush1.msra.mxu0 0.0
        %3191 = vmatprep.subr.mxu0 0.0
        %3192 = vmatpush1.msra.mxu0 0.0
        %3193 = vmatprep.subr.mxu0 0.0
        %3194 = vmatpush1.msra.mxu0 0.0
        %3195 = vmatprep.subr.mxu0 0.0
        %3196 = vmatpush1.msra.mxu0 0.0
        %3197 = vmatprep.subr.mxu0 0.0
        %3198 = vmatpush1.msra.mxu0 0.0
        %3199 = vmatprep.subr.mxu0 0.0
        %3200 = vmatpush1.msra.mxu0 0.0
        %3201 = vmatprep.subr.mxu0 0.0
        %3202 = vmatpush1.msra.mxu0 0.0
        %3203 = vmatprep.subr.mxu0 0.0
        %3204 = vmatpush1.msra.mxu0 0.0
        %3205 = vmatprep.subr.mxu0 0.0
        %3206 = vmatpush1.msra.mxu0 0.0
        %3207 = vmatprep.subr.mxu0 0.0
        %3208 = vmatpush1.msra.mxu0 0.0
        %3209 = vmatprep.subr.mxu0 0.0
        %3210 = vmatpush1.msra.mxu0 0.0
        %3211 = vmatprep.subr.mxu0 0.0
        %3212 = vmatpush1.msra.mxu0 0.0
        %3213 = vmatprep.subr.mxu0 0.0
        %3214 = vmatpush1.msra.mxu0 0.0
        %3215 = vmatprep.subr.mxu0 0.0
        %3216 = vmatpush1.msra.mxu0 0.0
        %3217 = vmatprep.subr.mxu0 0.0
        %3218 = vmatpush1.msra.mxu0 0.0
        %3219 = vmatprep.subr.mxu0 0.0
        %3220 = vmatpush1.msra.mxu0 0.0
        %3221 = vmatprep.subr.mxu0 0.0
        %3222 = vmatpush1.msra.mxu0 0.0
        %3223 = vmatprep.mubr.f32.mxu0 0.0
        %3224 = vmatmul.mubr.f32.gmra.mrb[0].mxu0 %v3038
        %v3225 = vpop.f32.mrb[0].mxu0
        %v3226 = vadd.f32 0.0, %v3225
        %v3227 = vpop.f32.mrb[0].mxu0
        %v3228 = vadd.f32 0.0, %v3227
        %3229 = vdwg.mxu0
        %3230 = vmatprep.subr.mxu0 %v3050
        %3231 = vmatpush1.msra.mxu0 %v3048
        %3232 = vmatprep.subr.mxu0 0.0
        %3233 = vmatpush1.msra.mxu0 0.0
        %3234 = vmatprep.subr.mxu0 0.0
        %3235 = vmatpush1.msra.mxu0 0.0
        %3236 = vmatprep.subr.mxu0 0.0
        %3237 = vmatpush1.msra.mxu0 0.0
        %3238 = vmatprep.subr.mxu0 0.0
        %3239 = vmatpush1.msra.mxu0 0.0
        %3240 = vmatprep.subr.mxu0 0.0
        %3241 = vmatpush1.msra.mxu0 0.0
        %3242 = vmatprep.subr.mxu0 0.0
        %3243 = vmatpush1.msra.mxu0 0.0
        %3244 = vmatprep.subr.mxu0 0.0
        %3245 = vmatpush1.msra.mxu0 0.0
        %3246 = vmatprep.subr.mxu0 0.0
        %3247 = vmatpush1.msra.mxu0 0.0
        %3248 = vmatprep.subr.mxu0 0.0
        %3249 = vmatpush1.msra.mxu0 0.0
        %3250 = vmatprep.subr.mxu0 0.0
        %3251 = vmatpush1.msra.mxu0 0.0
        %3252 = vmatprep.subr.mxu0 0.0
        %3253 = vmatpush1.msra.mxu0 0.0
        %3254 = vmatprep.subr.mxu0 0.0
        %3255 = vmatpush1.msra.mxu0 0.0
        %3256 = vmatprep.subr.mxu0 0.0
        %3257 = vmatpush1.msra.mxu0 0.0
        %3258 = vmatprep.subr.mxu0 0.0
        %3259 = vmatpush1.msra.mxu0 0.0
        %3260 = vmatprep.subr.mxu0 0.0
        %3261 = vmatpush1.msra.mxu0 0.0
        %3262 = vmatprep.subr.mxu0 0.0
        %3263 = vmatpush1.msra.mxu0 0.0
        %3264 = vmatprep.subr.mxu0 0.0
        %3265 = vmatpush1.msra.mxu0 0.0
        %3266 = vmatprep.subr.mxu0 0.0
        %3267 = vmatpush1.msra.mxu0 0.0
        %3268 = vmatprep.subr.mxu0 0.0
        %3269 = vmatpush1.msra.mxu0 0.0
        %3270 = vmatprep.subr.mxu0 0.0
        %3271 = vmatpush1.msra.mxu0 0.0
        %3272 = vmatprep.subr.mxu0 0.0
        %3273 = vmatpush1.msra.mxu0 0.0
        %3274 = vmatprep.subr.mxu0 0.0
        %3275 = vmatpush1.msra.mxu0 0.0
        %3276 = vmatprep.subr.mxu0 0.0
        %3277 = vmatpush1.msra.mxu0 0.0
        %3278 = vmatprep.subr.mxu0 0.0
        %3279 = vmatpush1.msra.mxu0 0.0
        %3280 = vmatprep.subr.mxu0 0.0
        %3281 = vmatpush1.msra.mxu0 0.0
        %3282 = vmatprep.subr.mxu0 0.0
        %3283 = vmatpush1.msra.mxu0 0.0
        %3284 = vmatprep.subr.mxu0 0.0
        %3285 = vmatpush1.msra.mxu0 0.0
        %3286 = vmatprep.subr.mxu0 0.0
        %3287 = vmatpush1.msra.mxu0 0.0
        %3288 = vmatprep.subr.mxu0 0.0
        %3289 = vmatpush1.msra.mxu0 0.0
        %3290 = vmatprep.subr.mxu0 0.0
        %3291 = vmatpush1.msra.mxu0 0.0
        %3292 = vmatprep.subr.mxu0 0.0
        %3293 = vmatpush1.msra.mxu0 0.0
        %3294 = vmatprep.mubr.f32.mxu0 0.0
        %3295 = vmatmul.mubr.f32.gmra.mrb[0].mxu0 %v3038
        %v3296 = vpop.f32.mrb[0].mxu0
        %v3297 = vadd.f32 0.0, %v3296
        %v3298 = vpop.f32.mrb[0].mxu0
        %v3299 = vadd.f32 0.0, %v3298
        %3300 = vdwg.mxu0
        %3301 = vmatprep.subr.mxu0 %v3054
        %3302 = vmatpush1.msra.mxu0 %v3052
        %3303 = vmatprep.subr.mxu0 0.0
        %3304 = vmatpush1.msra.mxu0 0.0
        %3305 = vmatprep.subr.mxu0 0.0
        %3306 = vmatpush1.msra.mxu0 0.0
        %3307 = vmatprep.subr.mxu0 0.0
        %3308 = vmatpush1.msra.mxu0 0.0
        %3309 = vmatprep.subr.mxu0 0.0
        %3310 = vmatpush1.msra.mxu0 0.0
        %3311 = vmatprep.subr.mxu0 0.0
        %3312 = vmatpush1.msra.mxu0 0.0
        %3313 = vmatprep.subr.mxu0 0.0
        %3314 = vmatpush1.msra.mxu0 0.0
        %3315 = vmatprep.subr.mxu0 0.0
        %3316 = vmatpush1.msra.mxu0 0.0
        %3317 = vmatprep.subr.mxu0 0.0
        %3318 = vmatpush1.msra.mxu0 0.0
        %3319 = vmatprep.subr.mxu0 0.0
        %3320 = vmatpush1.msra.mxu0 0.0
        %3321 = vmatprep.subr.mxu0 0.0
        %3322 = vmatpush1.msra.mxu0 0.0
        %3323 = vmatprep.subr.mxu0 0.0
        %3324 = vmatpush1.msra.mxu0 0.0
        %3325 = vmatprep.subr.mxu0 0.0
        %3326 = vmatpush1.msra.mxu0 0.0
        %3327 = vmatprep.subr.mxu0 0.0
        %3328 = vmatpush1.msra.mxu0 0.0
        %3329 = vmatprep.subr.mxu0 0.0
        %3330 = vmatpush1.msra.mxu0 0.0
        %3331 = vmatprep.subr.mxu0 0.0
        %3332 = vmatpush1.msra.mxu0 0.0
        %3333 = vmatprep.subr.mxu0 0.0
        %3334 = vmatpush1.msra.mxu0 0.0
        %3335 = vmatprep.subr.mxu0 0.0
        %3336 = vmatpush1.msra.mxu0 0.0
        %3337 = vmatprep.subr.mxu0 0.0
        %3338 = vmatpush1.msra.mxu0 0.0
        %3339 = vmatprep.subr.mxu0 0.0
        %3340 = vmatpush1.msra.mxu0 0.0
        %3341 = vmatprep.subr.mxu0 0.0
        %3342 = vmatpush1.msra.mxu0 0.0
        %3343 = vmatprep.subr.mxu0 0.0
        %3344 = vmatpush1.msra.mxu0 0.0
        %3345 = vmatprep.subr.mxu0 0.0
        %3346 = vmatpush1.msra.mxu0 0.0
        %3347 = vmatprep.subr.mxu0 0.0
        %3348 = vmatpush1.msra.mxu0 0.0
        %3349 = vmatprep.subr.mxu0 0.0
        %3350 = vmatpush1.msra.mxu0 0.0
        %3351 = vmatprep.subr.mxu0 0.0
        %3352 = vmatpush1.msra.mxu0 0.0
        %3353 = vmatprep.subr.mxu0 0.0
        %3354 = vmatpush1.msra.mxu0 0.0
        %3355 = vmatprep.subr.mxu0 0.0
        %3356 = vmatpush1.msra.mxu0 0.0
        %3357 = vmatprep.subr.mxu0 0.0
        %3358 = vmatpush1.msra.mxu0 0.0
        %3359 = vmatprep.subr.mxu0 0.0
        %3360 = vmatpush1.msra.mxu0 0.0
        %3361 = vmatprep.subr.mxu0 0.0
        %3362 = vmatpush1.msra.mxu0 0.0
        %3363 = vmatprep.subr.mxu0 0.0
        %3364 = vmatpush1.msra.mxu0 0.0
        %3365 = vmatprep.mubr.f32.mxu0 0.0
        %3366 = vmatmul.mubr.f32.gmra.mrb[0].mxu0 %v3038
        %v3367 = vpop.f32.mrb[0].mxu0
        %v3368 = vadd.f32 0.0, %v3367
        %v3369 = vpop.f32.mrb[0].mxu0
        %v3370 = vadd.f32 0.0, %v3369
        %3371 = vdwg.mxu0
        %3372 = vmatprep.subr.mxu0 %v3058
        %3373 = vmatpush1.msra.mxu0 %v3056
        %3374 = vmatprep.subr.mxu0 0.0
        %3375 = vmatpush1.msra.mxu0 0.0
        %3376 = vmatprep.subr.mxu0 0.0
        %3377 = vmatpush1.msra.mxu0 0.0
        %3378 = vmatprep.subr.mxu0 0.0
        %3379 = vmatpush1.msra.mxu0 0.0
        %3380 = vmatprep.subr.mxu0 0.0
        %3381 = vmatpush1.msra.mxu0 0.0
        %3382 = vmatprep.subr.mxu0 0.0
        %3383 = vmatpush1.msra.mxu0 0.0
        %3384 = vmatprep.subr.mxu0 0.0
        %3385 = vmatpush1.msra.mxu0 0.0
        %3386 = vmatprep.subr.mxu0 0.0
        %3387 = vmatpush1.msra.mxu0 0.0
        %3388 = vmatprep.subr.mxu0 0.0
        %3389 = vmatpush1.msra.mxu0 0.0
        %3390 = vmatprep.subr.mxu0 0.0
        %3391 = vmatpush1.msra.mxu0 0.0
        %3392 = vmatprep.subr.mxu0 0.0
        %3393 = vmatpush1.msra.mxu0 0.0
        %3394 = vmatprep.subr.mxu0 0.0
        %3395 = vmatpush1.msra.mxu0 0.0
        %3396 = vmatprep.subr.mxu0 0.0
        %3397 = vmatpush1.msra.mxu0 0.0
        %3398 = vmatprep.subr.mxu0 0.0
        %3399 = vmatpush1.msra.mxu0 0.0
        %3400 = vmatprep.subr.mxu0 0.0
        %3401 = vmatpush1.msra.mxu0 0.0
        %3402 = vmatprep.subr.mxu0 0.0
        %3403 = vmatpush1.msra.mxu0 0.0
        %3404 = vmatprep.subr.mxu0 0.0
        %3405 = vmatpush1.msra.mxu0 0.0
        %3406 = vmatprep.subr.mxu0 0.0
        %3407 = vmatpush1.msra.mxu0 0.0
        %3408 = vmatprep.subr.mxu0 0.0
        %3409 = vmatpush1.msra.mxu0 0.0
        %3410 = vmatprep.subr.mxu0 0.0
        %3411 = vmatpush1.msra.mxu0 0.0
        %3412 = vmatprep.subr.mxu0 0.0
        %3413 = vmatpush1.msra.mxu0 0.0
        %3414 = vmatprep.subr.mxu0 0.0
        %3415 = vmatpush1.msra.mxu0 0.0
        %3416 = vmatprep.subr.mxu0 0.0
        %3417 = vmatpush1.msra.mxu0 0.0
        %3418 = vmatprep.subr.mxu0 0.0
        %3419 = vmatpush1.msra.mxu0 0.0
        %3420 = vmatprep.subr.mxu0 0.0
        %3421 = vmatpush1.msra.mxu0 0.0
        %3422 = vmatprep.subr.mxu0 0.0
        %3423 = vmatpush1.msra.mxu0 0.0
        %3424 = vmatprep.subr.mxu0 0.0
        %3425 = vmatpush1.msra.mxu0 0.0
        %3426 = vmatprep.subr.mxu0 0.0
        %3427 = vmatpush1.msra.mxu0 0.0
        %3428 = vmatprep.subr.mxu0 0.0
        %3429 = vmatpush1.msra.mxu0 0.0
        %3430 = vmatprep.subr.mxu0 0.0
        %3431 = vmatpush1.msra.mxu0 0.0
        %3432 = vmatprep.subr.mxu0 0.0
        %3433 = vmatpush1.msra.mxu0 0.0
        %3434 = vmatprep.subr.mxu0 0.0
        %3435 = vmatpush1.msra.mxu0 0.0
        %3436 = vmatprep.mubr.f32.mxu0 0.0
        %3437 = vmatmul.mubr.f32.gmra.mrb[0].mxu0 %v3038
        %v3438 = vpop.f32.mrb[0].mxu0
        %v3439 = vadd.f32 0.0, %v3438
        %v3440 = vpop.f32.mrb[0].mxu0
        %v3441 = vadd.f32 0.0, %v3440
        %3442 = vdwg.mxu0
        %3443 = vmatprep.subr.mxu0 %v3062
        %3444 = vmatpush1.msra.mxu0 %v3060
        %3445 = vmatprep.subr.mxu0 0.0
        %3446 = vmatpush1.msra.mxu0 0.0
        %3447 = vmatprep.subr.mxu0 0.0
        %3448 = vmatpush1.msra.mxu0 0.0
        %3449 = vmatprep.subr.mxu0 0.0
        %3450 = vmatpush1.msra.mxu0 0.0
        %3451 = vmatprep.subr.mxu0 0.0
        %3452 = vmatpush1.msra.mxu0 0.0
        %3453 = vmatprep.subr.mxu0 0.0
        %3454 = vmatpush1.msra.mxu0 0.0
        %3455 = vmatprep.subr.mxu0 0.0
        %3456 = vmatpush1.msra.mxu0 0.0
        %3457 = vmatprep.subr.mxu0 0.0
        %3458 = vmatpush1.msra.mxu0 0.0
        %3459 = vmatprep.subr.mxu0 0.0
        %3460 = vmatpush1.msra.mxu0 0.0
        %3461 = vmatprep.subr.mxu0 0.0
        %3462 = vmatpush1.msra.mxu0 0.0
        %3463 = vmatprep.subr.mxu0 0.0
        %3464 = vmatpush1.msra.mxu0 0.0
        %3465 = vmatprep.subr.mxu0 0.0
        %3466 = vmatpush1.msra.mxu0 0.0
        %3467 = vmatprep.subr.mxu0 0.0
        %3468 = vmatpush1.msra.mxu0 0.0
        %3469 = vmatprep.subr.mxu0 0.0
        %3470 = vmatpush1.msra.mxu0 0.0
        %3471 = vmatprep.subr.mxu0 0.0
        %3472 = vmatpush1.msra.mxu0 0.0
        %3473 = vmatprep.subr.mxu0 0.0
        %3474 = vmatpush1.msra.mxu0 0.0
        %3475 = vmatprep.subr.mxu0 0.0
        %3476 = vmatpush1.msra.mxu0 0.0
        %3477 = vmatprep.subr.mxu0 0.0
        %3478 = vmatpush1.msra.mxu0 0.0
        %3479 = vmatprep.subr.mxu0 0.0
        %3480 = vmatpush1.msra.mxu0 0.0
        %3481 = vmatprep.subr.mxu0 0.0
        %3482 = vmatpush1.msra.mxu0 0.0
        %3483 = vmatprep.subr.mxu0 0.0
        %3484 = vmatpush1.msra.mxu0 0.0
        %3485 = vmatprep.subr.mxu0 0.0
        %3486 = vmatpush1.msra.mxu0 0.0
        %3487 = vmatprep.subr.mxu0 0.0
        %3488 = vmatpush1.msra.mxu0 0.0
        %3489 = vmatprep.subr.mxu0 0.0
        %3490 = vmatpush1.msra.mxu0 0.0
        %3491 = vmatprep.subr.mxu0 0.0
        %3492 = vmatpush1.msra.mxu0 0.0
        %3493 = vmatprep.subr.mxu0 0.0
        %3494 = vmatpush1.msra.mxu0 0.0
        %3495 = vmatprep.subr.mxu0 0.0
        %3496 = vmatpush1.msra.mxu0 0.0
        %3497 = vmatprep.subr.mxu0 0.0
        %3498 = vmatpush1.msra.mxu0 0.0
        %3499 = vmatprep.subr.mxu0 0.0
        %3500 = vmatpush1.msra.mxu0 0.0
        %3501 = vmatprep.subr.mxu0 0.0
        %3502 = vmatpush1.msra.mxu0 0.0
        %3503 = vmatprep.subr.mxu0 0.0
        %3504 = vmatpush1.msra.mxu0 0.0
        %3505 = vmatprep.subr.mxu0 0.0
        %3506 = vmatpush1.msra.mxu0 0.0
        %3507 = vmatprep.mubr.f32.mxu0 0.0
        %3508 = vmatmul.mubr.f32.gmra.mrb[0].mxu0 %v3038
        %v3509 = vpop.f32.mrb[0].mxu0
        %v3510 = vadd.f32 0.0, %v3509
        %v3511 = vpop.f32.mrb[0].mxu0
        %v3512 = vadd.f32 0.0, %v3511
        %3513 = vdwg.mxu0
        %3514 = vmatprep.subr.mxu0 %v3066
        %3515 = vmatpush1.msra.mxu0 %v3064
        %3516 = vmatprep.subr.mxu0 0.0
        %3517 = vmatpush1.msra.mxu0 0.0
        %3518 = vmatprep.subr.mxu0 0.0
        %3519 = vmatpush1.msra.mxu0 0.0
        %3520 = vmatprep.subr.mxu0 0.0
        %3521 = vmatpush1.msra.mxu0 0.0
        %3522 = vmatprep.subr.mxu0 0.0
        %3523 = vmatpush1.msra.mxu0 0.0
        %3524 = vmatprep.subr.mxu0 0.0
        %3525 = vmatpush1.msra.mxu0 0.0
        %3526 = vmatprep.subr.mxu0 0.0
        %3527 = vmatpush1.msra.mxu0 0.0
        %3528 = vmatprep.subr.mxu0 0.0
        %3529 = vmatpush1.msra.mxu0 0.0
        %3530 = vmatprep.subr.mxu0 0.0
        %3531 = vmatpush1.msra.mxu0 0.0
        %3532 = vmatprep.subr.mxu0 0.0
        %3533 = vmatpush1.msra.mxu0 0.0
        %3534 = vmatprep.subr.mxu0 0.0
        %3535 = vmatpush1.msra.mxu0 0.0
        %3536 = vmatprep.subr.mxu0 0.0
        %3537 = vmatpush1.msra.mxu0 0.0
        %3538 = vmatprep.subr.mxu0 0.0
        %3539 = vmatpush1.msra.mxu0 0.0
        %3540 = vmatprep.subr.mxu0 0.0
        %3541 = vmatpush1.msra.mxu0 0.0
        %3542 = vmatprep.subr.mxu0 0.0
        %3543 = vmatpush1.msra.mxu0 0.0
        %3544 = vmatprep.subr.mxu0 0.0
        %3545 = vmatpush1.msra.mxu0 0.0
        %3546 = vmatprep.subr.mxu0 0.0
        %3547 = vmatpush1.msra.mxu0 0.0
        %3548 = vmatprep.subr.mxu0 0.0
        %3549 = vmatpush1.msra.mxu0 0.0
        %3550 = vmatprep.subr.mxu0 0.0
        %3551 = vmatpush1.msra.mxu0 0.0
        %3552 = vmatprep.subr.mxu0 0.0
        %3553 = vmatpush1.msra.mxu0 0.0
        %3554 = vmatprep.subr.mxu0 0.0
        %3555 = vmatpush1.msra.mxu0 0.0
        %3556 = vmatprep.subr.mxu0 0.0
        %3557 = vmatpush1.msra.mxu0 0.0
        %3558 = vmatprep.subr.mxu0 0.0
        %3559 = vmatpush1.msra.mxu0 0.0
        %3560 = vmatprep.subr.mxu0 0.0
        %3561 = vmatpush1.msra.mxu0 0.0
        %3562 = vmatprep.subr.mxu0 0.0
        %3563 = vmatpush1.msra.mxu0 0.0
        %3564 = vmatprep.subr.mxu0 0.0
        %3565 = vmatpush1.msra.mxu0 0.0
        %3566 = vmatprep.subr.mxu0 0.0
        %3567 = vmatpush1.msra.mxu0 0.0
        %3568 = vmatprep.subr.mxu0 0.0
        %3569 = vmatpush1.msra.mxu0 0.0
        %3570 = vmatprep.subr.mxu0 0.0
        %3571 = vmatpush1.msra.mxu0 0.0
        %3572 = vmatprep.subr.mxu0 0.0
        %3573 = vmatpush1.msra.mxu0 0.0
        %3574 = vmatprep.subr.mxu0 0.0
        %3575 = vmatpush1.msra.mxu0 0.0
        %3576 = vmatprep.subr.mxu0 0.0
        %3577 = vmatpush1.msra.mxu0 0.0
        %3578 = vmatprep.mubr.f32.mxu0 0.0
        %3579 = vmatmul.mubr.f32.gmra.mrb[0].mxu0 %v3038
        %v3580 = vpop.f32.mrb[0].mxu0
        %v3581 = vadd.f32 0.0, %v3580
        %v3582 = vpop.f32.mrb[0].mxu0
        %v3583 = vadd.f32 0.0, %v3582
        %3584 = vdwg.mxu0
        %3585 = vmatprep.subr.mxu0 %v3070
        %3586 = vmatpush1.msra.mxu0 %v3068
        %3587 = vmatprep.subr.mxu0 0.0
        %3588 = vmatpush1.msra.mxu0 0.0
        %3589 = vmatprep.subr.mxu0 0.0
        %3590 = vmatpush1.msra.mxu0 0.0
        %3591 = vmatprep.subr.mxu0 0.0
        %3592 = vmatpush1.msra.mxu0 0.0
        %3593 = vmatprep.subr.mxu0 0.0
        %3594 = vmatpush1.msra.mxu0 0.0
        %3595 = vmatprep.subr.mxu0 0.0
        %3596 = vmatpush1.msra.mxu0 0.0
        %3597 = vmatprep.subr.mxu0 0.0
        %3598 = vmatpush1.msra.mxu0 0.0
        %3599 = vmatprep.subr.mxu0 0.0
        %3600 = vmatpush1.msra.mxu0 0.0
        %3601 = vmatprep.subr.mxu0 0.0
        %3602 = vmatpush1.msra.mxu0 0.0
        %3603 = vmatprep.subr.mxu0 0.0
        %3604 = vmatpush1.msra.mxu0 0.0
        %3605 = vmatprep.subr.mxu0 0.0
        %3606 = vmatpush1.msra.mxu0 0.0
        %3607 = vmatprep.subr.mxu0 0.0
        %3608 = vmatpush1.msra.mxu0 0.0
        %3609 = vmatprep.subr.mxu0 0.0
        %3610 = vmatpush1.msra.mxu0 0.0
        %3611 = vmatprep.subr.mxu0 0.0
        %3612 = vmatpush1.msra.mxu0 0.0
        %3613 = vmatprep.subr.mxu0 0.0
        %3614 = vmatpush1.msra.mxu0 0.0
        %3615 = vmatprep.subr.mxu0 0.0
        %3616 = vmatpush1.msra.mxu0 0.0
        %3617 = vmatprep.subr.mxu0 0.0
        %3618 = vmatpush1.msra.mxu0 0.0
        %3619 = vmatprep.subr.mxu0 0.0
        %3620 = vmatpush1.msra.mxu0 0.0
        %3621 = vmatprep.subr.mxu0 0.0
        %3622 = vmatpush1.msra.mxu0 0.0
        %3623 = vmatprep.subr.mxu0 0.0
        %3624 = vmatpush1.msra.mxu0 0.0
        %3625 = vmatprep.subr.mxu0 0.0
        %3626 = vmatpush1.msra.mxu0 0.0
        %3627 = vmatprep.subr.mxu0 0.0
        %3628 = vmatpush1.msra.mxu0 0.0
        %3629 = vmatprep.subr.mxu0 0.0
        %3630 = vmatpush1.msra.mxu0 0.0
        %3631 = vmatprep.subr.mxu0 0.0
        %3632 = vmatpush1.msra.mxu0 0.0
        %3633 = vmatprep.subr.mxu0 0.0
        %3634 = vmatpush1.msra.mxu0 0.0
        %3635 = vmatprep.subr.mxu0 0.0
        %3636 = vmatpush1.msra.mxu0 0.0
        %3637 = vmatprep.subr.mxu0 0.0
        %3638 = vmatpush1.msra.mxu0 0.0
        %3639 = vmatprep.subr.mxu0 0.0
        %3640 = vmatpush1.msra.mxu0 0.0
        %3641 = vmatprep.subr.mxu0 0.0
        %3642 = vmatpush1.msra.mxu0 0.0
        %3643 = vmatprep.subr.mxu0 0.0
        %3644 = vmatpush1.msra.mxu0 0.0
        %3645 = vmatprep.subr.mxu0 0.0
        %3646 = vmatpush1.msra.mxu0 0.0
        %3647 = vmatprep.subr.mxu0 0.0
        %3648 = vmatpush1.msra.mxu0 0.0
        %3649 = vmatprep.mubr.f32.mxu0 0.0
        %3650 = vmatmul.mubr.f32.gmra.mrb[0].mxu0 %v3038
        %v3651 = vpop.f32.mrb[0].mxu0
        %v3652 = vadd.f32 0.0, %v3651
        %v3653 = vpop.f32.mrb[0].mxu0
        %v3654 = vadd.f32 0.0, %v3653
        %3655 = vdwg.mxu0
        %3656 = vmatprep.subr.mxu0 %v3074
        %3657 = vmatpush1.msra.mxu0 %v3072
        %3658 = vmatprep.subr.mxu0 0.0
        %3659 = vmatpush1.msra.mxu0 0.0
        %3660 = vmatprep.subr.mxu0 0.0
        %3661 = vmatpush1.msra.mxu0 0.0
        %3662 = vmatprep.subr.mxu0 0.0
        %3663 = vmatpush1.msra.mxu0 0.0
        %3664 = vmatprep.subr.mxu0 0.0
        %3665 = vmatpush1.msra.mxu0 0.0
        %3666 = vmatprep.subr.mxu0 0.0
        %3667 = vmatpush1.msra.mxu0 0.0
        %3668 = vmatprep.subr.mxu0 0.0
        %3669 = vmatpush1.msra.mxu0 0.0
        %3670 = vmatprep.subr.mxu0 0.0
        %3671 = vmatpush1.msra.mxu0 0.0
        %3672 = vmatprep.subr.mxu0 0.0
        %3673 = vmatpush1.msra.mxu0 0.0
        %3674 = vmatprep.subr.mxu0 0.0
        %3675 = vmatpush1.msra.mxu0 0.0
        %3676 = vmatprep.subr.mxu0 0.0
        %3677 = vmatpush1.msra.mxu0 0.0
        %3678 = vmatprep.subr.mxu0 0.0
        %3679 = vmatpush1.msra.mxu0 0.0
        %3680 = vmatprep.subr.mxu0 0.0
        %3681 = vmatpush1.msra.mxu0 0.0
        %3682 = vmatprep.subr.mxu0 0.0
        %3683 = vmatpush1.msra.mxu0 0.0
        %3684 = vmatprep.subr.mxu0 0.0
        %3685 = vmatpush1.msra.mxu0 0.0
        %3686 = vmatprep.subr.mxu0 0.0
        %3687 = vmatpush1.msra.mxu0 0.0
        %3688 = vmatprep.subr.mxu0 0.0
        %3689 = vmatpush1.msra.mxu0 0.0
        %3690 = vmatprep.subr.mxu0 0.0
        %3691 = vmatpush1.msra.mxu0 0.0
        %3692 = vmatprep.subr.mxu0 0.0
        %3693 = vmatpush1.msra.mxu0 0.0
        %3694 = vmatprep.subr.mxu0 0.0
        %3695 = vmatpush1.msra.mxu0 0.0
        %3696 = vmatprep.subr.mxu0 0.0
        %3697 = vmatpush1.msra.mxu0 0.0
        %3698 = vmatprep.subr.mxu0 0.0
        %3699 = vmatpush1.msra.mxu0 0.0
        %3700 = vmatprep.subr.mxu0 0.0
        %3701 = vmatpush1.msra.mxu0 0.0
        %3702 = vmatprep.subr.mxu0 0.0
        %3703 = vmatpush1.msra.mxu0 0.0
        %3704 = vmatprep.subr.mxu0 0.0
        %3705 = vmatpush1.msra.mxu0 0.0
        %3706 = vmatprep.subr.mxu0 0.0
        %3707 = vmatpush1.msra.mxu0 0.0
        %3708 = vmatprep.subr.mxu0 0.0
        %3709 = vmatpush1.msra.mxu0 0.0
        %3710 = vmatprep.subr.mxu0 0.0
        %3711 = vmatpush1.msra.mxu0 0.0
        %3712 = vmatprep.subr.mxu0 0.0
        %3713 = vmatpush1.msra.mxu0 0.0
        %3714 = vmatprep.subr.mxu0 0.0
        %3715 = vmatpush1.msra.mxu0 0.0
        %3716 = vmatprep.subr.mxu0 0.0
        %3717 = vmatpush1.msra.mxu0 0.0
        %3718 = vmatprep.subr.mxu0 0.0
        %3719 = vmatpush1.msra.mxu0 0.0
        %3720 = vmatprep.mubr.f32.mxu0 0.0
        %3721 = vmatmul.mubr.f32.gmra.mrb[0].mxu0 %v3038
        %v3722 = vpop.f32.mrb[0].mxu0
        %v3723 = vadd.f32 0.0, %v3722
        %v3724 = vpop.f32.mrb[0].mxu0
        %v3725 = vadd.f32 0.0, %v3724
        %3726 = vdwg.mxu0
        %3727 = vmatprep.subr.mxu0 %v3078
        %3728 = vmatpush1.msra.mxu0 %v3076
        %3729 = vmatprep.subr.mxu0 0.0
        %3730 = vmatpush1.msra.mxu0 0.0
        %3731 = vmatprep.subr.mxu0 0.0
        %3732 = vmatpush1.msra.mxu0 0.0
        %3733 = vmatprep.subr.mxu0 0.0
        %3734 = vmatpush1.msra.mxu0 0.0
        %3735 = vmatprep.subr.mxu0 0.0
        %3736 = vmatpush1.msra.mxu0 0.0
        %3737 = vmatprep.subr.mxu0 0.0
        %3738 = vmatpush1.msra.mxu0 0.0
        %3739 = vmatprep.subr.mxu0 0.0
        %3740 = vmatpush1.msra.mxu0 0.0
        %3741 = vmatprep.subr.mxu0 0.0
        %3742 = vmatpush1.msra.mxu0 0.0
        %3743 = vmatprep.subr.mxu0 0.0
        %3744 = vmatpush1.msra.mxu0 0.0
        %3745 = vmatprep.subr.mxu0 0.0
        %3746 = vmatpush1.msra.mxu0 0.0
        %3747 = vmatprep.subr.mxu0 0.0
        %3748 = vmatpush1.msra.mxu0 0.0
        %3749 = vmatprep.subr.mxu0 0.0
        %3750 = vmatpush1.msra.mxu0 0.0
        %3751 = vmatprep.subr.mxu0 0.0
        %3752 = vmatpush1.msra.mxu0 0.0
        %3753 = vmatprep.subr.mxu0 0.0
        %3754 = vmatpush1.msra.mxu0 0.0
        %3755 = vmatprep.subr.mxu0 0.0
        %3756 = vmatpush1.msra.mxu0 0.0
        %3757 = vmatprep.subr.mxu0 0.0
        %3758 = vmatpush1.msra.mxu0 0.0
        %3759 = vmatprep.subr.mxu0 0.0
        %3760 = vmatpush1.msra.mxu0 0.0
        %3761 = vmatprep.subr.mxu0 0.0
        %3762 = vmatpush1.msra.mxu0 0.0
        %3763 = vmatprep.subr.mxu0 0.0
        %3764 = vmatpush1.msra.mxu0 0.0
        %3765 = vmatprep.subr.mxu0 0.0
        %3766 = vmatpush1.msra.mxu0 0.0
        %3767 = vmatprep.subr.mxu0 0.0
        %3768 = vmatpush1.msra.mxu0 0.0
        %3769 = vmatprep.subr.mxu0 0.0
        %3770 = vmatpush1.msra.mxu0 0.0
        %3771 = vmatprep.subr.mxu0 0.0
        %3772 = vmatpush1.msra.mxu0 0.0
        %3773 = vmatprep.subr.mxu0 0.0
        %3774 = vmatpush1.msra.mxu0 0.0
        %3775 = vmatprep.subr.mxu0 0.0
        %3776 = vmatpush1.msra.mxu0 0.0
        %3777 = vmatprep.subr.mxu0 0.0
        %3778 = vmatpush1.msra.mxu0 0.0
        %3779 = vmatprep.subr.mxu0 0.0
        %3780 = vmatpush1.msra.mxu0 0.0
        %3781 = vmatprep.subr.mxu0 0.0
        %3782 = vmatpush1.msra.mxu0 0.0
        %3783 = vmatprep.subr.mxu0 0.0
        %3784 = vmatpush1.msra.mxu0 0.0
        %3785 = vmatprep.subr.mxu0 0.0
        %3786 = vmatpush1.msra.mxu0 0.0
        %3787 = vmatprep.subr.mxu0 0.0
        %3788 = vmatpush1.msra.mxu0 0.0
        %3789 = vmatprep.subr.mxu0 0.0
        %3790 = vmatpush1.msra.mxu0 0.0
        %3791 = vmatprep.mubr.f32.mxu0 0.0
        %3792 = vmatmul.mubr.f32.gmra.mrb[0].mxu0 %v3038
        %v3793 = vpop.f32.mrb[0].mxu0
        %v3794 = vadd.f32 0.0, %v3793
        %v3795 = vpop.f32.mrb[0].mxu0
        %v3796 = vadd.f32 0.0, %v3795
        %3797 = vdwg.mxu0
        %3798 = vmatprep.subr.mxu0 %v3082
        %3799 = vmatpush1.msra.mxu0 %v3080
        %3800 = vmatprep.subr.mxu0 0.0
        %3801 = vmatpush1.msra.mxu0 0.0
        %3802 = vmatprep.subr.mxu0 0.0
        %3803 = vmatpush1.msra.mxu0 0.0
        %3804 = vmatprep.subr.mxu0 0.0
        %3805 = vmatpush1.msra.mxu0 0.0
        %3806 = vmatprep.subr.mxu0 0.0
        %3807 = vmatpush1.msra.mxu0 0.0
        %3808 = vmatprep.subr.mxu0 0.0
        %3809 = vmatpush1.msra.mxu0 0.0
        %3810 = vmatprep.subr.mxu0 0.0
        %3811 = vmatpush1.msra.mxu0 0.0
        %3812 = vmatprep.subr.mxu0 0.0
        %3813 = vmatpush1.msra.mxu0 0.0
        %3814 = vmatprep.subr.mxu0 0.0
        %3815 = vmatpush1.msra.mxu0 0.0
        %3816 = vmatprep.subr.mxu0 0.0
        %3817 = vmatpush1.msra.mxu0 0.0
        %3818 = vmatprep.subr.mxu0 0.0
        %3819 = vmatpush1.msra.mxu0 0.0
        %3820 = vmatprep.subr.mxu0 0.0
        %3821 = vmatpush1.msra.mxu0 0.0
        %3822 = vmatprep.subr.mxu0 0.0
        %3823 = vmatpush1.msra.mxu0 0.0
        %3824 = vmatprep.subr.mxu0 0.0
        %3825 = vmatpush1.msra.mxu0 0.0
        %3826 = vmatprep.subr.mxu0 0.0
        %3827 = vmatpush1.msra.mxu0 0.0
        %3828 = vmatprep.subr.mxu0 0.0
        %3829 = vmatpush1.msra.mxu0 0.0
        %3830 = vmatprep.subr.mxu0 0.0
        %3831 = vmatpush1.msra.mxu0 0.0
        %3832 = vmatprep.subr.mxu0 0.0
        %3833 = vmatpush1.msra.mxu0 0.0
        %3834 = vmatprep.subr.mxu0 0.0
        %3835 = vmatpush1.msra.mxu0 0.0
        %3836 = vmatprep.subr.mxu0 0.0
        %3837 = vmatpush1.msra.mxu0 0.0
        %3838 = vmatprep.subr.mxu0 0.0
        %3839 = vmatpush1.msra.mxu0 0.0
        %3840 = vmatprep.subr.mxu0 0.0
        %3841 = vmatpush1.msra.mxu0 0.0
        %3842 = vmatprep.subr.mxu0 0.0
        %3843 = vmatpush1.msra.mxu0 0.0
        %3844 = vmatprep.subr.mxu0 0.0
        %3845 = vmatpush1.msra.mxu0 0.0
        %3846 = vmatprep.subr.mxu0 0.0
        %3847 = vmatpush1.msra.mxu0 0.0
        %3848 = vmatprep.subr.mxu0 0.0
        %3849 = vmatpush1.msra.mxu0 0.0
        %3850 = vmatprep.subr.mxu0 0.0
        %3851 = vmatpush1.msra.mxu0 0.0
        %3852 = vmatprep.subr.mxu0 0.0
        %3853 = vmatpush1.msra.mxu0 0.0
        %3854 = vmatprep.subr.mxu0 0.0
        %3855 = vmatpush1.msra.mxu0 0.0
        %3856 = vmatprep.subr.mxu0 0.0
        %3857 = vmatpush1.msra.mxu0 0.0
        %3858 = vmatprep.subr.mxu0 0.0
        %3859 = vmatpush1.msra.mxu0 0.0
        %3860 = vmatprep.subr.mxu0 0.0
        %3861 = vmatpush1.msra.mxu0 0.0
        %3862 = vmatprep.mubr.f32.mxu0 0.0
        %3863 = vmatmul.mubr.f32.gmra.mrb[0].mxu0 %v3038
        %v3864 = vpop.f32.mrb[0].mxu0
        %v3865 = vadd.f32 0.0, %v3864
        %v3866 = vpop.f32.mrb[0].mxu0
        %v3867 = vadd.f32 0.0, %v3866
        %3868 = vdwg.mxu0
        %3869 = vmatprep.subr.mxu0 %v3086
        %3870 = vmatpush1.msra.mxu0 %v3084
        %3871 = vmatprep.subr.mxu0 0.0
        %3872 = vmatpush1.msra.mxu0 0.0
        %3873 = vmatprep.subr.mxu0 0.0
        %3874 = vmatpush1.msra.mxu0 0.0
        %3875 = vmatprep.subr.mxu0 0.0
        %3876 = vmatpush1.msra.mxu0 0.0
        %3877 = vmatprep.subr.mxu0 0.0
        %3878 = vmatpush1.msra.mxu0 0.0
        %3879 = vmatprep.subr.mxu0 0.0
        %3880 = vmatpush1.msra.mxu0 0.0
        %3881 = vmatprep.subr.mxu0 0.0
        %3882 = vmatpush1.msra.mxu0 0.0
        %3883 = vmatprep.subr.mxu0 0.0
        %3884 = vmatpush1.msra.mxu0 0.0
        %3885 = vmatprep.subr.mxu0 0.0
        %3886 = vmatpush1.msra.mxu0 0.0
        %3887 = vmatprep.subr.mxu0 0.0
        %3888 = vmatpush1.msra.mxu0 0.0
        %3889 = vmatprep.subr.mxu0 0.0
        %3890 = vmatpush1.msra.mxu0 0.0
        %3891 = vmatprep.subr.mxu0 0.0
        %3892 = vmatpush1.msra.mxu0 0.0
        %3893 = vmatprep.subr.mxu0 0.0
        %3894 = vmatpush1.msra.mxu0 0.0
        %3895 = vmatprep.subr.mxu0 0.0
        %3896 = vmatpush1.msra.mxu0 0.0
        %3897 = vmatprep.subr.mxu0 0.0
        %3898 = vmatpush1.msra.mxu0 0.0
        %3899 = vmatprep.subr.mxu0 0.0
        %3900 = vmatpush1.msra.mxu0 0.0
        %3901 = vmatprep.subr.mxu0 0.0
        %3902 = vmatpush1.msra.mxu0 0.0
        %3903 = vmatprep.subr.mxu0 0.0
        %3904 = vmatpush1.msra.mxu0 0.0
        %3905 = vmatprep.subr.mxu0 0.0
        %3906 = vmatpush1.msra.mxu0 0.0
        %3907 = vmatprep.subr.mxu0 0.0
        %3908 = vmatpush1.msra.mxu0 0.0
        %3909 = vmatprep.subr.mxu0 0.0
        %3910 = vmatpush1.msra.mxu0 0.0
        %3911 = vmatprep.subr.mxu0 0.0
        %3912 = vmatpush1.msra.mxu0 0.0
        %3913 = vmatprep.subr.mxu0 0.0
        %3914 = vmatpush1.msra.mxu0 0.0
        %3915 = vmatprep.subr.mxu0 0.0
        %3916 = vmatpush1.msra.mxu0 0.0
        %3917 = vmatprep.subr.mxu0 0.0
        %3918 = vmatpush1.msra.mxu0 0.0
        %3919 = vmatprep.subr.mxu0 0.0
        %3920 = vmatpush1.msra.mxu0 0.0
        %3921 = vmatprep.subr.mxu0 0.0
        %3922 = vmatpush1.msra.mxu0 0.0
        %3923 = vmatprep.subr.mxu0 0.0
        %3924 = vmatpush1.msra.mxu0 0.0
        %3925 = vmatprep.subr.mxu0 0.0
        %3926 = vmatpush1.msra.mxu0 0.0
        %3927 = vmatprep.subr.mxu0 0.0
        %3928 = vmatpush1.msra.mxu0 0.0
        %3929 = vmatprep.subr.mxu0 0.0
        %3930 = vmatpush1.msra.mxu0 0.0
        %3931 = vmatprep.subr.mxu0 0.0
        %3932 = vmatpush1.msra.mxu0 0.0
        %3933 = vmatprep.mubr.f32.mxu0 0.0
        %3934 = vmatmul.mubr.f32.gmra.mrb[0].mxu0 %v3038
        %v3935 = vpop.f32.mrb[0].mxu0
        %v3936 = vadd.f32 0.0, %v3935
        %v3937 = vpop.f32.mrb[0].mxu0
        %v3938 = vadd.f32 0.0, %v3937
        %3939 = vdwg.mxu0
        %v3940 = vadd.f32 %v2975, %v3155
        %v3941 = vadd.f32 %v2976, %v3157
        %v3942 = vadd.f32 %v2977, %v3226
        %v3943 = vadd.f32 %v2978, %v3228
        %v3944 = vadd.f32 %v2979, %v3297
        %v3945 = vadd.f32 %v2980, %v3299
        %v3946 = vadd.f32 %v2981, %v3368
        %v3947 = vadd.f32 %v2982, %v3370
        %v3948 = vadd.f32 %v2983, %v3439
        %v3949 = vadd.f32 %v2984, %v3441
        %v3950 = vadd.f32 %v2985, %v3510
        %v3951 = vadd.f32 %v2986, %v3512
        %v3952 = vadd.f32 %v2987, %v3581
        %v3953 = vadd.f32 %v2988, %v3583
        %v3954 = vadd.f32 %v2989, %v3652
        %v3955 = vadd.f32 %v2990, %v3654
        %v3956 = vadd.f32 %v2991, %v3723
        %v3957 = vadd.f32 %v2992, %v3725
        %v3958 = vadd.f32 %v2993, %v3794
        %v3959 = vadd.f32 %v2994, %v3796
        %v3960 = vadd.f32 %v2995, %v3865
        %v3961 = vadd.f32 %v2996, %v3867
        %v3962 = vadd.f32 %v2997, %v3936
        %v3963 = vadd.f32 %v2998, %v3938
        %s3964 = scalar_lea.vmem %s1, 32
        %v3965 = vld [vmem:[%s3964] sm:$0xff]
        %v3966 = vld [vmem:[%s198 + $0x20] sm:$0xff]
        %v3967 = vld [vmem:[%s198 + $0x28] sm:$0xff]
        %v3968 = vld [vmem:[%s198 + $0x30] sm:$0xff]
        %v3969 = vld [vmem:[%s198 + $0x38] sm:$0xff]
        %v3970 = vld [vmem:[%s198 + $0x40] sm:$0xff]
        %v3971 = vld [vmem:[%s198 + $0x48] sm:$0xff]
        %v3972 = vld [vmem:[%s198 + $0x50] sm:$0xff]
        %v3973 = vld [vmem:[%s198 + $0x58] sm:$0xff]
        %v3974 = vld [vmem:[%s198 + $0x60] sm:$0xff]
        %v3975 = vld [vmem:[%s198 + $0x68] sm:$0xff]
        %v3976 = vld [vmem:[%s198 + $0x70] sm:$0xff]
        %v3977 = vld [vmem:[%s198 + $0x78] sm:$0xff]
        %v3990 = vcombine.high %v3966, %v3966
        %v3991 = vcombine.high %v3967, %v3967
        %v3992 = vcombine.high %v3968, %v3968
        %v3993 = vcombine.high %v3969, %v3969
        %v3994 = vcombine.high %v3970, %v3970
        %v3995 = vcombine.high %v3971, %v3971
        %v3996 = vcombine.high %v3972, %v3972
        %v3997 = vcombine.high %v3973, %v3973
        %v3998 = vcombine.high %v3974, %v3974
        %v3999 = vcombine.high %v3975, %v3975
        %v4000 = vcombine.high %v3976, %v3976
        %v4001 = vcombine.high %v3977, %v3977
        %v4003 = vsel %vm268, %v3965, 0
        %v4005 = vsel %vm272, %v3966, 0
        %v4007 = vsel %vm272, %v3990, 0
        %v4009 = vsel %vm272, %v3967, 0
        %v4011 = vsel %vm272, %v3991, 0
        %v4013 = vsel %vm272, %v3968, 0
        %v4015 = vsel %vm272, %v3992, 0
        %v4017 = vsel %vm272, %v3969, 0
        %v4019 = vsel %vm272, %v3993, 0
        %v4021 = vsel %vm272, %v3970, 0
        %v4023 = vsel %vm272, %v3994, 0
        %v4025 = vsel %vm272, %v3971, 0
        %v4027 = vsel %vm272, %v3995, 0
        %v4029 = vsel %vm272, %v3972, 0
        %v4031 = vsel %vm272, %v3996, 0
        %v4033 = vsel %vm272, %v3973, 0
        %v4035 = vsel %vm272, %v3997, 0
        %v4037 = vsel %vm272, %v3974, 0
        %v4039 = vsel %vm272, %v3998, 0
        %v4041 = vsel %vm272, %v3975, 0
        %v4043 = vsel %vm272, %v3999, 0
        %v4045 = vsel %vm272, %v3976, 0
        %v4047 = vsel %vm272, %v4000, 0
        %v4049 = vsel %vm272, %v3977, 0
        %v4051 = vsel %vm272, %v4001, 0
        %4053 = vmatprep.subr.mxu0 %v4007
        %4054 = vmatpush1.msra.mxu0 %v4005
        %4055 = vmatprep.subr.mxu0 0.0
        %4056 = vmatpush1.msra.mxu0 0.0
        %4057 = vmatprep.subr.mxu0 0.0
        %4058 = vmatpush1.msra.mxu0 0.0
        %4059 = vmatprep.subr.mxu0 0.0
        %4060 = vmatpush1.msra.mxu0 0.0
        %4061 = vmatprep.subr.mxu0 0.0
        %4062 = vmatpush1.msra.mxu0 0.0
        %4063 = vmatprep.subr.mxu0 0.0
        %4064 = vmatpush1.msra.mxu0 0.0
        %4065 = vmatprep.subr.mxu0 0.0
        %4066 = vmatpush1.msra.mxu0 0.0
        %4067 = vmatprep.subr.mxu0 0.0
        %4068 = vmatpush1.msra.mxu0 0.0
        %4069 = vmatprep.subr.mxu0 0.0
        %4070 = vmatpush1.msra.mxu0 0.0
        %4071 = vmatprep.subr.mxu0 0.0
        %4072 = vmatpush1.msra.mxu0 0.0
        %4073 = vmatprep.subr.mxu0 0.0
        %4074 = vmatpush1.msra.mxu0 0.0
        %4075 = vmatprep.subr.mxu0 0.0
        %4076 = vmatpush1.msra.mxu0 0.0
        %4077 = vmatprep.subr.mxu0 0.0
        %4078 = vmatpush1.msra.mxu0 0.0
        %4079 = vmatprep.subr.mxu0 0.0
        %4080 = vmatpush1.msra.mxu0 0.0
        %4081 = vmatprep.subr.mxu0 0.0
        %4082 = vmatpush1.msra.mxu0 0.0
        %4083 = vmatprep.subr.mxu0 0.0
        %4084 = vmatpush1.msra.mxu0 0.0
        %4085 = vmatprep.subr.mxu0 0.0
        %4086 = vmatpush1.msra.mxu0 0.0
        %4087 = vmatprep.subr.mxu0 0.0
        %4088 = vmatpush1.msra.mxu0 0.0
        %4089 = vmatprep.subr.mxu0 0.0
        %4090 = vmatpush1.msra.mxu0 0.0
        %4091 = vmatprep.subr.mxu0 0.0
        %4092 = vmatpush1.msra.mxu0 0.0
        %4093 = vmatprep.subr.mxu0 0.0
        %4094 = vmatpush1.msra.mxu0 0.0
        %4095 = vmatprep.subr.mxu0 0.0
        %4096 = vmatpush1.msra.mxu0 0.0
        %4097 = vmatprep.subr.mxu0 0.0
        %4098 = vmatpush1.msra.mxu0 0.0
        %4099 = vmatprep.subr.mxu0 0.0
        %4100 = vmatpush1.msra.mxu0 0.0
        %4101 = vmatprep.subr.mxu0 0.0
        %4102 = vmatpush1.msra.mxu0 0.0
        %4103 = vmatprep.subr.mxu0 0.0
        %4104 = vmatpush1.msra.mxu0 0.0
        %4105 = vmatprep.subr.mxu0 0.0
        %4106 = vmatpush1.msra.mxu0 0.0
        %4107 = vmatprep.subr.mxu0 0.0
        %4108 = vmatpush1.msra.mxu0 0.0
        %4109 = vmatprep.subr.mxu0 0.0
        %4110 = vmatpush1.msra.mxu0 0.0
        %4111 = vmatprep.subr.mxu0 0.0
        %4112 = vmatpush1.msra.mxu0 0.0
        %4113 = vmatprep.subr.mxu0 0.0
        %4114 = vmatpush1.msra.mxu0 0.0
        %4115 = vmatprep.subr.mxu0 0.0
        %4116 = vmatpush1.msra.mxu0 0.0
        %4117 = vmatprep.mubr.f32.mxu0 0.0
        %4118 = vmatmul.mubr.f32.gmra.mrb[0].mxu0 %v4003
        %v4119 = vpop.f32.mrb[0].mxu0
        %v4120 = vadd.f32 0.0, %v4119
        %v4121 = vpop.f32.mrb[0].mxu0
        %v4122 = vadd.f32 0.0, %v4121
        %4123 = vdwg.mxu0
        %4124 = vmatprep.subr.mxu0 %v4011
        %4125 = vmatpush1.msra.mxu0 %v4009
        %4126 = vmatprep.subr.mxu0 0.0
        %4127 = vmatpush1.msra.mxu0 0.0
        %4128 = vmatprep.subr.mxu0 0.0
        %4129 = vmatpush1.msra.mxu0 0.0
        %4130 = vmatprep.subr.mxu0 0.0
        %4131 = vmatpush1.msra.mxu0 0.0
        %4132 = vmatprep.subr.mxu0 0.0
        %4133 = vmatpush1.msra.mxu0 0.0
        %4134 = vmatprep.subr.mxu0 0.0
        %4135 = vmatpush1.msra.mxu0 0.0
        %4136 = vmatprep.subr.mxu0 0.0
        %4137 = vmatpush1.msra.mxu0 0.0
        %4138 = vmatprep.subr.mxu0 0.0
        %4139 = vmatpush1.msra.mxu0 0.0
        %4140 = vmatprep.subr.mxu0 0.0
        %4141 = vmatpush1.msra.mxu0 0.0
        %4142 = vmatprep.subr.mxu0 0.0
        %4143 = vmatpush1.msra.mxu0 0.0
        %4144 = vmatprep.subr.mxu0 0.0
        %4145 = vmatpush1.msra.mxu0 0.0
        %4146 = vmatprep.subr.mxu0 0.0
        %4147 = vmatpush1.msra.mxu0 0.0
        %4148 = vmatprep.subr.mxu0 0.0
        %4149 = vmatpush1.msra.mxu0 0.0
        %4150 = vmatprep.subr.mxu0 0.0
        %4151 = vmatpush1.msra.mxu0 0.0
        %4152 = vmatprep.subr.mxu0 0.0
        %4153 = vmatpush1.msra.mxu0 0.0
        %4154 = vmatprep.subr.mxu0 0.0
        %4155 = vmatpush1.msra.mxu0 0.0
        %4156 = vmatprep.subr.mxu0 0.0
        %4157 = vmatpush1.msra.mxu0 0.0
        %4158 = vmatprep.subr.mxu0 0.0
        %4159 = vmatpush1.msra.mxu0 0.0
        %4160 = vmatprep.subr.mxu0 0.0
        %4161 = vmatpush1.msra.mxu0 0.0
        %4162 = vmatprep.subr.mxu0 0.0
        %4163 = vmatpush1.msra.mxu0 0.0
        %4164 = vmatprep.subr.mxu0 0.0
        %4165 = vmatpush1.msra.mxu0 0.0
        %4166 = vmatprep.subr.mxu0 0.0
        %4167 = vmatpush1.msra.mxu0 0.0
        %4168 = vmatprep.subr.mxu0 0.0
        %4169 = vmatpush1.msra.mxu0 0.0
        %4170 = vmatprep.subr.mxu0 0.0
        %4171 = vmatpush1.msra.mxu0 0.0
        %4172 = vmatprep.subr.mxu0 0.0
        %4173 = vmatpush1.msra.mxu0 0.0
        %4174 = vmatprep.subr.mxu0 0.0
        %4175 = vmatpush1.msra.mxu0 0.0
        %4176 = vmatprep.subr.mxu0 0.0
        %4177 = vmatpush1.msra.mxu0 0.0
        %4178 = vmatprep.subr.mxu0 0.0
        %4179 = vmatpush1.msra.mxu0 0.0
        %4180 = vmatprep.subr.mxu0 0.0
        %4181 = vmatpush1.msra.mxu0 0.0
        %4182 = vmatprep.subr.mxu0 0.0
        %4183 = vmatpush1.msra.mxu0 0.0
        %4184 = vmatprep.subr.mxu0 0.0
        %4185 = vmatpush1.msra.mxu0 0.0
        %4186 = vmatprep.subr.mxu0 0.0
        %4187 = vmatpush1.msra.mxu0 0.0
        %4188 = vmatprep.mubr.f32.mxu0 0.0
        %4189 = vmatmul.mubr.f32.gmra.mrb[0].mxu0 %v4003
        %v4190 = vpop.f32.mrb[0].mxu0
        %v4191 = vadd.f32 0.0, %v4190
        %v4192 = vpop.f32.mrb[0].mxu0
        %v4193 = vadd.f32 0.0, %v4192
        %4194 = vdwg.mxu0
        %4195 = vmatprep.subr.mxu0 %v4015
        %4196 = vmatpush1.msra.mxu0 %v4013
        %4197 = vmatprep.subr.mxu0 0.0
        %4198 = vmatpush1.msra.mxu0 0.0
        %4199 = vmatprep.subr.mxu0 0.0
        %4200 = vmatpush1.msra.mxu0 0.0
        %4201 = vmatprep.subr.mxu0 0.0
        %4202 = vmatpush1.msra.mxu0 0.0
        %4203 = vmatprep.subr.mxu0 0.0
        %4204 = vmatpush1.msra.mxu0 0.0
        %4205 = vmatprep.subr.mxu0 0.0
        %4206 = vmatpush1.msra.mxu0 0.0
        %4207 = vmatprep.subr.mxu0 0.0
        %4208 = vmatpush1.msra.mxu0 0.0
        %4209 = vmatprep.subr.mxu0 0.0
        %4210 = vmatpush1.msra.mxu0 0.0
        %4211 = vmatprep.subr.mxu0 0.0
        %4212 = vmatpush1.msra.mxu0 0.0
        %4213 = vmatprep.subr.mxu0 0.0
        %4214 = vmatpush1.msra.mxu0 0.0
        %4215 = vmatprep.subr.mxu0 0.0
        %4216 = vmatpush1.msra.mxu0 0.0
        %4217 = vmatprep.subr.mxu0 0.0
        %4218 = vmatpush1.msra.mxu0 0.0
        %4219 = vmatprep.subr.mxu0 0.0
        %4220 = vmatpush1.msra.mxu0 0.0
        %4221 = vmatprep.subr.mxu0 0.0
        %4222 = vmatpush1.msra.mxu0 0.0
        %4223 = vmatprep.subr.mxu0 0.0
        %4224 = vmatpush1.msra.mxu0 0.0
        %4225 = vmatprep.subr.mxu0 0.0
        %4226 = vmatpush1.msra.mxu0 0.0
        %4227 = vmatprep.subr.mxu0 0.0
        %4228 = vmatpush1.msra.mxu0 0.0
        %4229 = vmatprep.subr.mxu0 0.0
        %4230 = vmatpush1.msra.mxu0 0.0
        %4231 = vmatprep.subr.mxu0 0.0
        %4232 = vmatpush1.msra.mxu0 0.0
        %4233 = vmatprep.subr.mxu0 0.0
        %4234 = vmatpush1.msra.mxu0 0.0
        %4235 = vmatprep.subr.mxu0 0.0
        %4236 = vmatpush1.msra.mxu0 0.0
        %4237 = vmatprep.subr.mxu0 0.0
        %4238 = vmatpush1.msra.mxu0 0.0
        %4239 = vmatprep.subr.mxu0 0.0
        %4240 = vmatpush1.msra.mxu0 0.0
        %4241 = vmatprep.subr.mxu0 0.0
        %4242 = vmatpush1.msra.mxu0 0.0
        %4243 = vmatprep.subr.mxu0 0.0
        %4244 = vmatpush1.msra.mxu0 0.0
        %4245 = vmatprep.subr.mxu0 0.0
        %4246 = vmatpush1.msra.mxu0 0.0
        %4247 = vmatprep.subr.mxu0 0.0
        %4248 = vmatpush1.msra.mxu0 0.0
        %4249 = vmatprep.subr.mxu0 0.0
        %4250 = vmatpush1.msra.mxu0 0.0
        %4251 = vmatprep.subr.mxu0 0.0
        %4252 = vmatpush1.msra.mxu0 0.0
        %4253 = vmatprep.subr.mxu0 0.0
        %4254 = vmatpush1.msra.mxu0 0.0
        %4255 = vmatprep.subr.mxu0 0.0
        %4256 = vmatpush1.msra.mxu0 0.0
        %4257 = vmatprep.subr.mxu0 0.0
        %4258 = vmatpush1.msra.mxu0 0.0
        %4259 = vmatprep.mubr.f32.mxu0 0.0
        %4260 = vmatmul.mubr.f32.gmra.mrb[0].mxu0 %v4003
        %v4261 = vpop.f32.mrb[0].mxu0
        %v4262 = vadd.f32 0.0, %v4261
        %v4263 = vpop.f32.mrb[0].mxu0
        %v4264 = vadd.f32 0.0, %v4263
        %4265 = vdwg.mxu0
        %4266 = vmatprep.subr.mxu0 %v4019
        %4267 = vmatpush1.msra.mxu0 %v4017
        %4268 = vmatprep.subr.mxu0 0.0
        %4269 = vmatpush1.msra.mxu0 0.0
        %4270 = vmatprep.subr.mxu0 0.0
        %4271 = vmatpush1.msra.mxu0 0.0
        %4272 = vmatprep.subr.mxu0 0.0
        %4273 = vmatpush1.msra.mxu0 0.0
        %4274 = vmatprep.subr.mxu0 0.0
        %4275 = vmatpush1.msra.mxu0 0.0
        %4276 = vmatprep.subr.mxu0 0.0
        %4277 = vmatpush1.msra.mxu0 0.0
        %4278 = vmatprep.subr.mxu0 0.0
        %4279 = vmatpush1.msra.mxu0 0.0
        %4280 = vmatprep.subr.mxu0 0.0
        %4281 = vmatpush1.msra.mxu0 0.0
        %4282 = vmatprep.subr.mxu0 0.0
        %4283 = vmatpush1.msra.mxu0 0.0
        %4284 = vmatprep.subr.mxu0 0.0
        %4285 = vmatpush1.msra.mxu0 0.0
        %4286 = vmatprep.subr.mxu0 0.0
        %4287 = vmatpush1.msra.mxu0 0.0
        %4288 = vmatprep.subr.mxu0 0.0
        %4289 = vmatpush1.msra.mxu0 0.0
        %4290 = vmatprep.subr.mxu0 0.0
        %4291 = vmatpush1.msra.mxu0 0.0
        %4292 = vmatprep.subr.mxu0 0.0
        %4293 = vmatpush1.msra.mxu0 0.0
        %4294 = vmatprep.subr.mxu0 0.0
        %4295 = vmatpush1.msra.mxu0 0.0
        %4296 = vmatprep.subr.mxu0 0.0
        %4297 = vmatpush1.msra.mxu0 0.0
        %4298 = vmatprep.subr.mxu0 0.0
        %4299 = vmatpush1.msra.mxu0 0.0
        %4300 = vmatprep.subr.mxu0 0.0
        %4301 = vmatpush1.msra.mxu0 0.0
        %4302 = vmatprep.subr.mxu0 0.0
        %4303 = vmatpush1.msra.mxu0 0.0
        %4304 = vmatprep.subr.mxu0 0.0
        %4305 = vmatpush1.msra.mxu0 0.0
        %4306 = vmatprep.subr.mxu0 0.0
        %4307 = vmatpush1.msra.mxu0 0.0
        %4308 = vmatprep.subr.mxu0 0.0
        %4309 = vmatpush1.msra.mxu0 0.0
        %4310 = vmatprep.subr.mxu0 0.0
        %4311 = vmatpush1.msra.mxu0 0.0
        %4312 = vmatprep.subr.mxu0 0.0
        %4313 = vmatpush1.msra.mxu0 0.0
        %4314 = vmatprep.subr.mxu0 0.0
        %4315 = vmatpush1.msra.mxu0 0.0
        %4316 = vmatprep.subr.mxu0 0.0
        %4317 = vmatpush1.msra.mxu0 0.0
        %4318 = vmatprep.subr.mxu0 0.0
        %4319 = vmatpush1.msra.mxu0 0.0
        %4320 = vmatprep.subr.mxu0 0.0
        %4321 = vmatpush1.msra.mxu0 0.0
        %4322 = vmatprep.subr.mxu0 0.0
        %4323 = vmatpush1.msra.mxu0 0.0
        %4324 = vmatprep.subr.mxu0 0.0
        %4325 = vmatpush1.msra.mxu0 0.0
        %4326 = vmatprep.subr.mxu0 0.0
        %4327 = vmatpush1.msra.mxu0 0.0
        %4328 = vmatprep.subr.mxu0 0.0
        %4329 = vmatpush1.msra.mxu0 0.0
        %4330 = vmatprep.mubr.f32.mxu0 0.0
        %4331 = vmatmul.mubr.f32.gmra.mrb[0].mxu0 %v4003
        %v4332 = vpop.f32.mrb[0].mxu0
        %v4333 = vadd.f32 0.0, %v4332
        %v4334 = vpop.f32.mrb[0].mxu0
        %v4335 = vadd.f32 0.0, %v4334
        %4336 = vdwg.mxu0
        %4337 = vmatprep.subr.mxu0 %v4023
        %4338 = vmatpush1.msra.mxu0 %v4021
        %4339 = vmatprep.subr.mxu0 0.0
        %4340 = vmatpush1.msra.mxu0 0.0
        %4341 = vmatprep.subr.mxu0 0.0
        %4342 = vmatpush1.msra.mxu0 0.0
        %4343 = vmatprep.subr.mxu0 0.0
        %4344 = vmatpush1.msra.mxu0 0.0
        %4345 = vmatprep.subr.mxu0 0.0
        %4346 = vmatpush1.msra.mxu0 0.0
        %4347 = vmatprep.subr.mxu0 0.0
        %4348 = vmatpush1.msra.mxu0 0.0
        %4349 = vmatprep.subr.mxu0 0.0
        %4350 = vmatpush1.msra.mxu0 0.0
        %4351 = vmatprep.subr.mxu0 0.0
        %4352 = vmatpush1.msra.mxu0 0.0
        %4353 = vmatprep.subr.mxu0 0.0
        %4354 = vmatpush1.msra.mxu0 0.0
        %4355 = vmatprep.subr.mxu0 0.0
        %4356 = vmatpush1.msra.mxu0 0.0
        %4357 = vmatprep.subr.mxu0 0.0
        %4358 = vmatpush1.msra.mxu0 0.0
        %4359 = vmatprep.subr.mxu0 0.0
        %4360 = vmatpush1.msra.mxu0 0.0
        %4361 = vmatprep.subr.mxu0 0.0
        %4362 = vmatpush1.msra.mxu0 0.0
        %4363 = vmatprep.subr.mxu0 0.0
        %4364 = vmatpush1.msra.mxu0 0.0
        %4365 = vmatprep.subr.mxu0 0.0
        %4366 = vmatpush1.msra.mxu0 0.0
        %4367 = vmatprep.subr.mxu0 0.0
        %4368 = vmatpush1.msra.mxu0 0.0
        %4369 = vmatprep.subr.mxu0 0.0
        %4370 = vmatpush1.msra.mxu0 0.0
        %4371 = vmatprep.subr.mxu0 0.0
        %4372 = vmatpush1.msra.mxu0 0.0
        %4373 = vmatprep.subr.mxu0 0.0
        %4374 = vmatpush1.msra.mxu0 0.0
        %4375 = vmatprep.subr.mxu0 0.0
        %4376 = vmatpush1.msra.mxu0 0.0
        %4377 = vmatprep.subr.mxu0 0.0
        %4378 = vmatpush1.msra.mxu0 0.0
        %4379 = vmatprep.subr.mxu0 0.0
        %4380 = vmatpush1.msra.mxu0 0.0
        %4381 = vmatprep.subr.mxu0 0.0
        %4382 = vmatpush1.msra.mxu0 0.0
        %4383 = vmatprep.subr.mxu0 0.0
        %4384 = vmatpush1.msra.mxu0 0.0
        %4385 = vmatprep.subr.mxu0 0.0
        %4386 = vmatpush1.msra.mxu0 0.0
        %4387 = vmatprep.subr.mxu0 0.0
        %4388 = vmatpush1.msra.mxu0 0.0
        %4389 = vmatprep.subr.mxu0 0.0
        %4390 = vmatpush1.msra.mxu0 0.0
        %4391 = vmatprep.subr.mxu0 0.0
        %4392 = vmatpush1.msra.mxu0 0.0
        %4393 = vmatprep.subr.mxu0 0.0
        %4394 = vmatpush1.msra.mxu0 0.0
        %4395 = vmatprep.subr.mxu0 0.0
        %4396 = vmatpush1.msra.mxu0 0.0
        %4397 = vmatprep.subr.mxu0 0.0
        %4398 = vmatpush1.msra.mxu0 0.0
        %4399 = vmatprep.subr.mxu0 0.0
        %4400 = vmatpush1.msra.mxu0 0.0
        %4401 = vmatprep.mubr.f32.mxu0 0.0
        %4402 = vmatmul.mubr.f32.gmra.mrb[0].mxu0 %v4003
        %v4403 = vpop.f32.mrb[0].mxu0
        %v4404 = vadd.f32 0.0, %v4403
        %v4405 = vpop.f32.mrb[0].mxu0
        %v4406 = vadd.f32 0.0, %v4405
        %4407 = vdwg.mxu0
        %4408 = vmatprep.subr.mxu0 %v4027
        %4409 = vmatpush1.msra.mxu0 %v4025
        %4410 = vmatprep.subr.mxu0 0.0
        %4411 = vmatpush1.msra.mxu0 0.0
        %4412 = vmatprep.subr.mxu0 0.0
        %4413 = vmatpush1.msra.mxu0 0.0
        %4414 = vmatprep.subr.mxu0 0.0
        %4415 = vmatpush1.msra.mxu0 0.0
        %4416 = vmatprep.subr.mxu0 0.0
        %4417 = vmatpush1.msra.mxu0 0.0
        %4418 = vmatprep.subr.mxu0 0.0
        %4419 = vmatpush1.msra.mxu0 0.0
        %4420 = vmatprep.subr.mxu0 0.0
        %4421 = vmatpush1.msra.mxu0 0.0
        %4422 = vmatprep.subr.mxu0 0.0
        %4423 = vmatpush1.msra.mxu0 0.0
        %4424 = vmatprep.subr.mxu0 0.0
        %4425 = vmatpush1.msra.mxu0 0.0
        %4426 = vmatprep.subr.mxu0 0.0
        %4427 = vmatpush1.msra.mxu0 0.0
        %4428 = vmatprep.subr.mxu0 0.0
        %4429 = vmatpush1.msra.mxu0 0.0
        %4430 = vmatprep.subr.mxu0 0.0
        %4431 = vmatpush1.msra.mxu0 0.0
        %4432 = vmatprep.subr.mxu0 0.0
        %4433 = vmatpush1.msra.mxu0 0.0
        %4434 = vmatprep.subr.mxu0 0.0
        %4435 = vmatpush1.msra.mxu0 0.0
        %4436 = vmatprep.subr.mxu0 0.0
        %4437 = vmatpush1.msra.mxu0 0.0
        %4438 = vmatprep.subr.mxu0 0.0
        %4439 = vmatpush1.msra.mxu0 0.0
        %4440 = vmatprep.subr.mxu0 0.0
        %4441 = vmatpush1.msra.mxu0 0.0
        %4442 = vmatprep.subr.mxu0 0.0
        %4443 = vmatpush1.msra.mxu0 0.0
        %4444 = vmatprep.subr.mxu0 0.0
        %4445 = vmatpush1.msra.mxu0 0.0
        %4446 = vmatprep.subr.mxu0 0.0
        %4447 = vmatpush1.msra.mxu0 0.0
        %4448 = vmatprep.subr.mxu0 0.0
        %4449 = vmatpush1.msra.mxu0 0.0
        %4450 = vmatprep.subr.mxu0 0.0
        %4451 = vmatpush1.msra.mxu0 0.0
        %4452 = vmatprep.subr.mxu0 0.0
        %4453 = vmatpush1.msra.mxu0 0.0
        %4454 = vmatprep.subr.mxu0 0.0
        %4455 = vmatpush1.msra.mxu0 0.0
        %4456 = vmatprep.subr.mxu0 0.0
        %4457 = vmatpush1.msra.mxu0 0.0
        %4458 = vmatprep.subr.mxu0 0.0
        %4459 = vmatpush1.msra.mxu0 0.0
        %4460 = vmatprep.subr.mxu0 0.0
        %4461 = vmatpush1.msra.mxu0 0.0
        %4462 = vmatprep.subr.mxu0 0.0
        %4463 = vmatpush1.msra.mxu0 0.0
        %4464 = vmatprep.subr.mxu0 0.0
        %4465 = vmatpush1.msra.mxu0 0.0
        %4466 = vmatprep.subr.mxu0 0.0
        %4467 = vmatpush1.msra.mxu0 0.0
        %4468 = vmatprep.subr.mxu0 0.0
        %4469 = vmatpush1.msra.mxu0 0.0
        %4470 = vmatprep.subr.mxu0 0.0
        %4471 = vmatpush1.msra.mxu0 0.0
        %4472 = vmatprep.mubr.f32.mxu0 0.0
        %4473 = vmatmul.mubr.f32.gmra.mrb[0].mxu0 %v4003
        %v4474 = vpop.f32.mrb[0].mxu0
        %v4475 = vadd.f32 0.0, %v4474
        %v4476 = vpop.f32.mrb[0].mxu0
        %v4477 = vadd.f32 0.0, %v4476
        %4478 = vdwg.mxu0
        %4479 = vmatprep.subr.mxu0 %v4031
        %4480 = vmatpush1.msra.mxu0 %v4029
        %4481 = vmatprep.subr.mxu0 0.0
        %4482 = vmatpush1.msra.mxu0 0.0
        %4483 = vmatprep.subr.mxu0 0.0
        %4484 = vmatpush1.msra.mxu0 0.0
        %4485 = vmatprep.subr.mxu0 0.0
        %4486 = vmatpush1.msra.mxu0 0.0
        %4487 = vmatprep.subr.mxu0 0.0
        %4488 = vmatpush1.msra.mxu0 0.0
        %4489 = vmatprep.subr.mxu0 0.0
        %4490 = vmatpush1.msra.mxu0 0.0
        %4491 = vmatprep.subr.mxu0 0.0
        %4492 = vmatpush1.msra.mxu0 0.0
        %4493 = vmatprep.subr.mxu0 0.0
        %4494 = vmatpush1.msra.mxu0 0.0
        %4495 = vmatprep.subr.mxu0 0.0
        %4496 = vmatpush1.msra.mxu0 0.0
        %4497 = vmatprep.subr.mxu0 0.0
        %4498 = vmatpush1.msra.mxu0 0.0
        %4499 = vmatprep.subr.mxu0 0.0
        %4500 = vmatpush1.msra.mxu0 0.0
        %4501 = vmatprep.subr.mxu0 0.0
        %4502 = vmatpush1.msra.mxu0 0.0
        %4503 = vmatprep.subr.mxu0 0.0
        %4504 = vmatpush1.msra.mxu0 0.0
        %4505 = vmatprep.subr.mxu0 0.0
        %4506 = vmatpush1.msra.mxu0 0.0
        %4507 = vmatprep.subr.mxu0 0.0
        %4508 = vmatpush1.msra.mxu0 0.0
        %4509 = vmatprep.subr.mxu0 0.0
        %4510 = vmatpush1.msra.mxu0 0.0
        %4511 = vmatprep.subr.mxu0 0.0
        %4512 = vmatpush1.msra.mxu0 0.0
        %4513 = vmatprep.subr.mxu0 0.0
        %4514 = vmatpush1.msra.mxu0 0.0
        %4515 = vmatprep.subr.mxu0 0.0
        %4516 = vmatpush1.msra.mxu0 0.0
        %4517 = vmatprep.subr.mxu0 0.0
        %4518 = vmatpush1.msra.mxu0 0.0
        %4519 = vmatprep.subr.mxu0 0.0
        %4520 = vmatpush1.msra.mxu0 0.0
        %4521 = vmatprep.subr.mxu0 0.0
        %4522 = vmatpush1.msra.mxu0 0.0
        %4523 = vmatprep.subr.mxu0 0.0
        %4524 = vmatpush1.msra.mxu0 0.0
        %4525 = vmatprep.subr.mxu0 0.0
        %4526 = vmatpush1.msra.mxu0 0.0
        %4527 = vmatprep.subr.mxu0 0.0
        %4528 = vmatpush1.msra.mxu0 0.0
        %4529 = vmatprep.subr.mxu0 0.0
        %4530 = vmatpush1.msra.mxu0 0.0
        %4531 = vmatprep.subr.mxu0 0.0
        %4532 = vmatpush1.msra.mxu0 0.0
        %4533 = vmatprep.subr.mxu0 0.0
        %4534 = vmatpush1.msra.mxu0 0.0
        %4535 = vmatprep.subr.mxu0 0.0
        %4536 = vmatpush1.msra.mxu0 0.0
        %4537 = vmatprep.subr.mxu0 0.0
        %4538 = vmatpush1.msra.mxu0 0.0
        %4539 = vmatprep.subr.mxu0 0.0
        %4540 = vmatpush1.msra.mxu0 0.0
        %4541 = vmatprep.subr.mxu0 0.0
        %4542 = vmatpush1.msra.mxu0 0.0
        %4543 = vmatprep.mubr.f32.mxu0 0.0
        %4544 = vmatmul.mubr.f32.gmra.mrb[0].mxu0 %v4003
        %v4545 = vpop.f32.mrb[0].mxu0
        %v4546 = vadd.f32 0.0, %v4545
        %v4547 = vpop.f32.mrb[0].mxu0
        %v4548 = vadd.f32 0.0, %v4547
        %4549 = vdwg.mxu0
        %4550 = vmatprep.subr.mxu0 %v4035
        %4551 = vmatpush1.msra.mxu0 %v4033
        %4552 = vmatprep.subr.mxu0 0.0
        %4553 = vmatpush1.msra.mxu0 0.0
        %4554 = vmatprep.subr.mxu0 0.0
        %4555 = vmatpush1.msra.mxu0 0.0
        %4556 = vmatprep.subr.mxu0 0.0
        %4557 = vmatpush1.msra.mxu0 0.0
        %4558 = vmatprep.subr.mxu0 0.0
        %4559 = vmatpush1.msra.mxu0 0.0
        %4560 = vmatprep.subr.mxu0 0.0
        %4561 = vmatpush1.msra.mxu0 0.0
        %4562 = vmatprep.subr.mxu0 0.0
        %4563 = vmatpush1.msra.mxu0 0.0
        %4564 = vmatprep.subr.mxu0 0.0
        %4565 = vmatpush1.msra.mxu0 0.0
        %4566 = vmatprep.subr.mxu0 0.0
        %4567 = vmatpush1.msra.mxu0 0.0
        %4568 = vmatprep.subr.mxu0 0.0
        %4569 = vmatpush1.msra.mxu0 0.0
        %4570 = vmatprep.subr.mxu0 0.0
        %4571 = vmatpush1.msra.mxu0 0.0
        %4572 = vmatprep.subr.mxu0 0.0
        %4573 = vmatpush1.msra.mxu0 0.0
        %4574 = vmatprep.subr.mxu0 0.0
        %4575 = vmatpush1.msra.mxu0 0.0
        %4576 = vmatprep.subr.mxu0 0.0
        %4577 = vmatpush1.msra.mxu0 0.0
        %4578 = vmatprep.subr.mxu0 0.0
        %4579 = vmatpush1.msra.mxu0 0.0
        %4580 = vmatprep.subr.mxu0 0.0
        %4581 = vmatpush1.msra.mxu0 0.0
        %4582 = vmatprep.subr.mxu0 0.0
        %4583 = vmatpush1.msra.mxu0 0.0
        %4584 = vmatprep.subr.mxu0 0.0
        %4585 = vmatpush1.msra.mxu0 0.0
        %4586 = vmatprep.subr.mxu0 0.0
        %4587 = vmatpush1.msra.mxu0 0.0
        %4588 = vmatprep.subr.mxu0 0.0
        %4589 = vmatpush1.msra.mxu0 0.0
        %4590 = vmatprep.subr.mxu0 0.0
        %4591 = vmatpush1.msra.mxu0 0.0
        %4592 = vmatprep.subr.mxu0 0.0
        %4593 = vmatpush1.msra.mxu0 0.0
        %4594 = vmatprep.subr.mxu0 0.0
        %4595 = vmatpush1.msra.mxu0 0.0
        %4596 = vmatprep.subr.mxu0 0.0
        %4597 = vmatpush1.msra.mxu0 0.0
        %4598 = vmatprep.subr.mxu0 0.0
        %4599 = vmatpush1.msra.mxu0 0.0
        %4600 = vmatprep.subr.mxu0 0.0
        %4601 = vmatpush1.msra.mxu0 0.0
        %4602 = vmatprep.subr.mxu0 0.0
        %4603 = vmatpush1.msra.mxu0 0.0
        %4604 = vmatprep.subr.mxu0 0.0
        %4605 = vmatpush1.msra.mxu0 0.0
        %4606 = vmatprep.subr.mxu0 0.0
        %4607 = vmatpush1.msra.mxu0 0.0
        %4608 = vmatprep.subr.mxu0 0.0
        %4609 = vmatpush1.msra.mxu0 0.0
        %4610 = vmatprep.subr.mxu0 0.0
        %4611 = vmatpush1.msra.mxu0 0.0
        %4612 = vmatprep.subr.mxu0 0.0
        %4613 = vmatpush1.msra.mxu0 0.0
        %4614 = vmatprep.mubr.f32.mxu0 0.0
        %4615 = vmatmul.mubr.f32.gmra.mrb[0].mxu0 %v4003
        %v4616 = vpop.f32.mrb[0].mxu0
        %v4617 = vadd.f32 0.0, %v4616
        %v4618 = vpop.f32.mrb[0].mxu0
        %v4619 = vadd.f32 0.0, %v4618
        %4620 = vdwg.mxu0
        %4621 = vmatprep.subr.mxu0 %v4039
        %4622 = vmatpush1.msra.mxu0 %v4037
        %4623 = vmatprep.subr.mxu0 0.0
        %4624 = vmatpush1.msra.mxu0 0.0
        %4625 = vmatprep.subr.mxu0 0.0
        %4626 = vmatpush1.msra.mxu0 0.0
        %4627 = vmatprep.subr.mxu0 0.0
        %4628 = vmatpush1.msra.mxu0 0.0
        %4629 = vmatprep.subr.mxu0 0.0
        %4630 = vmatpush1.msra.mxu0 0.0
        %4631 = vmatprep.subr.mxu0 0.0
        %4632 = vmatpush1.msra.mxu0 0.0
        %4633 = vmatprep.subr.mxu0 0.0
        %4634 = vmatpush1.msra.mxu0 0.0
        %4635 = vmatprep.subr.mxu0 0.0
        %4636 = vmatpush1.msra.mxu0 0.0
        %4637 = vmatprep.subr.mxu0 0.0
        %4638 = vmatpush1.msra.mxu0 0.0
        %4639 = vmatprep.subr.mxu0 0.0
        %4640 = vmatpush1.msra.mxu0 0.0
        %4641 = vmatprep.subr.mxu0 0.0
        %4642 = vmatpush1.msra.mxu0 0.0
        %4643 = vmatprep.subr.mxu0 0.0
        %4644 = vmatpush1.msra.mxu0 0.0
        %4645 = vmatprep.subr.mxu0 0.0
        %4646 = vmatpush1.msra.mxu0 0.0
        %4647 = vmatprep.subr.mxu0 0.0
        %4648 = vmatpush1.msra.mxu0 0.0
        %4649 = vmatprep.subr.mxu0 0.0
        %4650 = vmatpush1.msra.mxu0 0.0
        %4651 = vmatprep.subr.mxu0 0.0
        %4652 = vmatpush1.msra.mxu0 0.0
        %4653 = vmatprep.subr.mxu0 0.0
        %4654 = vmatpush1.msra.mxu0 0.0
        %4655 = vmatprep.subr.mxu0 0.0
        %4656 = vmatpush1.msra.mxu0 0.0
        %4657 = vmatprep.subr.mxu0 0.0
        %4658 = vmatpush1.msra.mxu0 0.0
        %4659 = vmatprep.subr.mxu0 0.0
        %4660 = vmatpush1.msra.mxu0 0.0
        %4661 = vmatprep.subr.mxu0 0.0
        %4662 = vmatpush1.msra.mxu0 0.0
        %4663 = vmatprep.subr.mxu0 0.0
        %4664 = vmatpush1.msra.mxu0 0.0
        %4665 = vmatprep.subr.mxu0 0.0
        %4666 = vmatpush1.msra.mxu0 0.0
        %4667 = vmatprep.subr.mxu0 0.0
        %4668 = vmatpush1.msra.mxu0 0.0
        %4669 = vmatprep.subr.mxu0 0.0
        %4670 = vmatpush1.msra.mxu0 0.0
        %4671 = vmatprep.subr.mxu0 0.0
        %4672 = vmatpush1.msra.mxu0 0.0
        %4673 = vmatprep.subr.mxu0 0.0
        %4674 = vmatpush1.msra.mxu0 0.0
        %4675 = vmatprep.subr.mxu0 0.0
        %4676 = vmatpush1.msra.mxu0 0.0
        %4677 = vmatprep.subr.mxu0 0.0
        %4678 = vmatpush1.msra.mxu0 0.0
        %4679 = vmatprep.subr.mxu0 0.0
        %4680 = vmatpush1.msra.mxu0 0.0
        %4681 = vmatprep.subr.mxu0 0.0
        %4682 = vmatpush1.msra.mxu0 0.0
        %4683 = vmatprep.subr.mxu0 0.0
        %4684 = vmatpush1.msra.mxu0 0.0
        %4685 = vmatprep.mubr.f32.mxu0 0.0
        %4686 = vmatmul.mubr.f32.gmra.mrb[0].mxu0 %v4003
        %v4687 = vpop.f32.mrb[0].mxu0
        %v4688 = vadd.f32 0.0, %v4687
        %v4689 = vpop.f32.mrb[0].mxu0
        %v4690 = vadd.f32 0.0, %v4689
        %4691 = vdwg.mxu0
        %4692 = vmatprep.subr.mxu0 %v4043
        %4693 = vmatpush1.msra.mxu0 %v4041
        %4694 = vmatprep.subr.mxu0 0.0
        %4695 = vmatpush1.msra.mxu0 0.0
        %4696 = vmatprep.subr.mxu0 0.0
        %4697 = vmatpush1.msra.mxu0 0.0
        %4698 = vmatprep.subr.mxu0 0.0
        %4699 = vmatpush1.msra.mxu0 0.0
        %4700 = vmatprep.subr.mxu0 0.0
        %4701 = vmatpush1.msra.mxu0 0.0
        %4702 = vmatprep.subr.mxu0 0.0
        %4703 = vmatpush1.msra.mxu0 0.0
        %4704 = vmatprep.subr.mxu0 0.0
        %4705 = vmatpush1.msra.mxu0 0.0
        %4706 = vmatprep.subr.mxu0 0.0
        %4707 = vmatpush1.msra.mxu0 0.0
        %4708 = vmatprep.subr.mxu0 0.0
        %4709 = vmatpush1.msra.mxu0 0.0
        %4710 = vmatprep.subr.mxu0 0.0
        %4711 = vmatpush1.msra.mxu0 0.0
        %4712 = vmatprep.subr.mxu0 0.0
        %4713 = vmatpush1.msra.mxu0 0.0
        %4714 = vmatprep.subr.mxu0 0.0
        %4715 = vmatpush1.msra.mxu0 0.0
        %4716 = vmatprep.subr.mxu0 0.0
        %4717 = vmatpush1.msra.mxu0 0.0
        %4718 = vmatprep.subr.mxu0 0.0
        %4719 = vmatpush1.msra.mxu0 0.0
        %4720 = vmatprep.subr.mxu0 0.0
        %4721 = vmatpush1.msra.mxu0 0.0
        %4722 = vmatprep.subr.mxu0 0.0
        %4723 = vmatpush1.msra.mxu0 0.0
        %4724 = vmatprep.subr.mxu0 0.0
        %4725 = vmatpush1.msra.mxu0 0.0
        %4726 = vmatprep.subr.mxu0 0.0
        %4727 = vmatpush1.msra.mxu0 0.0
        %4728 = vmatprep.subr.mxu0 0.0
        %4729 = vmatpush1.msra.mxu0 0.0
        %4730 = vmatprep.subr.mxu0 0.0
        %4731 = vmatpush1.msra.mxu0 0.0
        %4732 = vmatprep.subr.mxu0 0.0
        %4733 = vmatpush1.msra.mxu0 0.0
        %4734 = vmatprep.subr.mxu0 0.0
        %4735 = vmatpush1.msra.mxu0 0.0
        %4736 = vmatprep.subr.mxu0 0.0
        %4737 = vmatpush1.msra.mxu0 0.0
        %4738 = vmatprep.subr.mxu0 0.0
        %4739 = vmatpush1.msra.mxu0 0.0
        %4740 = vmatprep.subr.mxu0 0.0
        %4741 = vmatpush1.msra.mxu0 0.0
        %4742 = vmatprep.subr.mxu0 0.0
        %4743 = vmatpush1.msra.mxu0 0.0
        %4744 = vmatprep.subr.mxu0 0.0
        %4745 = vmatpush1.msra.mxu0 0.0
        %4746 = vmatprep.subr.mxu0 0.0
        %4747 = vmatpush1.msra.mxu0 0.0
        %4748 = vmatprep.subr.mxu0 0.0
        %4749 = vmatpush1.msra.mxu0 0.0
        %4750 = vmatprep.subr.mxu0 0.0
        %4751 = vmatpush1.msra.mxu0 0.0
        %4752 = vmatprep.subr.mxu0 0.0
        %4753 = vmatpush1.msra.mxu0 0.0
        %4754 = vmatprep.subr.mxu0 0.0
        %4755 = vmatpush1.msra.mxu0 0.0
        %4756 = vmatprep.mubr.f32.mxu0 0.0
        %4757 = vmatmul.mubr.f32.gmra.mrb[0].mxu0 %v4003
        %v4758 = vpop.f32.mrb[0].mxu0
        %v4759 = vadd.f32 0.0, %v4758
        %v4760 = vpop.f32.mrb[0].mxu0
        %v4761 = vadd.f32 0.0, %v4760
        %4762 = vdwg.mxu0
        %4763 = vmatprep.subr.mxu0 %v4047
        %4764 = vmatpush1.msra.mxu0 %v4045
        %4765 = vmatprep.subr.mxu0 0.0
        %4766 = vmatpush1.msra.mxu0 0.0
        %4767 = vmatprep.subr.mxu0 0.0
        %4768 = vmatpush1.msra.mxu0 0.0
        %4769 = vmatprep.subr.mxu0 0.0
        %4770 = vmatpush1.msra.mxu0 0.0
        %4771 = vmatprep.subr.mxu0 0.0
        %4772 = vmatpush1.msra.mxu0 0.0
        %4773 = vmatprep.subr.mxu0 0.0
        %4774 = vmatpush1.msra.mxu0 0.0
        %4775 = vmatprep.subr.mxu0 0.0
        %4776 = vmatpush1.msra.mxu0 0.0
        %4777 = vmatprep.subr.mxu0 0.0
        %4778 = vmatpush1.msra.mxu0 0.0
        %4779 = vmatprep.subr.mxu0 0.0
        %4780 = vmatpush1.msra.mxu0 0.0
        %4781 = vmatprep.subr.mxu0 0.0
        %4782 = vmatpush1.msra.mxu0 0.0
        %4783 = vmatprep.subr.mxu0 0.0
        %4784 = vmatpush1.msra.mxu0 0.0
        %4785 = vmatprep.subr.mxu0 0.0
        %4786 = vmatpush1.msra.mxu0 0.0
        %4787 = vmatprep.subr.mxu0 0.0
        %4788 = vmatpush1.msra.mxu0 0.0
        %4789 = vmatprep.subr.mxu0 0.0
        %4790 = vmatpush1.msra.mxu0 0.0
        %4791 = vmatprep.subr.mxu0 0.0
        %4792 = vmatpush1.msra.mxu0 0.0
        %4793 = vmatprep.subr.mxu0 0.0
        %4794 = vmatpush1.msra.mxu0 0.0
        %4795 = vmatprep.subr.mxu0 0.0
        %4796 = vmatpush1.msra.mxu0 0.0
        %4797 = vmatprep.subr.mxu0 0.0
        %4798 = vmatpush1.msra.mxu0 0.0
        %4799 = vmatprep.subr.mxu0 0.0
        %4800 = vmatpush1.msra.mxu0 0.0
        %4801 = vmatprep.subr.mxu0 0.0
        %4802 = vmatpush1.msra.mxu0 0.0
        %4803 = vmatprep.subr.mxu0 0.0
        %4804 = vmatpush1.msra.mxu0 0.0
        %4805 = vmatprep.subr.mxu0 0.0
        %4806 = vmatpush1.msra.mxu0 0.0
        %4807 = vmatprep.subr.mxu0 0.0
        %4808 = vmatpush1.msra.mxu0 0.0
        %4809 = vmatprep.subr.mxu0 0.0
        %4810 = vmatpush1.msra.mxu0 0.0
        %4811 = vmatprep.subr.mxu0 0.0
        %4812 = vmatpush1.msra.mxu0 0.0
        %4813 = vmatprep.subr.mxu0 0.0
        %4814 = vmatpush1.msra.mxu0 0.0
        %4815 = vmatprep.subr.mxu0 0.0
        %4816 = vmatpush1.msra.mxu0 0.0
        %4817 = vmatprep.subr.mxu0 0.0
        %4818 = vmatpush1.msra.mxu0 0.0
        %4819 = vmatprep.subr.mxu0 0.0
        %4820 = vmatpush1.msra.mxu0 0.0
        %4821 = vmatprep.subr.mxu0 0.0
        %4822 = vmatpush1.msra.mxu0 0.0
        %4823 = vmatprep.subr.mxu0 0.0
        %4824 = vmatpush1.msra.mxu0 0.0
        %4825 = vmatprep.subr.mxu0 0.0
        %4826 = vmatpush1.msra.mxu0 0.0
        %4827 = vmatprep.mubr.f32.mxu0 0.0
        %4828 = vmatmul.mubr.f32.gmra.mrb[0].mxu0 %v4003
        %v4829 = vpop.f32.mrb[0].mxu0
        %v4830 = vadd.f32 0.0, %v4829
        %v4831 = vpop.f32.mrb[0].mxu0
        %v4832 = vadd.f32 0.0, %v4831
        %4833 = vdwg.mxu0
        %4834 = vmatprep.subr.mxu0 %v4051
        %4835 = vmatpush1.msra.mxu0 %v4049
        %4836 = vmatprep.subr.mxu0 0.0
        %4837 = vmatpush1.msra.mxu0 0.0
        %4838 = vmatprep.subr.mxu0 0.0
        %4839 = vmatpush1.msra.mxu0 0.0
        %4840 = vmatprep.subr.mxu0 0.0
        %4841 = vmatpush1.msra.mxu0 0.0
        %4842 = vmatprep.subr.mxu0 0.0
        %4843 = vmatpush1.msra.mxu0 0.0
        %4844 = vmatprep.subr.mxu0 0.0
        %4845 = vmatpush1.msra.mxu0 0.0
        %4846 = vmatprep.subr.mxu0 0.0
        %4847 = vmatpush1.msra.mxu0 0.0
        %4848 = vmatprep.subr.mxu0 0.0
        %4849 = vmatpush1.msra.mxu0 0.0
        %4850 = vmatprep.subr.mxu0 0.0
        %4851 = vmatpush1.msra.mxu0 0.0
        %4852 = vmatprep.subr.mxu0 0.0
        %4853 = vmatpush1.msra.mxu0 0.0
        %4854 = vmatprep.subr.mxu0 0.0
        %4855 = vmatpush1.msra.mxu0 0.0
        %4856 = vmatprep.subr.mxu0 0.0
        %4857 = vmatpush1.msra.mxu0 0.0
        %4858 = vmatprep.subr.mxu0 0.0
        %4859 = vmatpush1.msra.mxu0 0.0
        %4860 = vmatprep.subr.mxu0 0.0
        %4861 = vmatpush1.msra.mxu0 0.0
        %4862 = vmatprep.subr.mxu0 0.0
        %4863 = vmatpush1.msra.mxu0 0.0
        %4864 = vmatprep.subr.mxu0 0.0
        %4865 = vmatpush1.msra.mxu0 0.0
        %4866 = vmatprep.subr.mxu0 0.0
        %4867 = vmatpush1.msra.mxu0 0.0
        %4868 = vmatprep.subr.mxu0 0.0
        %4869 = vmatpush1.msra.mxu0 0.0
        %4870 = vmatprep.subr.mxu0 0.0
        %4871 = vmatpush1.msra.mxu0 0.0
        %4872 = vmatprep.subr.mxu0 0.0
        %4873 = vmatpush1.msra.mxu0 0.0
        %4874 = vmatprep.subr.mxu0 0.0
        %4875 = vmatpush1.msra.mxu0 0.0
        %4876 = vmatprep.subr.mxu0 0.0
        %4877 = vmatpush1.msra.mxu0 0.0
        %4878 = vmatprep.subr.mxu0 0.0
        %4879 = vmatpush1.msra.mxu0 0.0
        %4880 = vmatprep.subr.mxu0 0.0
        %4881 = vmatpush1.msra.mxu0 0.0
        %4882 = vmatprep.subr.mxu0 0.0
        %4883 = vmatpush1.msra.mxu0 0.0
        %4884 = vmatprep.subr.mxu0 0.0
        %4885 = vmatpush1.msra.mxu0 0.0
        %4886 = vmatprep.subr.mxu0 0.0
        %4887 = vmatpush1.msra.mxu0 0.0
        %4888 = vmatprep.subr.mxu0 0.0
        %4889 = vmatpush1.msra.mxu0 0.0
        %4890 = vmatprep.subr.mxu0 0.0
        %4891 = vmatpush1.msra.mxu0 0.0
        %4892 = vmatprep.subr.mxu0 0.0
        %4893 = vmatpush1.msra.mxu0 0.0
        %4894 = vmatprep.subr.mxu0 0.0
        %4895 = vmatpush1.msra.mxu0 0.0
        %4896 = vmatprep.subr.mxu0 0.0
        %4897 = vmatpush1.msra.mxu0 0.0
        %4898 = vmatprep.mubr.f32.mxu0 0.0
        %4899 = vmatmul.mubr.f32.gmra.mrb[0].mxu0 %v4003
        %v4900 = vpop.f32.mrb[0].mxu0
        %v4901 = vadd.f32 0.0, %v4900
        %v4902 = vpop.f32.mrb[0].mxu0
        %v4903 = vadd.f32 0.0, %v4902
        %4904 = vdwg.mxu0
        %v4905 = vadd.f32 %v3940, %v4120
        %v4906 = vadd.f32 %v3941, %v4122
        %v4907 = vadd.f32 %v3942, %v4191
        %v4908 = vadd.f32 %v3943, %v4193
        %v4909 = vadd.f32 %v3944, %v4262
        %v4910 = vadd.f32 %v3945, %v4264
        %v4911 = vadd.f32 %v3946, %v4333
        %v4912 = vadd.f32 %v3947, %v4335
        %v4913 = vadd.f32 %v3948, %v4404
        %v4914 = vadd.f32 %v3949, %v4406
        %v4915 = vadd.f32 %v3950, %v4475
        %v4916 = vadd.f32 %v3951, %v4477
        %v4917 = vadd.f32 %v3952, %v4546
        %v4918 = vadd.f32 %v3953, %v4548
        %v4919 = vadd.f32 %v3954, %v4617
        %v4920 = vadd.f32 %v3955, %v4619
        %v4921 = vadd.f32 %v3956, %v4688
        %v4922 = vadd.f32 %v3957, %v4690
        %v4923 = vadd.f32 %v3958, %v4759
        %v4924 = vadd.f32 %v3959, %v4761
        %v4925 = vadd.f32 %v3960, %v4830
        %v4926 = vadd.f32 %v3961, %v4832
        %v4927 = vadd.f32 %v3962, %v4901
        %v4928 = vadd.f32 %v3963, %v4903
        %v4929 = vld [vmem:[%s2] sm:$0xff]
        %4931 = vset.pattern.permute.xlu0 0
        %4932 = vperm.xlu0 %4931, %v4929
        %v4933 = vpop.permute.xlu0 %4932
        %v4935 = vadd.f32 %v4905, %v4933
        %v4936 = vadd.f32 %v4906, %v4933
        %v4937 = vadd.f32 %v4907, %v4933
        %v4938 = vadd.f32 %v4908, %v4933
        %v4939 = vadd.f32 %v4909, %v4933
        %v4940 = vadd.f32 %v4910, %v4933
        %v4941 = vadd.f32 %v4911, %v4933
        %v4942 = vadd.f32 %v4912, %v4933
        %v4943 = vadd.f32 %v4913, %v4933
        %v4944 = vadd.f32 %v4914, %v4933
        %v4945 = vadd.f32 %v4915, %v4933
        %v4946 = vadd.f32 %v4916, %v4933
        %v4947 = vadd.f32 %v4917, %v4933
        %v4948 = vadd.f32 %v4918, %v4933
        %v4949 = vadd.f32 %v4919, %v4933
        %v4950 = vadd.f32 %v4920, %v4933
        %v4951 = vadd.f32 %v4921, %v4933
        %v4952 = vadd.f32 %v4922, %v4933
        %v4953 = vadd.f32 %v4923, %v4933
        %v4954 = vadd.f32 %v4924, %v4933
        %v4955 = vadd.f32 %v4925, %v4933
        %v4956 = vadd.f32 %v4926, %v4933
        %v4957 = vadd.f32 %v4927, %v4933
        %v4958 = vadd.f32 %v4928, %v4933
        %v4959 = vmax.f32 %v4935, %v4937
        %v4960 = vmax.f32 %v4936, %v4938
        %v4961 = vmax.f32 %v4959, %v4939
        %v4962 = vmax.f32 %v4960, %v4940
        %v4963 = vmax.f32 %v4961, %v4941
        %v4964 = vmax.f32 %v4962, %v4942
        %v4965 = vmax.f32 %v4963, %v4943
        %v4966 = vmax.f32 %v4964, %v4944
        %v4967 = vmax.f32 %v4965, %v4945
        %v4968 = vmax.f32 %v4966, %v4946
        %v4969 = vmax.f32 %v4967, %v4947
        %v4970 = vmax.f32 %v4968, %v4948
        %v4971 = vmax.f32 %v4969, %v4949
        %v4972 = vmax.f32 %v4970, %v4950
        %v4973 = vmax.f32 %v4971, %v4951
        %v4974 = vmax.f32 %v4972, %v4952
        %v4975 = vmax.f32 %v4973, %v4953
        %v4976 = vmax.f32 %v4974, %v4954
        %v4977 = vmax.f32 %v4975, %v4955
        %v4978 = vmax.f32 %v4976, %v4956
        %v4979 = vmax.f32 %v4977, %v4957
        %v4980 = vmax.f32 %v4978, %v4958
        %v4981 = vrot.slane %v4979, 4
        %v4982 = vmax.f32 %v4979, %v4981
        %v4983 = vrot.slane %v4982, 2
        %v4984 = vmax.f32 %v4982, %v4983
        %v4985 = vrot.slane %v4984, 1
        %v4986 = vmax.f32 %v4984, %v4985
        %v4987 = vrot.slane %v4980, 4
        %v4988 = vmax.f32 %v4980, %v4987
        %v4989 = vrot.slane %v4988, 2
        %v4990 = vmax.f32 %v4988, %v4989
        %v4991 = vrot.slane %v4990, 1
        %v4992 = vmax.f32 %v4990, %v4991
        %v4993 = vsub.f32 %v4935, %v4986
        %v4994 = vsub.f32 %v4936, %v4992
        %v4995 = vmul.f32 %v4993, 1.442695
        %v4996 = vpow.pop %v4995
        %v4997 = vmul.f32 %v4994, 1.442695
        %v4998 = vpow.pop %v4997
        %v4999 = vsub.f32 %v4937, %v4986
        %v5000 = vsub.f32 %v4938, %v4992
        %v5001 = vmul.f32 %v4999, 1.442695
        %v5002 = vpow.pop %v5001
        %v5003 = vmul.f32 %v5000, 1.442695
        %v5004 = vpow.pop %v5003
        %v5005 = vadd.f32 %v4996, %v5002
        %v5006 = vadd.f32 %v4998, %v5004
        %v5007 = vsub.f32 %v4939, %v4986
        %v5008 = vsub.f32 %v4940, %v4992
        %v5009 = vmul.f32 %v5007, 1.442695
        %v5010 = vpow.pop %v5009
        %v5011 = vmul.f32 %v5008, 1.442695
        %v5012 = vpow.pop %v5011
        %v5013 = vadd.f32 %v5005, %v5010
        %v5014 = vadd.f32 %v5006, %v5012
        %v5015 = vsub.f32 %v4941, %v4986
        %v5016 = vsub.f32 %v4942, %v4992
        %v5017 = vmul.f32 %v5015, 1.442695
        %v5018 = vpow.pop %v5017
        %v5019 = vmul.f32 %v5016, 1.442695
        %v5020 = vpow.pop %v5019
        %v5021 = vadd.f32 %v5013, %v5018
        %v5022 = vadd.f32 %v5014, %v5020
        %v5023 = vsub.f32 %v4943, %v4986
        %v5024 = vsub.f32 %v4944, %v4992
        %v5025 = vmul.f32 %v5023, 1.442695
        %v5026 = vpow.pop %v5025
        %v5027 = vmul.f32 %v5024, 1.442695
        %v5028 = vpow.pop %v5027
        %v5029 = vadd.f32 %v5021, %v5026
        %v5030 = vadd.f32 %v5022, %v5028
        %v5031 = vsub.f32 %v4945, %v4986
        %v5032 = vsub.f32 %v4946, %v4992
        %v5033 = vmul.f32 %v5031, 1.442695
        %v5034 = vpow.pop %v5033
        %v5035 = vmul.f32 %v5032, 1.442695
        %v5036 = vpow.pop %v5035
        %v5037 = vadd.f32 %v5029, %v5034
        %v5038 = vadd.f32 %v5030, %v5036
        %v5039 = vsub.f32 %v4947, %v4986
        %v5040 = vsub.f32 %v4948, %v4992
        %v5041 = vmul.f32 %v5039, 1.442695
        %v5042 = vpow.pop %v5041
        %v5043 = vmul.f32 %v5040, 1.442695
        %v5044 = vpow.pop %v5043
        %v5045 = vadd.f32 %v5037, %v5042
        %v5046 = vadd.f32 %v5038, %v5044
        %v5047 = vsub.f32 %v4949, %v4986
        %v5048 = vsub.f32 %v4950, %v4992
        %v5049 = vmul.f32 %v5047, 1.442695
        %v5050 = vpow.pop %v5049
        %v5051 = vmul.f32 %v5048, 1.442695
        %v5052 = vpow.pop %v5051
        %v5053 = vadd.f32 %v5045, %v5050
        %v5054 = vadd.f32 %v5046, %v5052
        %v5055 = vsub.f32 %v4951, %v4986
        %v5056 = vsub.f32 %v4952, %v4992
        %v5057 = vmul.f32 %v5055, 1.442695
        %v5058 = vpow.pop %v5057
        %v5059 = vmul.f32 %v5056, 1.442695
        %v5060 = vpow.pop %v5059
        %v5061 = vadd.f32 %v5053, %v5058
        %v5062 = vadd.f32 %v5054, %v5060
        %v5063 = vsub.f32 %v4953, %v4986
        %v5064 = vsub.f32 %v4954, %v4992
        %v5065 = vmul.f32 %v5063, 1.442695
        %v5066 = vpow.pop %v5065
        %v5067 = vmul.f32 %v5064, 1.442695
        %v5068 = vpow.pop %v5067
        %v5069 = vadd.f32 %v5061, %v5066
        %v5070 = vadd.f32 %v5062, %v5068
        %v5071 = vsub.f32 %v4955, %v4986
        %v5072 = vsub.f32 %v4956, %v4992
        %v5073 = vmul.f32 %v5071, 1.442695
        %v5074 = vpow.pop %v5073
        %v5075 = vmul.f32 %v5072, 1.442695
        %v5076 = vpow.pop %v5075
        %v5077 = vadd.f32 %v5069, %v5074
        %v5078 = vadd.f32 %v5070, %v5076
        %v5079 = vsub.f32 %v4957, %v4986
        %v5080 = vsub.f32 %v4958, %v4992
        %v5081 = vmul.f32 %v5079, 1.442695
        %v5082 = vpow.pop %v5081
        %v5083 = vmul.f32 %v5080, 1.442695
        %v5084 = vpow.pop %v5083
        %v5085 = vadd.f32 %v5077, %v5082
        %v5086 = vadd.f32 %v5078, %v5084
        %v5087 = vrot.slane %v5085, 4
        %v5088 = vadd.f32 %v5085, %v5087
        %v5089 = vrot.slane %v5088, 2
        %v5090 = vadd.f32 %v5088, %v5089
        %v5091 = vrot.slane %v5090, 1
        %v5092 = vadd.f32 %v5090, %v5091
        %v5093 = vrot.slane %v5086, 4
        %v5094 = vadd.f32 %v5086, %v5093
        %v5095 = vrot.slane %v5094, 2
        %v5096 = vadd.f32 %v5094, %v5095
        %v5097 = vrot.slane %v5096, 1
        %v5098 = vadd.f32 %v5096, %v5097
        %v5099 = vlog2.pop %v5092
        %v5100 = vmul.f32 %v5099, 0.6931472
        %v5101 = vlog2.pop %v5098
        %v5102 = vmul.f32 %v5101, 0.6931472
        %v5103 = vadd.f32 %v5100, %v4986
        %v5104 = vadd.f32 %v5102, %v4992
        %s5105 = sld [smem:[#allocation6]]
        %v5106 = vstv %s5105
        %v5107 = vmul.f32 %v5103, %v5106
        %v5108 = vmul.f32 %v5104, %v5106
        %s5109 = sld [smem:[#allocation6 + $0x1]]
        %v5110 = vstv %s5109
        %v5111 = vadd.f32 %v5107, %v5110
        %v5112 = vadd.f32 %v5108, %v5110
        %v5115 = vcombine.low %v5111, %v5112
        %v5117 = vunpack.c.l.s4 1966171168
        %v5118 = vunpack.c.0.s8 %v5117
        %v5119 = vlaneseq
        %v5120 = vshrl.u32 %v5119, 7
        %v5121 = vsub.s32 %v5118, %v5120
        %v5122 = vrot.slane %v5115, %v5121
        %v5124 = vunpack.c.l.s4 1966171168
        %v5125 = vunpack.c.0.s8 %v5124
        %v5126 = vlaneseq
        %v5127 = vshrl.u32 %v5126, 7
        %v5128 = vsub.s32 %v5125, %v5127
        %v5129 = vrot.slane %v5122, %v5128
        %v5131 = vlaneseq
        %vm5132 = vcmp.ge.s32.totalorder %v5131, 0
        %vm5133 = vcmp.lt.s32.totalorder %v5131, 256
        %vm5134 = vmand %vm5132, %vm5133
        %5135 = vst.msk [vmem:[%s227] sm:$0x3] %vm5134, %v5129
        %s5136 = sand.u32 %s119, 1
        %s5137 = scalar_lea.sflag [#allocation4], %s5136
        %s5138 = sand.u32 %s119, 1
        %s5139 = smul.addr %s5138, 2
        %s5140 = scalar_lea.vmem [#allocation7], %s5139
        // Predicated region
        $region45: #{tpu_custom_call.1} parent=35 // pred_check
          %p5141 = pneg %p129
        $region46: #{tpu_custom_call.1} parent=35 // pred_check_branch
          %5143 = sbr.rel (%p5141) target = $region48
        $region47: #{tpu_custom_call.1} parent=35 // pred_region
          %s5145 = ssub.s32 32, 32
          %5146 = vsyncadd %s5137, %s5145
          %s5147 = smul.addr %s22, 2
          %s5148 = smul.addr %s5147, 16
          %s5149 = scalar_lea.hbm %s4, %s5148
          %s5151 = sshll.u32 %s5140, 4
          %s5152 = int_to_ptr.vmem [resolvable:$true] %s5151
          %5154 = dma.vmem_to_hbm [thread:$0]  %s5152, 32, %s5149, %s5137
        $region48: #{tpu_custom_call.1} parent=35 // pred_fallthru
          _
      $region36: #{tpu_custom_call.1} parent=5 // pred_fallthru
        _
      %p5155 = scmp.le.s32.totalorder 2, %s17
      // Predicated region
      $region49: #{tpu_custom_call.1} parent=5 // pred_check
        %p5156 = pneg %p5155
      $region50: #{tpu_custom_call.1} parent=5 // pred_check_branch
        %5158 = sbr.rel (%p5156) target = $region52
      $region51: #{tpu_custom_call.1} parent=5 // pred_region
        %s5159 = ssub.s32 %s17, 2
        // Predicated region
        $region53: #{tpu_custom_call.1} parent=51 // pred_check
          %p5160 = pneg %p135
        $region54: #{tpu_custom_call.1} parent=51 // pred_check_branch
          %5162 = sbr.rel (%p5160) target = $region56
        $region55: #{tpu_custom_call.1} parent=51 // pred_region
          %s5163 = sand.u32 %s120, 1
          %s5164 = scalar_lea.sflag [#allocation4], %s5163
          %s5165 = sand.u32 %s120, 1
          %s5166 = smul.addr %s5165, 2
          %s5167 = scalar_lea.vmem [#allocation7], %s5166
          %5168 = dma.done %s5164, 32
        $region56: #{tpu_custom_call.1} parent=51 // pred_fallthru
          _
      $region52: #{tpu_custom_call.1} parent=5 // pred_fallthru
        _
    $region6: #{tpu_custom_call.1} parent=1 // loop_footer
      %s21 = sadd.s32 1, %s17
    $region7: #{tpu_custom_call.1} parent=1 // loop_footer_branch
      %16 = sbr.rel target = $region3
    $region8: #{tpu_custom_call.1} parent=1 // loop_exit
      _
    %5169 = vsyncpa [#allocation3], 1
    %s5170 = scalar_lea.sflag [#allocation3], 1
    %5171 = vsyncpa %s5170, 1
    %5172 = vsyncpa [#allocation4], 1
    %s5173 = scalar_lea.sflag [#allocation4], 1
    %5174 = vsyncpa %s5173, 1
    %5175 = vsyncpa [#allocation5], 1
    %s5176 = scalar_lea.sflag [#allocation5], 1
    %5177 = vsyncpa %s5176, 1

</llo_original>
